<compile_context>
chip_gen: v6e
topology: v6e:2x2x1
jax: 0.10.0
libtpu: 0.0.40
codegen_flags: <defaults>
</compile_context>

<pallas_src>
import functools

import jax
import jax.numpy as jnp
from jax.experimental import pallas as pl
from jax.experimental.pallas import tpu as pltpu


# ------------------------------ math helpers -------------------------------

def _erf(z):
    # Abramowitz & Stegun 7.1.26 rational approximation (|err| <= 1.5e-7) --
    # erf-based GELU (torch.nn.GELU default) with ops that lower on VPU/EUP.
    a1, a2, a3, a4, a5 = (0.254829592, -0.284496736, 1.421413741,
                          -1.453152027, 1.061405429)
    p = 0.3275911
    az = jnp.abs(z)
    # EUP reciprocal instead of a full-rate VALU divide (perf feedback).
    t = pl.reciprocal(1.0 + p * az, approx=True)
    poly = ((((a5 * t + a4) * t + a3) * t + a2) * t + a1) * t
    y = 1.0 - poly * jnp.exp(-az * az)
    return jnp.where(z >= 0.0, y, -y)


def _gelu_exact(x):
    return 0.5 * x * (1.0 + _erf(x * (2.0 ** -0.5)))


# ------------------------------ fused kernel -------------------------------

def _vit_kernel(a_ref, wa_ref, qkvw_ref, projw_ref, w1_ref, w2_ref,
                rows_ref, bn_ref, fcwb_ref, out_ref, *,
                n_block, num_heads, d_model, hidden, n_tok, batch_tile, scale):
    D, NH, Hd, N, BT = d_model, num_heads, hidden, n_tok, batch_tile

    # ---- Patch embedding for the whole batch tile in ONE augmented matmul
    #      (position column, cls row of ones and conv bias folded into wa).
    #      x: (BT*N, D) stays VMEM-resident for all blocks. ----
    x = jnp.dot(a_ref[...], wa_ref[...], preferred_element_type=jnp.float32)

    for blk in range(n_block):                    # static unroll over blocks
        rows = rows_ref[blk]                      # (6, R) packed row params
        qkv_b = rows[0:1, :3 * NH * D]
        proj_b = rows[1:2, :D]
        b1 = rows[2:3, :Hd]
        b2 = rows[3:4, :D]
        ln_g = rows[4:5, :D]
        ln_b = rows[5:6, :D]
        bn = bn_ref[blk]                          # (BT*N, 4) folded BatchNorm1d
        qkvw = qkvw_ref[blk]                      # (D, 3*NH*D)
        projw = projw_ref[blk]                    # (NH*D, D)
        w1 = w1_ref[blk]                          # (D, Hd)
        w2 = w2_ref[blk]                          # (Hd, D)

        def layernorm(t, g=ln_g, b=ln_b):         # nn.LayerNorm(D, eps=1e-6)
            mu = jnp.mean(t, axis=-1, keepdims=True)
            var = jnp.mean(jnp.square(t - mu), axis=-1, keepdims=True)
            return (t - mu) * jax.lax.rsqrt(var + 1e-6) * g + b

        # ---------------- MLA (shared LayerNorm, like the torch Block) -------
        y = layernorm(x)
        # Fused Q/K/V for all heads & the whole batch tile in one matmul.
        qkv = jnp.dot(y, qkvw, preferred_element_type=jnp.float32) + qkv_b

        oh_rows = []
        for bi in range(BT):                      # static unroll over batch
            r0 = bi * N
            oh_heads = []
            for h in range(NH):                   # static unroll over heads
                q_h = qkv[r0:r0 + N, h * D:(h + 1) * D]
                k_h = qkv[r0:r0 + N, (NH + h) * D:(NH + h + 1) * D]
                v_h = qkv[r0:r0 + N, (2 * NH + h) * D:(2 * NH + h + 1) * D]
                # Transposed scores: m_t[j, i] = q[j]·k[i] == torch matrix[i,j]
                # so F.softmax(matrix, dim=2) (over the k index) becomes a
                # LANE-axis softmax here.  scale = (emb_size+1)**-0.5 because
                # torch builds MLA(emb_size + 1, ...), so D**-0.5 is exact.
                m_t = jax.lax.dot_general(
                    q_h, k_h, (((1,), (1,)), ((), ())),
                    preferred_element_type=jnp.float32) * scale
                m_t = m_t - jnp.max(m_t, axis=-1, keepdims=True)
                e = jnp.exp(m_t)
                w_t = e * pl.reciprocal(jnp.sum(e, axis=-1, keepdims=True),
                                        approx=True)
                # Original semantics: out[i, e] = sum_j w[i, j] v[j, e]
                #                              = sum_j w_t[j, i] v[j, e]
                oh = jax.lax.dot_general(
                    w_t, v_h, (((0,), (0,)), ((), ())),
                    preferred_element_type=jnp.float32)          # (N, D)
                oh_heads.append(oh)
            # concat order matches torch permute(0,2,1,3).reshape: h*D + e
            oh_rows.append(jnp.concatenate(oh_heads, axis=-1))    # (N, NH*D)
        oh_all = (jnp.concatenate(oh_rows, axis=0)
                  if BT > 1 else oh_rows[0])                      # (BT*N, NH*D)
        # ONE fused output projection for all heads and all batch rows.
        att = jnp.dot(oh_all, projw,
                      preferred_element_type=jnp.float32) + proj_b
        # TODO(synk): att_drop / lin_drop are stochastic Dropout -> identity
        # (eval-mode semantics).
        x = x + att

        # ---------------- MLP ----------------
        y2 = layernorm(x)
        h1 = jnp.dot(y2, w1, preferred_element_type=jnp.float32) + b1
        # BatchNorm1d(n_patches) in eval mode folded to per-token scale/shift
        # (pre-tiled over the batch tile in the wrapper).
        h1 = h1 * bn[:, 0:1] + bn[:, 1:2]
        h1 = _gelu_exact(h1)
        h2 = jnp.dot(h1, w2, preferred_element_type=jnp.float32) + b2
        h2 = h2 * bn[:, 2:3] + bn[:, 3:4]
        # TODO(synk): MLP Dropout -> identity (eval-mode semantics).
        x = x + h2

    # ---- classifier on the cls rows (row bi*N of each stacked batch elem;
    #      fc bias packed as the last row of fcwb) ----
    fcwb = fcwb_ref[...]
    if BT > 1:
        cls = jnp.concatenate([x[bi * N:bi * N + 1, :] for bi in range(BT)],
                              axis=0)                              # (BT, D)
    else:
        cls = x[0:1, :]
    out_ref[...] = (jnp.dot(cls, fcwb[:D, :],
                            preferred_element_type=jnp.float32)
                    + fcwb[D:D + 1, :])


# --------------------------- parameter creation -----------------------------

def init_vit_params(key, *, in_channels, emb_size, patch_size, num_heads,
                    hidden_features, n_block, n_classes, n_patches):
    D = emb_size + 1
    NH = num_heads
    Hd = hidden_features
    N = n_patches
    CP = in_channels * patch_size * patch_size
    R = max(3 * NH * D, Hd, D)
    keys = iter(jax.random.split(key, 8 + n_block * 24))

    def rnd(shape, s=0.1):
        return jax.random.normal(next(keys), shape, dtype=jnp.float32) * s

    # Patch embedding folded into one augmented matmul weight:
    #   columns = [pos | emb features]; rows = [pos passthrough, cls indicator,
    #   patch indicator (conv bias), patch pixels (conv weight)].
    wc = rnd((emb_size, in_channels, patch_size, patch_size))
    bc = rnd((emb_size,))
    wa = jnp.zeros((CP + 3, D), jnp.float32)
    wa = wa.at[0, 0].set(1.0)                      # position passthrough
    wa = wa.at[1, 1:].set(1.0)                     # cls token = ones(emb_size)
    wa = wa.at[2, 1:].set(bc)                      # conv bias (patch rows only)
    wa = wa.at[3:, 1:].set(wc.reshape(emb_size, CP).T)

    bn_eps = 1e-5
    qkvw, projw, w1s, w2s, rows_all, bns = [], [], [], [], [], []
    for _ in range(n_block):
        Wq, bq = rnd((D * NH, D)), rnd((D * NH,))
        Wk, bk = rnd((D * NH, D)), rnd((D * NH,))
        Wv, bv = rnd((D * NH, D)), rnd((D * NH,))
        Wp, bp = rnd((D, D * NH)), rnd((D,))
        W1, b1 = rnd((Hd, D)), rnd((Hd,))
        W2, b2 = rnd((D, Hd)), rnd((D,))
        ln_g = jnp.ones((D,), jnp.float32)         # LayerNorm default init
        ln_b = jnp.zeros((D,), jnp.float32)

        # reshape(B,N,E,H): output feature e*NH + h -> head h uses rows W[h::NH]
        def per_head_cols(W):
            return jnp.concatenate([W[h::NH, :].T for h in range(NH)], axis=1)

        def per_head_bias(b):
            return jnp.concatenate([b[h::NH] for h in range(NH)], axis=0)

        qkvw.append(jnp.concatenate([per_head_cols(Wq), per_head_cols(Wk),
                                     per_head_cols(Wv)], axis=1))   # (D,3NHD)
        qkv_b = jnp.concatenate([per_head_bias(bq), per_head_bias(bk),
                                 per_head_bias(bv)], axis=0)        # (3NHD,)
        projw.append(Wp.T)                                          # (NH*D, D)
        w1s.append(W1.T)
        w2s.append(W2.T)

        def bn_fold():
            # TODO(synk): BatchNorm1d uses running statistics (eval mode);
            # gamma/beta/mean/var folded into per-token scale & shift.
            gma = 1.0 + rnd((N,))
            bta = rnd((N,))
            mean = rnd((N,))
            var = 1.0 + jnp.abs(rnd((N,)))
            sc = gma / jnp.sqrt(var + bn_eps)
            return sc, bta - mean * sc

        bn1_s, bn1_t = bn_fold()
        bn2_s, bn2_t = bn_fold()
        bns.append(jnp.stack([bn1_s, bn1_t, bn2_s, bn2_t], axis=1))  # (N, 4)

        def padded(v):
            return jnp.pad(v, (0, R - v.shape[0]))

        rows_all.append(jnp.stack([padded(qkv_b), padded(bp), padded(b1),
                                   padded(b2), padded(ln_g), padded(ln_b)]))

    Wf, bf = rnd((n_classes, D)), rnd((n_classes,))
    fcwb = jnp.concatenate([Wf.T, bf[None, :]], axis=0)             # (D+1, C)

    return dict(wa=wa, qkvw=jnp.stack(qkvw), projw=jnp.stack(projw),
                w1=jnp.stack(w1s), w2=jnp.stack(w2s),
                rows=jnp.stack(rows_all), bn=jnp.stack(bns), fcwb=fcwb)


# ------------------------------- VIT forward --------------------------------

def vit_forward(x, params, *, patch_size, emb_size, batch_tile=None):
    B, C, H, W = x.shape
    s = H // patch_size
    n_tok = s * s + 1
    CP = C * patch_size * patch_size
    D = emb_size + 1
    BT = B if batch_tile is None else batch_tile
    assert B % BT == 0
    if BT < B:
        # sublane constraint on the stacked-token block when tiling the batch
        assert (BT * n_tok) % 8 == 0, "batch_tile * n_tok must be multiple of 8"
    M = BT * n_tok

    # Layout plumbing (plain JAX, tiny): extract patch pixels and build the
    # augmented input [pos | is_cls | is_patch | pixels] consumed by the single
    # fused matmul inside the kernel; tokens of a batch tile are stacked along
    # the sublane axis so every dense matmul sees (BT*n_tok, ...) operands.
    patches = x.reshape(B, C, s, patch_size, s, patch_size)
    patches = patches.transpose(0, 2, 4, 1, 3, 5).reshape(B, s * s, CP)
    patches = jnp.concatenate([jnp.zeros((B, 1, CP), jnp.float32), patches],
                              axis=1)                               # cls slot
    pos = jnp.broadcast_to(jnp.arange(n_tok, dtype=jnp.float32)[None, :, None],
                           (B, n_tok, 1))
    is_cls = jnp.broadcast_to(
        (jnp.arange(n_tok) == 0).astype(jnp.float32)[None, :, None],
        (B, n_tok, 1))
    a = jnp.concatenate([pos, is_cls, 1.0 - is_cls, patches], axis=-1)
    a = a.reshape(B * n_tok, CP + 3)

    n_block = params["qkvw"].shape[0]
    NH = params["qkvw"].shape[2] // (3 * D)
    Hd = params["w1"].shape[2]
    R = params["rows"].shape[2]
    n_classes = params["fcwb"].shape[1]
    scale = float(D) ** -0.5      # MLA is built with emb_size+1 -> D**-0.5

    # Folded BatchNorm scale/shift pre-tiled over the batch tile (row bi*N + n
    # gets the parameters of token n).
    bn_tiled = jnp.tile(params["bn"], (1, BT, 1))    # (n_block, BT*n_tok, 4)

    kernel = functools.partial(_vit_kernel, n_block=n_block, num_heads=NH,
                               d_model=D, hidden=Hd, n_tok=n_tok,
                               batch_tile=BT, scale=scale)

    def fixed(shape):
        nd = len(shape)
        return pl.BlockSpec(shape, lambda g, _nd=nd: (0,) * _nd)

    out = pl.pallas_call(
        kernel,
        out_shape=jax.ShapeDtypeStruct((B, n_classes), jnp.float32),
        grid=(B // BT,),
        in_specs=[
            pl.BlockSpec((M, CP + 3), lambda g: (g, 0)),
            fixed((CP + 3, D)),
            fixed((n_block, D, 3 * NH * D)),
            fixed((n_block, NH * D, D)),
            fixed((n_block, D, Hd)),
            fixed((n_block, Hd, D)),
            fixed((n_block, 6, R)),
            fixed((n_block, M, 4)),
            fixed((D + 1, n_classes)),
        ],
        out_specs=pl.BlockSpec((BT, n_classes), lambda g: (g, 0)),
        compiler_params=pltpu.CompilerParams(dimension_semantics=("parallel",)),
    )(a, params["wa"], params["qkvw"], params["projw"], params["w1"],
      params["w2"], params["rows"], bn_tiled, params["fcwb"])
    return out


if __name__ == "__main__":
    B, C, IMG, PS = 2, 4, 16, 8
    EMB, NH, HID, NBLK, NCLS = 15, 2, 32, 2, 10
    N_PATCHES = (IMG // PS) ** 2 + 1   # token count (== BatchNorm1d features)

    key = jax.random.PRNGKey(0)
    kx, kp = jax.random.split(key)
    x = jax.random.normal(kx, (B, C, IMG, IMG), dtype=jnp.float32)
    params = init_vit_params(kp, in_channels=C, emb_size=EMB, patch_size=PS,
                             num_heads=NH, hidden_features=HID, n_block=NBLK,
                             n_classes=NCLS, n_patches=N_PATCHES)

    vit_fn = jax.jit(functools.partial(vit_forward, patch_size=PS, emb_size=EMB))
    out = vit_fn(x, params)
    out = jax.block_until_ready(out)
    assert out.shape == (B, NCLS), out.shape
    print("KERNEL_OK")
</pallas_src>

<mosaic_0001>
module attributes {stable_mosaic.version = 11 : i64} {
  func.func @_vit_kernel(%arg0: i32, %arg1: memref<10x259xf32, #tpu.memory_space<vmem>>, %arg2: memref<259x16xf32, #tpu.memory_space<vmem>>, %arg3: memref<2x16x96xf32, #tpu.memory_space<vmem>>, %arg4: memref<2x32x16xf32, #tpu.memory_space<vmem>>, %arg5: memref<2x16x32xf32, #tpu.memory_space<vmem>>, %arg6: memref<2x32x16xf32, #tpu.memory_space<vmem>>, %arg7: memref<2x6x96xf32, #tpu.memory_space<vmem>>, %arg8: memref<2x10x4xf32, #tpu.memory_space<vmem>>, %arg9: memref<17x10xf32, #tpu.memory_space<vmem>>, %arg10: memref<2x10xf32, #tpu.memory_space<vmem>>) attributes {dimension_semantics = [#tpu.dimension_semantics<parallel>], iteration_bounds = array<i64: 1>, scalar_prefetch = 0 : i64, scratch_operands = 0 : i64, tpu.core_type = #tpu.core_type<tc>, window_params = [{transform_indices = @transform_0, window_bounds = array<i64: 10, 259>}, {pipeline_mode = #tpu.pipeline_mode<synchronous>, transform_indices = @transform_1, window_bounds = array<i64: 259, 16>}, {pipeline_mode = #tpu.pipeline_mode<synchronous>, transform_indices = @transform_2, window_bounds = array<i64: 2, 16, 96>}, {pipeline_mode = #tpu.pipeline_mode<synchronous>, transform_indices = @transform_3, window_bounds = array<i64: 2, 32, 16>}, {pipeline_mode = #tpu.pipeline_mode<synchronous>, transform_indices = @transform_4, window_bounds = array<i64: 2, 16, 32>}, {pipeline_mode = #tpu.pipeline_mode<synchronous>, transform_indices = @transform_5, window_bounds = array<i64: 2, 32, 16>}, {pipeline_mode = #tpu.pipeline_mode<synchronous>, transform_indices = @transform_6, window_bounds = array<i64: 2, 6, 96>}, {pipeline_mode = #tpu.pipeline_mode<synchronous>, transform_indices = @transform_7, window_bounds = array<i64: 2, 10, 4>}, {pipeline_mode = #tpu.pipeline_mode<synchronous>, transform_indices = @transform_8, window_bounds = array<i64: 17, 10>}, {transform_indices = @transform_9, window_bounds = array<i64: 2, 10>}]} {
    %c0 = arith.constant 0 : index
    %c0_0 = arith.constant 0 : index
    %0 = vector.load %arg1[%c0, %c0_0] : memref<10x259xf32, #tpu.memory_space<vmem>>, vector<10x259xf32>
    %c0_1 = arith.constant 0 : index
    %c0_2 = arith.constant 0 : index
    %1 = vector.load %arg2[%c0_1, %c0_2] : memref<259x16xf32, #tpu.memory_space<vmem>>, vector<259x16xf32>
    %cst = arith.constant dense<0.000000e+00> : vector<10x16xf32>
    %2 = tpu.matmul %0, %1, %cst {dimension_numbers = #tpu.dot_dimension_numbers<[1], [0], [0], [1], [0, 0, 1, 1], [], []>} : vector<10x259xf32>, vector<259x16xf32>, vector<10x16xf32> -> vector<10x16xf32>
    %c0_3 = arith.constant 0 : index
    %c0_4 = arith.constant 0 : index
    %c0_5 = arith.constant 0 : index
    %3 = vector.load %arg7[%c0_3, %c0_4, %c0_5] : memref<2x6x96xf32, #tpu.memory_space<vmem>>, vector<1x6x96xf32>
    %4 = vector.shape_cast %3 : vector<1x6x96xf32> to vector<6x96xf32>
    %5 = vector.extract_strided_slice %4 {offsets = [0, 0], sizes = [1, 96], strides = [1, 1]} : vector<6x96xf32> to vector<1x96xf32>
    %6 = vector.extract_strided_slice %4 {offsets = [1, 0], sizes = [1, 16], strides = [1, 1]} : vector<6x96xf32> to vector<1x16xf32>
    %7 = vector.extract_strided_slice %4 {offsets = [2, 0], sizes = [1, 32], strides = [1, 1]} : vector<6x96xf32> to vector<1x32xf32>
    %8 = vector.extract_strided_slice %4 {offsets = [3, 0], sizes = [1, 16], strides = [1, 1]} : vector<6x96xf32> to vector<1x16xf32>
    %9 = vector.extract_strided_slice %4 {offsets = [4, 0], sizes = [1, 16], strides = [1, 1]} : vector<6x96xf32> to vector<1x16xf32>
    %10 = vector.extract_strided_slice %4 {offsets = [5, 0], sizes = [1, 16], strides = [1, 1]} : vector<6x96xf32> to vector<1x16xf32>
    %c0_6 = arith.constant 0 : index
    %c0_7 = arith.constant 0 : index
    %c0_8 = arith.constant 0 : index
    %11 = vector.load %arg8[%c0_6, %c0_7, %c0_8] : memref<2x10x4xf32, #tpu.memory_space<vmem>>, vector<1x10x4xf32>
    %12 = vector.shape_cast %11 : vector<1x10x4xf32> to vector<10x4xf32>
    %c0_9 = arith.constant 0 : index
    %c0_10 = arith.constant 0 : index
    %c0_11 = arith.constant 0 : index
    %13 = vector.load %arg3[%c0_9, %c0_10, %c0_11] : memref<2x16x96xf32, #tpu.memory_space<vmem>>, vector<1x16x96xf32>
    %14 = vector.shape_cast %13 : vector<1x16x96xf32> to vector<16x96xf32>
    %c0_12 = arith.constant 0 : index
    %c0_13 = arith.constant 0 : index
    %c0_14 = arith.constant 0 : index
    %15 = vector.load %arg4[%c0_12, %c0_13, %c0_14] : memref<2x32x16xf32, #tpu.memory_space<vmem>>, vector<1x32x16xf32>
    %16 = vector.shape_cast %15 : vector<1x32x16xf32> to vector<32x16xf32>
    %c0_15 = arith.constant 0 : index
    %c0_16 = arith.constant 0 : index
    %c0_17 = arith.constant 0 : index
    %17 = vector.load %arg5[%c0_15, %c0_16, %c0_17] : memref<2x16x32xf32, #tpu.memory_space<vmem>>, vector<1x16x32xf32>
    %18 = vector.shape_cast %17 : vector<1x16x32xf32> to vector<16x32xf32>
    %c0_18 = arith.constant 0 : index
    %c0_19 = arith.constant 0 : index
    %c0_20 = arith.constant 0 : index
    %19 = vector.load %arg6[%c0_18, %c0_19, %c0_20] : memref<2x32x16xf32, #tpu.memory_space<vmem>>, vector<1x32x16xf32>
    %20 = vector.shape_cast %19 : vector<1x32x16xf32> to vector<32x16xf32>
    %cst_21 = arith.constant dense<0.000000e+00> : vector<10xf32>
    %21 = vector.multi_reduction <add>, %2, %cst_21 [1] : vector<10x16xf32> to vector<10xf32>
    %22 = vector.shape_cast %21 : vector<10xf32> to vector<10x1xf32>
    %cst_22 = arith.constant 1.600000e+01 : f32
    %23 = vector.broadcast %cst_22 : f32 to vector<10x1xf32>
    %24 = arith.divf %22, %23 : vector<10x1xf32>
    %25 = vector.broadcast %24 : vector<10x1xf32> to vector<10x16xf32>
    %26 = arith.subf %2, %25 : vector<10x16xf32>
    %27 = arith.mulf %26, %26 : vector<10x16xf32>
    %cst_23 = arith.constant dense<0.000000e+00> : vector<10xf32>
    %28 = vector.multi_reduction <add>, %27, %cst_23 [1] : vector<10x16xf32> to vector<10xf32>
    %29 = vector.shape_cast %28 : vector<10xf32> to vector<10x1xf32>
    %cst_24 = arith.constant 1.600000e+01 : f32
    %30 = vector.broadcast %cst_24 : f32 to vector<10x1xf32>
    %31 = arith.divf %29, %30 : vector<10x1xf32>
    %32 = vector.broadcast %24 : vector<10x1xf32> to vector<10x16xf32>
    %33 = arith.subf %2, %32 : vector<10x16xf32>
    %cst_25 = arith.constant 9.99999997E-7 : f32
    %34 = vector.broadcast %cst_25 : f32 to vector<10x1xf32>
    %35 = arith.addf %31, %34 : vector<10x1xf32>
    %36 = math.rsqrt %35 : vector<10x1xf32>
    %37 = vector.broadcast %36 : vector<10x1xf32> to vector<10x16xf32>
    %38 = arith.mulf %33, %37 : vector<10x16xf32>
    %39 = vector.broadcast %9 : vector<1x16xf32> to vector<10x16xf32>
    %40 = arith.mulf %38, %39 : vector<10x16xf32>
    %41 = vector.broadcast %10 : vector<1x16xf32> to vector<10x16xf32>
    %42 = arith.addf %40, %41 : vector<10x16xf32>
    %cst_26 = arith.constant dense<0.000000e+00> : vector<10x96xf32>
    %43 = tpu.matmul %42, %14, %cst_26 {dimension_numbers = #tpu.dot_dimension_numbers<[1], [0], [0], [1], [0, 0, 1, 1], [], []>} : vector<10x16xf32>, vector<16x96xf32>, vector<10x96xf32> -> vector<10x96xf32>
    %44 = vector.broadcast %5 : vector<1x96xf32> to vector<10x96xf32>
    %45 = arith.addf %43, %44 : vector<10x96xf32>
    %46 = vector.extract_strided_slice %45 {offsets = [0, 0], sizes = [5, 16], strides = [1, 1]} : vector<10x96xf32> to vector<5x16xf32>
    %47 = vector.extract_strided_slice %45 {offsets = [0, 32], sizes = [5, 16], strides = [1, 1]} : vector<10x96xf32> to vector<5x16xf32>
    %48 = vector.extract_strided_slice %45 {offsets = [0, 64], sizes = [5, 16], strides = [1, 1]} : vector<10x96xf32> to vector<5x16xf32>
    %cst_27 = arith.constant dense<0.000000e+00> : vector<5x5xf32>
    %49 = tpu.matmul %46, %47, %cst_27 {dimension_numbers = #tpu.dot_dimension_numbers<[1], [1], [0], [0], [0, 0, 1, 0], [], []>} : vector<5x16xf32>, vector<5x16xf32>, vector<5x5xf32> -> vector<5x5xf32>
    %cst_28 = arith.constant 2.500000e-01 : f32
    %50 = vector.broadcast %cst_28 : f32 to vector<5x5xf32>
    %51 = arith.mulf %49, %50 : vector<5x5xf32>
    %cst_29 = arith.constant dense<0xFF800000> : vector<5xf32>
    %52 = vector.multi_reduction <maximumf>, %51, %cst_29 [1] : vector<5x5xf32> to vector<5xf32>
    %53 = vector.shape_cast %52 : vector<5xf32> to vector<5x1xf32>
    %54 = vector.broadcast %53 : vector<5x1xf32> to vector<5x5xf32>
    %55 = arith.subf %51, %54 : vector<5x5xf32>
    %56 = math.exp %55 : vector<5x5xf32>
    %cst_30 = arith.constant dense<0.000000e+00> : vector<5xf32>
    %57 = vector.multi_reduction <add>, %56, %cst_30 [1] : vector<5x5xf32> to vector<5xf32>
    %58 = vector.shape_cast %57 : vector<5xf32> to vector<5x1xf32>
    %59 = tpu.reciprocal %58 {approx = true} : vector<5x1xf32> -> vector<5x1xf32>
    %60 = vector.broadcast %59 : vector<5x1xf32> to vector<5x5xf32>
    %61 = arith.mulf %56, %60 : vector<5x5xf32>
    %cst_31 = arith.constant dense<0.000000e+00> : vector<5x16xf32>
    %62 = tpu.matmul %61, %48, %cst_31 {dimension_numbers = #tpu.dot_dimension_numbers<[0], [0], [1], [1], [0, 1, 1, 1], [], []>} : vector<5x5xf32>, vector<5x16xf32>, vector<5x16xf32> -> vector<5x16xf32>
    %63 = vector.extract_strided_slice %45 {offsets = [0, 16], sizes = [5, 16], strides = [1, 1]} : vector<10x96xf32> to vector<5x16xf32>
    %64 = vector.extract_strided_slice %45 {offsets = [0, 48], sizes = [5, 16], strides = [1, 1]} : vector<10x96xf32> to vector<5x16xf32>
    %65 = vector.extract_strided_slice %45 {offsets = [0, 80], sizes = [5, 16], strides = [1, 1]} : vector<10x96xf32> to vector<5x16xf32>
    %cst_32 = arith.constant dense<0.000000e+00> : vector<5x5xf32>
    %66 = tpu.matmul %63, %64, %cst_32 {dimension_numbers = #tpu.dot_dimension_numbers<[1], [1], [0], [0], [0, 0, 1, 0], [], []>} : vector<5x16xf32>, vector<5x16xf32>, vector<5x5xf32> -> vector<5x5xf32>
    %cst_33 = arith.constant 2.500000e-01 : f32
    %67 = vector.broadcast %cst_33 : f32 to vector<5x5xf32>
    %68 = arith.mulf %66, %67 : vector<5x5xf32>
    %cst_34 = arith.constant dense<0xFF800000> : vector<5xf32>
    %69 = vector.multi_reduction <maximumf>, %68, %cst_34 [1] : vector<5x5xf32> to vector<5xf32>
    %70 = vector.shape_cast %69 : vector<5xf32> to vector<5x1xf32>
    %71 = vector.broadcast %70 : vector<5x1xf32> to vector<5x5xf32>
    %72 = arith.subf %68, %71 : vector<5x5xf32>
    %73 = math.exp %72 : vector<5x5xf32>
    %cst_35 = arith.constant dense<0.000000e+00> : vector<5xf32>
    %74 = vector.multi_reduction <add>, %73, %cst_35 [1] : vector<5x5xf32> to vector<5xf32>
    %75 = vector.shape_cast %74 : vector<5xf32> to vector<5x1xf32>
    %76 = tpu.reciprocal %75 {approx = true} : vector<5x1xf32> -> vector<5x1xf32>
    %77 = vector.broadcast %76 : vector<5x1xf32> to vector<5x5xf32>
    %78 = arith.mulf %73, %77 : vector<5x5xf32>
    %cst_36 = arith.constant dense<0.000000e+00> : vector<5x16xf32>
    %79 = tpu.matmul %78, %65, %cst_36 {dimension_numbers = #tpu.dot_dimension_numbers<[0], [0], [1], [1], [0, 1, 1, 1], [], []>} : vector<5x5xf32>, vector<5x16xf32>, vector<5x16xf32> -> vector<5x16xf32>
    %80 = tpu.concatenate %62, %79 in 1 : vector<5x16xf32>, vector<5x16xf32> -> vector<5x32xf32>
    %81 = vector.extract_strided_slice %45 {offsets = [5, 0], sizes = [5, 16], strides = [1, 1]} : vector<10x96xf32> to vector<5x16xf32>
    %82 = vector.extract_strided_slice %45 {offsets = [5, 32], sizes = [5, 16], strides = [1, 1]} : vector<10x96xf32> to vector<5x16xf32>
    %83 = vector.extract_strided_slice %45 {offsets = [5, 64], sizes = [5, 16], strides = [1, 1]} : vector<10x96xf32> to vector<5x16xf32>
    %cst_37 = arith.constant dense<0.000000e+00> : vector<5x5xf32>
    %84 = tpu.matmul %81, %82, %cst_37 {dimension_numbers = #tpu.dot_dimension_numbers<[1], [1], [0], [0], [0, 0, 1, 0], [], []>} : vector<5x16xf32>, vector<5x16xf32>, vector<5x5xf32> -> vector<5x5xf32>
    %cst_38 = arith.constant 2.500000e-01 : f32
    %85 = vector.broadcast %cst_38 : f32 to vector<5x5xf32>
    %86 = arith.mulf %84, %85 : vector<5x5xf32>
    %cst_39 = arith.constant dense<0xFF800000> : vector<5xf32>
    %87 = vector.multi_reduction <maximumf>, %86, %cst_39 [1] : vector<5x5xf32> to vector<5xf32>
    %88 = vector.shape_cast %87 : vector<5xf32> to vector<5x1xf32>
    %89 = vector.broadcast %88 : vector<5x1xf32> to vector<5x5xf32>
    %90 = arith.subf %86, %89 : vector<5x5xf32>
    %91 = math.exp %90 : vector<5x5xf32>
    %cst_40 = arith.constant dense<0.000000e+00> : vector<5xf32>
    %92 = vector.multi_reduction <add>, %91, %cst_40 [1] : vector<5x5xf32> to vector<5xf32>
    %93 = vector.shape_cast %92 : vector<5xf32> to vector<5x1xf32>
    %94 = tpu.reciprocal %93 {approx = true} : vector<5x1xf32> -> vector<5x1xf32>
    %95 = vector.broadcast %94 : vector<5x1xf32> to vector<5x5xf32>
    %96 = arith.mulf %91, %95 : vector<5x5xf32>
    %cst_41 = arith.constant dense<0.000000e+00> : vector<5x16xf32>
    %97 = tpu.matmul %96, %83, %cst_41 {dimension_numbers = #tpu.dot_dimension_numbers<[0], [0], [1], [1], [0, 1, 1, 1], [], []>} : vector<5x5xf32>, vector<5x16xf32>, vector<5x16xf32> -> vector<5x16xf32>
    %98 = vector.extract_strided_slice %45 {offsets = [5, 16], sizes = [5, 16], strides = [1, 1]} : vector<10x96xf32> to vector<5x16xf32>
    %99 = vector.extract_strided_slice %45 {offsets = [5, 48], sizes = [5, 16], strides = [1, 1]} : vector<10x96xf32> to vector<5x16xf32>
    %100 = vector.extract_strided_slice %45 {offsets = [5, 80], sizes = [5, 16], strides = [1, 1]} : vector<10x96xf32> to vector<5x16xf32>
    %cst_42 = arith.constant dense<0.000000e+00> : vector<5x5xf32>
    %101 = tpu.matmul %98, %99, %cst_42 {dimension_numbers = #tpu.dot_dimension_numbers<[1], [1], [0], [0], [0, 0, 1, 0], [], []>} : vector<5x16xf32>, vector<5x16xf32>, vector<5x5xf32> -> vector<5x5xf32>
    %cst_43 = arith.constant 2.500000e-01 : f32
    %102 = vector.broadcast %cst_43 : f32 to vector<5x5xf32>
    %103 = arith.mulf %101, %102 : vector<5x5xf32>
    %cst_44 = arith.constant dense<0xFF800000> : vector<5xf32>
    %104 = vector.multi_reduction <maximumf>, %103, %cst_44 [1] : vector<5x5xf32> to vector<5xf32>
    %105 = vector.shape_cast %104 : vector<5xf32> to vector<5x1xf32>
    %106 = vector.broadcast %105 : vector<5x1xf32> to vector<5x5xf32>
    %107 = arith.subf %103, %106 : vector<5x5xf32>
    %108 = math.exp %107 : vector<5x5xf32>
    %cst_45 = arith.constant dense<0.000000e+00> : vector<5xf32>
    %109 = vector.multi_reduction <add>, %108, %cst_45 [1] : vector<5x5xf32> to vector<5xf32>
    %110 = vector.shape_cast %109 : vector<5xf32> to vector<5x1xf32>
    %111 = tpu.reciprocal %110 {approx = true} : vector<5x1xf32> -> vector<5x1xf32>
    %112 = vector.broadcast %111 : vector<5x1xf32> to vector<5x5xf32>
    %113 = arith.mulf %108, %112 : vector<5x5xf32>
    %cst_46 = arith.constant dense<0.000000e+00> : vector<5x16xf32>
    %114 = tpu.matmul %113, %100, %cst_46 {dimension_numbers = #tpu.dot_dimension_numbers<[0], [0], [1], [1], [0, 1, 1, 1], [], []>} : vector<5x5xf32>, vector<5x16xf32>, vector<5x16xf32> -> vector<5x16xf32>
    %115 = tpu.concatenate %97, %114 in 1 : vector<5x16xf32>, vector<5x16xf32> -> vector<5x32xf32>
    %116 = tpu.concatenate %80, %115 in 0 : vector<5x32xf32>, vector<5x32xf32> -> vector<10x32xf32>
    %cst_47 = arith.constant dense<0.000000e+00> : vector<10x16xf32>
    %117 = tpu.matmul %116, %16, %cst_47 {dimension_numbers = #tpu.dot_dimension_numbers<[1], [0], [0], [1], [0, 0, 1, 1], [], []>} : vector<10x32xf32>, vector<32x16xf32>, vector<10x16xf32> -> vector<10x16xf32>
    %118 = vector.broadcast %6 : vector<1x16xf32> to vector<10x16xf32>
    %119 = arith.addf %117, %118 : vector<10x16xf32>
    %120 = arith.addf %2, %119 : vector<10x16xf32>
    %cst_48 = arith.constant dense<0.000000e+00> : vector<10xf32>
    %121 = vector.multi_reduction <add>, %120, %cst_48 [1] : vector<10x16xf32> to vector<10xf32>
    %122 = vector.shape_cast %121 : vector<10xf32> to vector<10x1xf32>
    %cst_49 = arith.constant 1.600000e+01 : f32
    %123 = vector.broadcast %cst_49 : f32 to vector<10x1xf32>
    %124 = arith.divf %122, %123 : vector<10x1xf32>
    %125 = vector.broadcast %124 : vector<10x1xf32> to vector<10x16xf32>
    %126 = arith.subf %120, %125 : vector<10x16xf32>
    %127 = arith.mulf %126, %126 : vector<10x16xf32>
    %cst_50 = arith.constant dense<0.000000e+00> : vector<10xf32>
    %128 = vector.multi_reduction <add>, %127, %cst_50 [1] : vector<10x16xf32> to vector<10xf32>
    %129 = vector.shape_cast %128 : vector<10xf32> to vector<10x1xf32>
    %cst_51 = arith.constant 1.600000e+01 : f32
    %130 = vector.broadcast %cst_51 : f32 to vector<10x1xf32>
    %131 = arith.divf %129, %130 : vector<10x1xf32>
    %132 = vector.broadcast %124 : vector<10x1xf32> to vector<10x16xf32>
    %133 = arith.subf %120, %132 : vector<10x16xf32>
    %cst_52 = arith.constant 9.99999997E-7 : f32
    %134 = vector.broadcast %cst_52 : f32 to vector<10x1xf32>
    %135 = arith.addf %131, %134 : vector<10x1xf32>
    %136 = math.rsqrt %135 : vector<10x1xf32>
    %137 = vector.broadcast %136 : vector<10x1xf32> to vector<10x16xf32>
    %138 = arith.mulf %133, %137 : vector<10x16xf32>
    %139 = vector.broadcast %9 : vector<1x16xf32> to vector<10x16xf32>
    %140 = arith.mulf %138, %139 : vector<10x16xf32>
    %141 = vector.broadcast %10 : vector<1x16xf32> to vector<10x16xf32>
    %142 = arith.addf %140, %141 : vector<10x16xf32>
    %cst_53 = arith.constant dense<0.000000e+00> : vector<10x32xf32>
    %143 = tpu.matmul %142, %18, %cst_53 {dimension_numbers = #tpu.dot_dimension_numbers<[1], [0], [0], [1], [0, 0, 1, 1], [], []>} : vector<10x16xf32>, vector<16x32xf32>, vector<10x32xf32> -> vector<10x32xf32>
    %144 = vector.broadcast %7 : vector<1x32xf32> to vector<10x32xf32>
    %145 = arith.addf %143, %144 : vector<10x32xf32>
    %146 = vector.extract_strided_slice %12 {offsets = [0, 0], sizes = [10, 1], strides = [1, 1]} : vector<10x4xf32> to vector<10x1xf32>
    %147 = vector.broadcast %146 : vector<10x1xf32> to vector<10x32xf32>
    %148 = arith.mulf %145, %147 : vector<10x32xf32>
    %149 = vector.extract_strided_slice %12 {offsets = [0, 1], sizes = [10, 1], strides = [1, 1]} : vector<10x4xf32> to vector<10x1xf32>
    %150 = vector.broadcast %149 : vector<10x1xf32> to vector<10x32xf32>
    %151 = arith.addf %148, %150 : vector<10x32xf32>
    %cst_54 = arith.constant 5.000000e-01 : f32
    %152 = vector.broadcast %cst_54 : f32 to vector<10x32xf32>
    %153 = arith.mulf %152, %151 : vector<10x32xf32>
    %cst_55 = arith.constant 0.707106769 : f32
    %154 = vector.broadcast %cst_55 : f32 to vector<10x32xf32>
    %155 = arith.mulf %151, %154 : vector<10x32xf32>
    %156 = math.absf %155 : vector<10x32xf32>
    %cst_56 = arith.constant 0.327591091 : f32
    %157 = vector.broadcast %cst_56 : f32 to vector<10x32xf32>
    %158 = arith.mulf %157, %156 : vector<10x32xf32>
    %cst_57 = arith.constant 1.000000e+00 : f32
    %159 = vector.broadcast %cst_57 : f32 to vector<10x32xf32>
    %160 = arith.addf %159, %158 : vector<10x32xf32>
    %161 = tpu.reciprocal %160 {approx = true} : vector<10x32xf32> -> vector<10x32xf32>
    %cst_58 = arith.constant 1.06140542 : f32
    %162 = vector.broadcast %cst_58 : f32 to vector<10x32xf32>
    %163 = arith.mulf %162, %161 : vector<10x32xf32>
    %cst_59 = arith.constant -1.45315206 : f32
    %164 = vector.broadcast %cst_59 : f32 to vector<10x32xf32>
    %165 = arith.addf %163, %164 : vector<10x32xf32>
    %166 = arith.mulf %165, %161 : vector<10x32xf32>
    %cst_60 = arith.constant 1.42141378 : f32
    %167 = vector.broadcast %cst_60 : f32 to vector<10x32xf32>
    %168 = arith.addf %166, %167 : vector<10x32xf32>
    %169 = arith.mulf %168, %161 : vector<10x32xf32>
    %cst_61 = arith.constant -0.284496725 : f32
    %170 = vector.broadcast %cst_61 : f32 to vector<10x32xf32>
    %171 = arith.addf %169, %170 : vector<10x32xf32>
    %172 = arith.mulf %171, %161 : vector<10x32xf32>
    %cst_62 = arith.constant 0.254829586 : f32
    %173 = vector.broadcast %cst_62 : f32 to vector<10x32xf32>
    %174 = arith.addf %172, %173 : vector<10x32xf32>
    %175 = arith.mulf %174, %161 : vector<10x32xf32>
    %cst_63 = arith.constant 0.000000e+00 : f32
    %176 = vector.broadcast %cst_63 : f32 to vector<10x32xf32>
    %177 = arith.subf %176, %156 : vector<10x32xf32>
    %178 = arith.mulf %177, %156 : vector<10x32xf32>
    %179 = math.exp %178 : vector<10x32xf32>
    %180 = arith.mulf %175, %179 : vector<10x32xf32>
    %cst_64 = arith.constant 1.000000e+00 : f32
    %181 = vector.broadcast %cst_64 : f32 to vector<10x32xf32>
    %182 = arith.subf %181, %180 : vector<10x32xf32>
    %cst_65 = arith.constant 0.000000e+00 : f32
    %183 = vector.broadcast %cst_65 : f32 to vector<10x32xf32>
    %184 = arith.cmpf oge, %155, %183 : vector<10x32xf32>
    %cst_66 = arith.constant 0.000000e+00 : f32
    %185 = vector.broadcast %cst_66 : f32 to vector<10x32xf32>
    %186 = arith.subf %185, %182 : vector<10x32xf32>
    %187 = arith.select %184, %182, %186 : vector<10x32xi1>, vector<10x32xf32>
    %cst_67 = arith.constant 1.000000e+00 : f32
    %188 = vector.broadcast %cst_67 : f32 to vector<10x32xf32>
    %189 = arith.addf %188, %187 : vector<10x32xf32>
    %190 = arith.mulf %153, %189 : vector<10x32xf32>
    %cst_68 = arith.constant dense<0.000000e+00> : vector<10x16xf32>
    %191 = tpu.matmul %190, %20, %cst_68 {dimension_numbers = #tpu.dot_dimension_numbers<[1], [0], [0], [1], [0, 0, 1, 1], [], []>} : vector<10x32xf32>, vector<32x16xf32>, vector<10x16xf32> -> vector<10x16xf32>
    %192 = vector.broadcast %8 : vector<1x16xf32> to vector<10x16xf32>
    %193 = arith.addf %191, %192 : vector<10x16xf32>
    %194 = vector.extract_strided_slice %12 {offsets = [0, 2], sizes = [10, 1], strides = [1, 1]} : vector<10x4xf32> to vector<10x1xf32>
    %195 = vector.broadcast %194 : vector<10x1xf32> to vector<10x16xf32>
    %196 = arith.mulf %193, %195 : vector<10x16xf32>
    %197 = vector.extract_strided_slice %12 {offsets = [0, 3], sizes = [10, 1], strides = [1, 1]} : vector<10x4xf32> to vector<10x1xf32>
    %198 = vector.broadcast %197 : vector<10x1xf32> to vector<10x16xf32>
    %199 = arith.addf %196, %198 : vector<10x16xf32>
    %200 = arith.addf %120, %199 : vector<10x16xf32>
    %c1 = arith.constant 1 : index
    %c0_69 = arith.constant 0 : index
    %c0_70 = arith.constant 0 : index
    %201 = vector.load %arg7[%c1, %c0_69, %c0_70] : memref<2x6x96xf32, #tpu.memory_space<vmem>>, vector<1x6x96xf32>
    %202 = vector.shape_cast %201 : vector<1x6x96xf32> to vector<6x96xf32>
    %203 = vector.extract_strided_slice %202 {offsets = [0, 0], sizes = [1, 96], strides = [1, 1]} : vector<6x96xf32> to vector<1x96xf32>
    %204 = vector.extract_strided_slice %202 {offsets = [1, 0], sizes = [1, 16], strides = [1, 1]} : vector<6x96xf32> to vector<1x16xf32>
    %205 = vector.extract_strided_slice %202 {offsets = [2, 0], sizes = [1, 32], strides = [1, 1]} : vector<6x96xf32> to vector<1x32xf32>
    %206 = vector.extract_strided_slice %202 {offsets = [3, 0], sizes = [1, 16], strides = [1, 1]} : vector<6x96xf32> to vector<1x16xf32>
    %207 = vector.extract_strided_slice %202 {offsets = [4, 0], sizes = [1, 16], strides = [1, 1]} : vector<6x96xf32> to vector<1x16xf32>
    %208 = vector.extract_strided_slice %202 {offsets = [5, 0], sizes = [1, 16], strides = [1, 1]} : vector<6x96xf32> to vector<1x16xf32>
    %c1_71 = arith.constant 1 : index
    %c0_72 = arith.constant 0 : index
    %c0_73 = arith.constant 0 : index
    %209 = vector.load %arg8[%c1_71, %c0_72, %c0_73] : memref<2x10x4xf32, #tpu.memory_space<vmem>>, vector<1x10x4xf32>
    %210 = vector.shape_cast %209 : vector<1x10x4xf32> to vector<10x4xf32>
    %c1_74 = arith.constant 1 : index
    %c0_75 = arith.constant 0 : index
    %c0_76 = arith.constant 0 : index
    %211 = vector.load %arg3[%c1_74, %c0_75, %c0_76] : memref<2x16x96xf32, #tpu.memory_space<vmem>>, vector<1x16x96xf32>
    %212 = vector.shape_cast %211 : vector<1x16x96xf32> to vector<16x96xf32>
    %c1_77 = arith.constant 1 : index
    %c0_78 = arith.constant 0 : index
    %c0_79 = arith.constant 0 : index
    %213 = vector.load %arg4[%c1_77, %c0_78, %c0_79] : memref<2x32x16xf32, #tpu.memory_space<vmem>>, vector<1x32x16xf32>
    %214 = vector.shape_cast %213 : vector<1x32x16xf32> to vector<32x16xf32>
    %c1_80 = arith.constant 1 : index
    %c0_81 = arith.constant 0 : index
    %c0_82 = arith.constant 0 : index
    %215 = vector.load %arg5[%c1_80, %c0_81, %c0_82] : memref<2x16x32xf32, #tpu.memory_space<vmem>>, vector<1x16x32xf32>
    %216 = vector.shape_cast %215 : vector<1x16x32xf32> to vector<16x32xf32>
    %c1_83 = arith.constant 1 : index
    %c0_84 = arith.constant 0 : index
    %c0_85 = arith.constant 0 : index
    %217 = vector.load %arg6[%c1_83, %c0_84, %c0_85] : memref<2x32x16xf32, #tpu.memory_space<vmem>>, vector<1x32x16xf32>
    %218 = vector.shape_cast %217 : vector<1x32x16xf32> to vector<32x16xf32>
    %cst_86 = arith.constant dense<0.000000e+00> : vector<10xf32>
    %219 = vector.multi_reduction <add>, %200, %cst_86 [1] : vector<10x16xf32> to vector<10xf32>
    %220 = vector.shape_cast %219 : vector<10xf32> to vector<10x1xf32>
    %cst_87 = arith.constant 1.600000e+01 : f32
    %221 = vector.broadcast %cst_87 : f32 to vector<10x1xf32>
    %222 = arith.divf %220, %221 : vector<10x1xf32>
    %223 = vector.broadcast %222 : vector<10x1xf32> to vector<10x16xf32>
    %224 = arith.subf %200, %223 : vector<10x16xf32>
    %225 = arith.mulf %224, %224 : vector<10x16xf32>
    %cst_88 = arith.constant dense<0.000000e+00> : vector<10xf32>
    %226 = vector.multi_reduction <add>, %225, %cst_88 [1] : vector<10x16xf32> to vector<10xf32>
    %227 = vector.shape_cast %226 : vector<10xf32> to vector<10x1xf32>
    %cst_89 = arith.constant 1.600000e+01 : f32
    %228 = vector.broadcast %cst_89 : f32 to vector<10x1xf32>
    %229 = arith.divf %227, %228 : vector<10x1xf32>
    %230 = vector.broadcast %222 : vector<10x1xf32> to vector<10x16xf32>
    %231 = arith.subf %200, %230 : vector<10x16xf32>
    %cst_90 = arith.constant 9.99999997E-7 : f32
    %232 = vector.broadcast %cst_90 : f32 to vector<10x1xf32>
    %233 = arith.addf %229, %232 : vector<10x1xf32>
    %234 = math.rsqrt %233 : vector<10x1xf32>
    %235 = vector.broadcast %234 : vector<10x1xf32> to vector<10x16xf32>
    %236 = arith.mulf %231, %235 : vector<10x16xf32>
    %237 = vector.broadcast %207 : vector<1x16xf32> to vector<10x16xf32>
    %238 = arith.mulf %236, %237 : vector<10x16xf32>
    %239 = vector.broadcast %208 : vector<1x16xf32> to vector<10x16xf32>
    %240 = arith.addf %238, %239 : vector<10x16xf32>
    %cst_91 = arith.constant dense<0.000000e+00> : vector<10x96xf32>
    %241 = tpu.matmul %240, %212, %cst_91 {dimension_numbers = #tpu.dot_dimension_numbers<[1], [0], [0], [1], [0, 0, 1, 1], [], []>} : vector<10x16xf32>, vector<16x96xf32>, vector<10x96xf32> -> vector<10x96xf32>
    %242 = vector.broadcast %203 : vector<1x96xf32> to vector<10x96xf32>
    %243 = arith.addf %241, %242 : vector<10x96xf32>
    %244 = vector.extract_strided_slice %243 {offsets = [0, 0], sizes = [5, 16], strides = [1, 1]} : vector<10x96xf32> to vector<5x16xf32>
    %245 = vector.extract_strided_slice %243 {offsets = [0, 32], sizes = [5, 16], strides = [1, 1]} : vector<10x96xf32> to vector<5x16xf32>
    %246 = vector.extract_strided_slice %243 {offsets = [0, 64], sizes = [5, 16], strides = [1, 1]} : vector<10x96xf32> to vector<5x16xf32>
    %cst_92 = arith.constant dense<0.000000e+00> : vector<5x5xf32>
    %247 = tpu.matmul %244, %245, %cst_92 {dimension_numbers = #tpu.dot_dimension_numbers<[1], [1], [0], [0], [0, 0, 1, 0], [], []>} : vector<5x16xf32>, vector<5x16xf32>, vector<5x5xf32> -> vector<5x5xf32>
    %cst_93 = arith.constant 2.500000e-01 : f32
    %248 = vector.broadcast %cst_93 : f32 to vector<5x5xf32>
    %249 = arith.mulf %247, %248 : vector<5x5xf32>
    %cst_94 = arith.constant dense<0xFF800000> : vector<5xf32>
    %250 = vector.multi_reduction <maximumf>, %249, %cst_94 [1] : vector<5x5xf32> to vector<5xf32>
    %251 = vector.shape_cast %250 : vector<5xf32> to vector<5x1xf32>
    %252 = vector.broadcast %251 : vector<5x1xf32> to vector<5x5xf32>
    %253 = arith.subf %249, %252 : vector<5x5xf32>
    %254 = math.exp %253 : vector<5x5xf32>
    %cst_95 = arith.constant dense<0.000000e+00> : vector<5xf32>
    %255 = vector.multi_reduction <add>, %254, %cst_95 [1] : vector<5x5xf32> to vector<5xf32>
    %256 = vector.shape_cast %255 : vector<5xf32> to vector<5x1xf32>
    %257 = tpu.reciprocal %256 {approx = true} : vector<5x1xf32> -> vector<5x1xf32>
    %258 = vector.broadcast %257 : vector<5x1xf32> to vector<5x5xf32>
    %259 = arith.mulf %254, %258 : vector<5x5xf32>
    %cst_96 = arith.constant dense<0.000000e+00> : vector<5x16xf32>
    %260 = tpu.matmul %259, %246, %cst_96 {dimension_numbers = #tpu.dot_dimension_numbers<[0], [0], [1], [1], [0, 1, 1, 1], [], []>} : vector<5x5xf32>, vector<5x16xf32>, vector<5x16xf32> -> vector<5x16xf32>
    %261 = vector.extract_strided_slice %243 {offsets = [0, 16], sizes = [5, 16], strides = [1, 1]} : vector<10x96xf32> to vector<5x16xf32>
    %262 = vector.extract_strided_slice %243 {offsets = [0, 48], sizes = [5, 16], strides = [1, 1]} : vector<10x96xf32> to vector<5x16xf32>
    %263 = vector.extract_strided_slice %243 {offsets = [0, 80], sizes = [5, 16], strides = [1, 1]} : vector<10x96xf32> to vector<5x16xf32>
    %cst_97 = arith.constant dense<0.000000e+00> : vector<5x5xf32>
    %264 = tpu.matmul %261, %262, %cst_97 {dimension_numbers = #tpu.dot_dimension_numbers<[1], [1], [0], [0], [0, 0, 1, 0], [], []>} : vector<5x16xf32>, vector<5x16xf32>, vector<5x5xf32> -> vector<5x5xf32>
    %cst_98 = arith.constant 2.500000e-01 : f32
    %265 = vector.broadcast %cst_98 : f32 to vector<5x5xf32>
    %266 = arith.mulf %264, %265 : vector<5x5xf32>
    %cst_99 = arith.constant dense<0xFF800000> : vector<5xf32>
    %267 = vector.multi_reduction <maximumf>, %266, %cst_99 [1] : vector<5x5xf32> to vector<5xf32>
    %268 = vector.shape_cast %267 : vector<5xf32> to vector<5x1xf32>
    %269 = vector.broadcast %268 : vector<5x1xf32> to vector<5x5xf32>
    %270 = arith.subf %266, %269 : vector<5x5xf32>
    %271 = math.exp %270 : vector<5x5xf32>
    %cst_100 = arith.constant dense<0.000000e+00> : vector<5xf32>
    %272 = vector.multi_reduction <add>, %271, %cst_100 [1] : vector<5x5xf32> to vector<5xf32>
    %273 = vector.shape_cast %272 : vector<5xf32> to vector<5x1xf32>
    %274 = tpu.reciprocal %273 {approx = true} : vector<5x1xf32> -> vector<5x1xf32>
    %275 = vector.broadcast %274 : vector<5x1xf32> to vector<5x5xf32>
    %276 = arith.mulf %271, %275 : vector<5x5xf32>
    %cst_101 = arith.constant dense<0.000000e+00> : vector<5x16xf32>
    %277 = tpu.matmul %276, %263, %cst_101 {dimension_numbers = #tpu.dot_dimension_numbers<[0], [0], [1], [1], [0, 1, 1, 1], [], []>} : vector<5x5xf32>, vector<5x16xf32>, vector<5x16xf32> -> vector<5x16xf32>
    %278 = tpu.concatenate %260, %277 in 1 : vector<5x16xf32>, vector<5x16xf32> -> vector<5x32xf32>
    %279 = vector.extract_strided_slice %243 {offsets = [5, 0], sizes = [5, 16], strides = [1, 1]} : vector<10x96xf32> to vector<5x16xf32>
    %280 = vector.extract_strided_slice %243 {offsets = [5, 32], sizes = [5, 16], strides = [1, 1]} : vector<10x96xf32> to vector<5x16xf32>
    %281 = vector.extract_strided_slice %243 {offsets = [5, 64], sizes = [5, 16], strides = [1, 1]} : vector<10x96xf32> to vector<5x16xf32>
    %cst_102 = arith.constant dense<0.000000e+00> : vector<5x5xf32>
    %282 = tpu.matmul %279, %280, %cst_102 {dimension_numbers = #tpu.dot_dimension_numbers<[1], [1], [0], [0], [0, 0, 1, 0], [], []>} : vector<5x16xf32>, vector<5x16xf32>, vector<5x5xf32> -> vector<5x5xf32>
    %cst_103 = arith.constant 2.500000e-01 : f32
    %283 = vector.broadcast %cst_103 : f32 to vector<5x5xf32>
    %284 = arith.mulf %282, %283 : vector<5x5xf32>
    %cst_104 = arith.constant dense<0xFF800000> : vector<5xf32>
    %285 = vector.multi_reduction <maximumf>, %284, %cst_104 [1] : vector<5x5xf32> to vector<5xf32>
    %286 = vector.shape_cast %285 : vector<5xf32> to vector<5x1xf32>
    %287 = vector.broadcast %286 : vector<5x1xf32> to vector<5x5xf32>
    %288 = arith.subf %284, %287 : vector<5x5xf32>
    %289 = math.exp %288 : vector<5x5xf32>
    %cst_105 = arith.constant dense<0.000000e+00> : vector<5xf32>
    %290 = vector.multi_reduction <add>, %289, %cst_105 [1] : vector<5x5xf32> to vector<5xf32>
    %291 = vector.shape_cast %290 : vector<5xf32> to vector<5x1xf32>
    %292 = tpu.reciprocal %291 {approx = true} : vector<5x1xf32> -> vector<5x1xf32>
    %293 = vector.broadcast %292 : vector<5x1xf32> to vector<5x5xf32>
    %294 = arith.mulf %289, %293 : vector<5x5xf32>
    %cst_106 = arith.constant dense<0.000000e+00> : vector<5x16xf32>
    %295 = tpu.matmul %294, %281, %cst_106 {dimension_numbers = #tpu.dot_dimension_numbers<[0], [0], [1], [1], [0, 1, 1, 1], [], []>} : vector<5x5xf32>, vector<5x16xf32>, vector<5x16xf32> -> vector<5x16xf32>
    %296 = vector.extract_strided_slice %243 {offsets = [5, 16], sizes = [5, 16], strides = [1, 1]} : vector<10x96xf32> to vector<5x16xf32>
    %297 = vector.extract_strided_slice %243 {offsets = [5, 48], sizes = [5, 16], strides = [1, 1]} : vector<10x96xf32> to vector<5x16xf32>
    %298 = vector.extract_strided_slice %243 {offsets = [5, 80], sizes = [5, 16], strides = [1, 1]} : vector<10x96xf32> to vector<5x16xf32>
    %cst_107 = arith.constant dense<0.000000e+00> : vector<5x5xf32>
    %299 = tpu.matmul %296, %297, %cst_107 {dimension_numbers = #tpu.dot_dimension_numbers<[1], [1], [0], [0], [0, 0, 1, 0], [], []>} : vector<5x16xf32>, vector<5x16xf32>, vector<5x5xf32> -> vector<5x5xf32>
    %cst_108 = arith.constant 2.500000e-01 : f32
    %300 = vector.broadcast %cst_108 : f32 to vector<5x5xf32>
    %301 = arith.mulf %299, %300 : vector<5x5xf32>
    %cst_109 = arith.constant dense<0xFF800000> : vector<5xf32>
    %302 = vector.multi_reduction <maximumf>, %301, %cst_109 [1] : vector<5x5xf32> to vector<5xf32>
    %303 = vector.shape_cast %302 : vector<5xf32> to vector<5x1xf32>
    %304 = vector.broadcast %303 : vector<5x1xf32> to vector<5x5xf32>
    %305 = arith.subf %301, %304 : vector<5x5xf32>
    %306 = math.exp %305 : vector<5x5xf32>
    %cst_110 = arith.constant dense<0.000000e+00> : vector<5xf32>
    %307 = vector.multi_reduction <add>, %306, %cst_110 [1] : vector<5x5xf32> to vector<5xf32>
    %308 = vector.shape_cast %307 : vector<5xf32> to vector<5x1xf32>
    %309 = tpu.reciprocal %308 {approx = true} : vector<5x1xf32> -> vector<5x1xf32>
    %310 = vector.broadcast %309 : vector<5x1xf32> to vector<5x5xf32>
    %311 = arith.mulf %306, %310 : vector<5x5xf32>
    %cst_111 = arith.constant dense<0.000000e+00> : vector<5x16xf32>
    %312 = tpu.matmul %311, %298, %cst_111 {dimension_numbers = #tpu.dot_dimension_numbers<[0], [0], [1], [1], [0, 1, 1, 1], [], []>} : vector<5x5xf32>, vector<5x16xf32>, vector<5x16xf32> -> vector<5x16xf32>
    %313 = tpu.concatenate %295, %312 in 1 : vector<5x16xf32>, vector<5x16xf32> -> vector<5x32xf32>
    %314 = tpu.concatenate %278, %313 in 0 : vector<5x32xf32>, vector<5x32xf32> -> vector<10x32xf32>
    %cst_112 = arith.constant dense<0.000000e+00> : vector<10x16xf32>
    %315 = tpu.matmul %314, %214, %cst_112 {dimension_numbers = #tpu.dot_dimension_numbers<[1], [0], [0], [1], [0, 0, 1, 1], [], []>} : vector<10x32xf32>, vector<32x16xf32>, vector<10x16xf32> -> vector<10x16xf32>
    %316 = vector.broadcast %204 : vector<1x16xf32> to vector<10x16xf32>
    %317 = arith.addf %315, %316 : vector<10x16xf32>
    %318 = arith.addf %200, %317 : vector<10x16xf32>
    %cst_113 = arith.constant dense<0.000000e+00> : vector<10xf32>
    %319 = vector.multi_reduction <add>, %318, %cst_113 [1] : vector<10x16xf32> to vector<10xf32>
    %320 = vector.shape_cast %319 : vector<10xf32> to vector<10x1xf32>
    %cst_114 = arith.constant 1.600000e+01 : f32
    %321 = vector.broadcast %cst_114 : f32 to vector<10x1xf32>
    %322 = arith.divf %320, %321 : vector<10x1xf32>
    %323 = vector.broadcast %322 : vector<10x1xf32> to vector<10x16xf32>
    %324 = arith.subf %318, %323 : vector<10x16xf32>
    %325 = arith.mulf %324, %324 : vector<10x16xf32>
    %cst_115 = arith.constant dense<0.000000e+00> : vector<10xf32>
    %326 = vector.multi_reduction <add>, %325, %cst_115 [1] : vector<10x16xf32> to vector<10xf32>
    %327 = vector.shape_cast %326 : vector<10xf32> to vector<10x1xf32>
    %cst_116 = arith.constant 1.600000e+01 : f32
    %328 = vector.broadcast %cst_116 : f32 to vector<10x1xf32>
    %329 = arith.divf %327, %328 : vector<10x1xf32>
    %330 = vector.broadcast %322 : vector<10x1xf32> to vector<10x16xf32>
    %331 = arith.subf %318, %330 : vector<10x16xf32>
    %cst_117 = arith.constant 9.99999997E-7 : f32
    %332 = vector.broadcast %cst_117 : f32 to vector<10x1xf32>
    %333 = arith.addf %329, %332 : vector<10x1xf32>
    %334 = math.rsqrt %333 : vector<10x1xf32>
    %335 = vector.broadcast %334 : vector<10x1xf32> to vector<10x16xf32>
    %336 = arith.mulf %331, %335 : vector<10x16xf32>
    %337 = vector.broadcast %207 : vector<1x16xf32> to vector<10x16xf32>
    %338 = arith.mulf %336, %337 : vector<10x16xf32>
    %339 = vector.broadcast %208 : vector<1x16xf32> to vector<10x16xf32>
    %340 = arith.addf %338, %339 : vector<10x16xf32>
    %cst_118 = arith.constant dense<0.000000e+00> : vector<10x32xf32>
    %341 = tpu.matmul %340, %216, %cst_118 {dimension_numbers = #tpu.dot_dimension_numbers<[1], [0], [0], [1], [0, 0, 1, 1], [], []>} : vector<10x16xf32>, vector<16x32xf32>, vector<10x32xf32> -> vector<10x32xf32>
    %342 = vector.broadcast %205 : vector<1x32xf32> to vector<10x32xf32>
    %343 = arith.addf %341, %342 : vector<10x32xf32>
    %344 = vector.extract_strided_slice %210 {offsets = [0, 0], sizes = [10, 1], strides = [1, 1]} : vector<10x4xf32> to vector<10x1xf32>
    %345 = vector.broadcast %344 : vector<10x1xf32> to vector<10x32xf32>
    %346 = arith.mulf %343, %345 : vector<10x32xf32>
    %347 = vector.extract_strided_slice %210 {offsets = [0, 1], sizes = [10, 1], strides = [1, 1]} : vector<10x4xf32> to vector<10x1xf32>
    %348 = vector.broadcast %347 : vector<10x1xf32> to vector<10x32xf32>
    %349 = arith.addf %346, %348 : vector<10x32xf32>
    %cst_119 = arith.constant 5.000000e-01 : f32
    %350 = vector.broadcast %cst_119 : f32 to vector<10x32xf32>
    %351 = arith.mulf %350, %349 : vector<10x32xf32>
    %cst_120 = arith.constant 0.707106769 : f32
    %352 = vector.broadcast %cst_120 : f32 to vector<10x32xf32>
    %353 = arith.mulf %349, %352 : vector<10x32xf32>
    %354 = math.absf %353 : vector<10x32xf32>
    %cst_121 = arith.constant 0.327591091 : f32
    %355 = vector.broadcast %cst_121 : f32 to vector<10x32xf32>
    %356 = arith.mulf %355, %354 : vector<10x32xf32>
    %cst_122 = arith.constant 1.000000e+00 : f32
    %357 = vector.broadcast %cst_122 : f32 to vector<10x32xf32>
    %358 = arith.addf %357, %356 : vector<10x32xf32>
    %359 = tpu.reciprocal %358 {approx = true} : vector<10x32xf32> -> vector<10x32xf32>
    %cst_123 = arith.constant 1.06140542 : f32
    %360 = vector.broadcast %cst_123 : f32 to vector<10x32xf32>
    %361 = arith.mulf %360, %359 : vector<10x32xf32>
    %cst_124 = arith.constant -1.45315206 : f32
    %362 = vector.broadcast %cst_124 : f32 to vector<10x32xf32>
    %363 = arith.addf %361, %362 : vector<10x32xf32>
    %364 = arith.mulf %363, %359 : vector<10x32xf32>
    %cst_125 = arith.constant 1.42141378 : f32
    %365 = vector.broadcast %cst_125 : f32 to vector<10x32xf32>
    %366 = arith.addf %364, %365 : vector<10x32xf32>
    %367 = arith.mulf %366, %359 : vector<10x32xf32>
    %cst_126 = arith.constant -0.284496725 : f32
    %368 = vector.broadcast %cst_126 : f32 to vector<10x32xf32>
    %369 = arith.addf %367, %368 : vector<10x32xf32>
    %370 = arith.mulf %369, %359 : vector<10x32xf32>
    %cst_127 = arith.constant 0.254829586 : f32
    %371 = vector.broadcast %cst_127 : f32 to vector<10x32xf32>
    %372 = arith.addf %370, %371 : vector<10x32xf32>
    %373 = arith.mulf %372, %359 : vector<10x32xf32>
    %cst_128 = arith.constant 0.000000e+00 : f32
    %374 = vector.broadcast %cst_128 : f32 to vector<10x32xf32>
    %375 = arith.subf %374, %354 : vector<10x32xf32>
    %376 = arith.mulf %375, %354 : vector<10x32xf32>
    %377 = math.exp %376 : vector<10x32xf32>
    %378 = arith.mulf %373, %377 : vector<10x32xf32>
    %cst_129 = arith.constant 1.000000e+00 : f32
    %379 = vector.broadcast %cst_129 : f32 to vector<10x32xf32>
    %380 = arith.subf %379, %378 : vector<10x32xf32>
    %cst_130 = arith.constant 0.000000e+00 : f32
    %381 = vector.broadcast %cst_130 : f32 to vector<10x32xf32>
    %382 = arith.cmpf oge, %353, %381 : vector<10x32xf32>
    %cst_131 = arith.constant 0.000000e+00 : f32
    %383 = vector.broadcast %cst_131 : f32 to vector<10x32xf32>
    %384 = arith.subf %383, %380 : vector<10x32xf32>
    %385 = arith.select %382, %380, %384 : vector<10x32xi1>, vector<10x32xf32>
    %cst_132 = arith.constant 1.000000e+00 : f32
    %386 = vector.broadcast %cst_132 : f32 to vector<10x32xf32>
    %387 = arith.addf %386, %385 : vector<10x32xf32>
    %388 = arith.mulf %351, %387 : vector<10x32xf32>
    %cst_133 = arith.constant dense<0.000000e+00> : vector<10x16xf32>
    %389 = tpu.matmul %388, %218, %cst_133 {dimension_numbers = #tpu.dot_dimension_numbers<[1], [0], [0], [1], [0, 0, 1, 1], [], []>} : vector<10x32xf32>, vector<32x16xf32>, vector<10x16xf32> -> vector<10x16xf32>
    %390 = vector.broadcast %206 : vector<1x16xf32> to vector<10x16xf32>
    %391 = arith.addf %389, %390 : vector<10x16xf32>
    %392 = vector.extract_strided_slice %210 {offsets = [0, 2], sizes = [10, 1], strides = [1, 1]} : vector<10x4xf32> to vector<10x1xf32>
    %393 = vector.broadcast %392 : vector<10x1xf32> to vector<10x16xf32>
    %394 = arith.mulf %391, %393 : vector<10x16xf32>
    %395 = vector.extract_strided_slice %210 {offsets = [0, 3], sizes = [10, 1], strides = [1, 1]} : vector<10x4xf32> to vector<10x1xf32>
    %396 = vector.broadcast %395 : vector<10x1xf32> to vector<10x16xf32>
    %397 = arith.addf %394, %396 : vector<10x16xf32>
    %398 = arith.addf %318, %397 : vector<10x16xf32>
    %c0_134 = arith.constant 0 : index
    %c0_135 = arith.constant 0 : index
    %399 = vector.load %arg9[%c0_134, %c0_135] : memref<17x10xf32, #tpu.memory_space<vmem>>, vector<17x10xf32>
    %400 = vector.extract_strided_slice %398 {offsets = [0, 0], sizes = [1, 16], strides = [1, 1]} : vector<10x16xf32> to vector<1x16xf32>
    %401 = vector.extract_strided_slice %398 {offsets = [5, 0], sizes = [1, 16], strides = [1, 1]} : vector<10x16xf32> to vector<1x16xf32>
    %402 = tpu.concatenate %400, %401 in 0 : vector<1x16xf32>, vector<1x16xf32> -> vector<2x16xf32>
    %403 = vector.extract_strided_slice %399 {offsets = [0, 0], sizes = [16, 10], strides = [1, 1]} : vector<17x10xf32> to vector<16x10xf32>
    %cst_136 = arith.constant dense<0.000000e+00> : vector<2x10xf32>
    %404 = tpu.matmul %402, %403, %cst_136 {dimension_numbers = #tpu.dot_dimension_numbers<[1], [0], [0], [1], [0, 0, 1, 1], [], []>} : vector<2x16xf32>, vector<16x10xf32>, vector<2x10xf32> -> vector<2x10xf32>
    %405 = vector.extract_strided_slice %399 {offsets = [16, 0], sizes = [1, 10], strides = [1, 1]} : vector<17x10xf32> to vector<1x10xf32>
    %406 = vector.broadcast %405 : vector<1x10xf32> to vector<2x10xf32>
    %407 = arith.addf %404, %406 : vector<2x10xf32>
    %c0_137 = arith.constant 0 : index
    %c0_138 = arith.constant 0 : index
    %408 = vector.load %arg10[%c0_137, %c0_138] : memref<2x10xf32, #tpu.memory_space<vmem>>, vector<2x10xf32>
    tpu.vector_store %arg10[%c0_137, %c0_138], %407 {strides = array<i32>} : memref<2x10xf32, #tpu.memory_space<vmem>>, vector<2x10xf32>,
    return
  }
  func.func @transform_0(%arg0: i32) -> (i32, i32) {
    %c0_i32 = arith.constant 0 : i32
    %c0_i32_0 = arith.constant 0 : i32
    return %arg0, %c0_i32 : i32, i32
  }
  func.func @transform_1(%arg0: i32) -> (i32, i32) {
    %c0_i32 = arith.constant 0 : i32
    %c0_i32_0 = arith.constant 0 : i32
    %c0_i32_1 = arith.constant 0 : i32
    return %c0_i32, %c0_i32_0 : i32, i32
  }
  func.func @transform_2(%arg0: i32) -> (i32, i32, i32) {
    %c0_i32 = arith.constant 0 : i32
    %c0_i32_0 = arith.constant 0 : i32
    %c0_i32_1 = arith.constant 0 : i32
    %c0_i32_2 = arith.constant 0 : i32
    return %c0_i32, %c0_i32_0, %c0_i32_1 : i32, i32, i32
  }
  func.func @transform_3(%arg0: i32) -> (i32, i32, i32) {
    %c0_i32 = arith.constant 0 : i32
    %c0_i32_0 = arith.constant 0 : i32
    %c0_i32_1 = arith.constant 0 : i32
    %c0_i32_2 = arith.constant 0 : i32
    return %c0_i32, %c0_i32_0, %c0_i32_1 : i32, i32, i32
  }
  func.func @transform_4(%arg0: i32) -> (i32, i32, i32) {
    %c0_i32 = arith.constant 0 : i32
    %c0_i32_0 = arith.constant 0 : i32
    %c0_i32_1 = arith.constant 0 : i32
    %c0_i32_2 = arith.constant 0 : i32
    return %c0_i32, %c0_i32_0, %c0_i32_1 : i32, i32, i32
  }
  func.func @transform_5(%arg0: i32) -> (i32, i32, i32) {
    %c0_i32 = arith.constant 0 : i32
    %c0_i32_0 = arith.constant 0 : i32
    %c0_i32_1 = arith.constant 0 : i32
    %c0_i32_2 = arith.constant 0 : i32
    return %c0_i32, %c0_i32_0, %c0_i32_1 : i32, i32, i32
  }
  func.func @transform_6(%arg0: i32) -> (i32, i32, i32) {
    %c0_i32 = arith.constant 0 : i32
    %c0_i32_0 = arith.constant 0 : i32
    %c0_i32_1 = arith.constant 0 : i32
    %c0_i32_2 = arith.constant 0 : i32
    return %c0_i32, %c0_i32_0, %c0_i32_1 : i32, i32, i32
  }
  func.func @transform_7(%arg0: i32) -> (i32, i32, i32) {
    %c0_i32 = arith.constant 0 : i32
    %c0_i32_0 = arith.constant 0 : i32
    %c0_i32_1 = arith.constant 0 : i32
    %c0_i32_2 = arith.constant 0 : i32
    return %c0_i32, %c0_i32_0, %c0_i32_1 : i32, i32, i32
  }
  func.func @transform_8(%arg0: i32) -> (i32, i32) {
    %c0_i32 = arith.constant 0 : i32
    %c0_i32_0 = arith.constant 0 : i32
    %c0_i32_1 = arith.constant 0 : i32
    return %c0_i32, %c0_i32_0 : i32, i32
  }
  func.func @transform_9(%arg0: i32) -> (i32, i32) {
    %c0_i32 = arith.constant 0 : i32
    %c0_i32_0 = arith.constant 0 : i32
    return %arg0, %c0_i32 : i32, i32
  }
}

</mosaic_0001>

<llo_original>
// kernel: tile.9
$region0: #{tile.9}
  %s0 = inlined_call_operand.vmem [shape: f32[2,2,5,4], index: 0, kind: input, shape index: {}]
  %s1 = inlined_call_operand.vmem [shape: f32[2,10,4], index: 1, kind: output, shape index: {}]
  $region1: #{tile.9} parent=0
    #allocation0 [shape = 'u8[8192]{0}', space=vmem, size = 0x2000, scoped, tag = 'scoped mem for output reshape']
    #allocation1 [shape = 'u8[32768]{0}', space=vmem, size = 0x8000, scoped, tag = 'scoped mem for input reshape']
    %s3 = sshll.u32 1, 2
    %s4 = ssub.s32 %s3, 1
    %s5 = smul.addr 2, 7
    %s6 = scalar_lea.vmem %s0, %s5
    %v7 = vld [vmem:[%s6] sm:%s4]
    %s8 = scalar_lea.vmem [#allocation1], 56
    %9 = vst [vmem:[%s8] sm:%s4] %v7
    %s10 = smul.addr 2, 6
    %s11 = scalar_lea.vmem %s0, %s10
    %v12 = vld [vmem:[%s11] sm:%s4]
    %s13 = scalar_lea.vmem [#allocation1], 48
    %14 = vst [vmem:[%s13] sm:%s4] %v12
    %s15 = smul.addr 2, 5
    %s16 = scalar_lea.vmem %s0, %s15
    %v17 = vld [vmem:[%s16] sm:%s4]
    %s18 = scalar_lea.vmem [#allocation1], 40
    %19 = vst [vmem:[%s18] sm:%s4] %v17
    %s20 = smul.addr 2, 4
    %s21 = scalar_lea.vmem %s0, %s20
    %v22 = vld [vmem:[%s21] sm:%s4]
    %s23 = scalar_lea.vmem [#allocation1], 32
    %24 = vst [vmem:[%s23] sm:%s4] %v22
    %s25 = smul.addr 2, 3
    %s26 = scalar_lea.vmem %s0, %s25
    %v27 = vld [vmem:[%s26] sm:%s4]
    %s28 = scalar_lea.vmem [#allocation1], 24
    %29 = vst [vmem:[%s28] sm:%s4] %v27
    %s30 = smul.addr 2, 2
    %s31 = scalar_lea.vmem %s0, %s30
    %v32 = vld [vmem:[%s31] sm:%s4]
    %s33 = scalar_lea.vmem [#allocation1], 16
    %34 = vst [vmem:[%s33] sm:%s4] %v32
    %s35 = scalar_lea.vmem %s0, 2
    %v36 = vld [vmem:[%s35] sm:%s4]
    %s37 = scalar_lea.vmem [#allocation1], 8
    %38 = vst [vmem:[%s37] sm:%s4] %v36
    %v39 = vld [vmem:[%s0] sm:%s4]
    %40 = vst [vmem:[#allocation1] sm:%s4] %v39
    %v41 = vld [vmem:[#allocation1] ss:$8 sm:$0xf]
    %v42 = vld [vmem:[#allocation1] ss:$8 sm:$0xf0]
    %vm43 = vcmask 1047556
    %v44 = vsel %vm43, %v42, %v41
    %vm45 = vcmask 39936
    %46 = vst.msk [vmem:[#allocation0] sm:$0xf] %vm45, %v44
    %s47 = scalar_lea.vmem [#allocation0], 4
    %48 = vst.msk [vmem:[%s47] sm:$0xf0] %vm45, %v44
    %s49 = scalar_lea.vmem [#allocation1], 1
    %v50 = vld [vmem:[%s49] ss:$8 sm:$0xf]
    %s51 = scalar_lea.vmem [#allocation1], 1
    %v52 = vld [vmem:[%s51] ss:$8 sm:$0xf0]
    %vm53 = vcmask 1047556
    %v54 = vsel %vm53, %v52, %v50
    %55 = vrot.lane.b32.xlu0 %v54, 5
    %v56 = vpop.permute.xlu0 %55
    %vm57 = vcmask 80936
    %58 = vst.msk [vmem:[#allocation0] sm:$0xf] %vm57, %v56
    %s59 = scalar_lea.vmem [#allocation0], 4
    %60 = vst.msk [vmem:[%s59] sm:$0xf0] %vm57, %v56
    %s62 = sshll.u32 1, 4
    %s63 = ssub.s32 %s62, 1
    %v65 = vld [vmem:[#allocation0] sm:%s63]
    %s66 = sshll.u32 1, 4
    %s67 = ssub.s32 %s66, 1
    %68 = vst [vmem:[%s1] sm:%s67] %v65
    %s69 = scalar_lea.vmem [#allocation0], 8
    %v70 = vld [vmem:[%s69] sm:%s63]
    %s71 = sshll.u32 1, 4
    %s72 = ssub.s32 %s71, 1
    %s73 = scalar_lea.vmem %s1, 4
    %74 = vst [vmem:[%s73] sm:%s72] %v70

// kernel: vit_forward.1
$region0: #{vit_forward.1}
  #allocation0 [shape = 'u32[]', space=smem, size = 0x4, offset = 0x4, fixed_abs, tag = 'smem constant byte address 0x4 - core index']
  #allocation1 [shape = 'u32[144,128]{1,0:T(1,128)}', space=vmem, size = 0x12000, scoped, tag = 'internal scratch']
  %s0 = inlined_call_operand.vmem [shape: f32[10,259], index: 0, kind: input, shape index: {}]
  %s1 = inlined_call_operand.vmem [shape: f32[259,16], index: 1, kind: input, shape index: {}]
  %s2 = inlined_call_operand.vmem [shape: f32[2,16,96], index: 2, kind: input, shape index: {}]
  %s3 = inlined_call_operand.vmem [shape: f32[2,32,16], index: 3, kind: input, shape index: {}]
  %s4 = inlined_call_operand.vmem [shape: f32[2,16,32], index: 4, kind: input, shape index: {}]
  %s5 = inlined_call_operand.vmem [shape: f32[2,32,16], index: 5, kind: input, shape index: {}]
  %s6 = inlined_call_operand.vmem [shape: f32[2,6,96], index: 6, kind: input, shape index: {}]
  %s7 = inlined_call_operand.vmem [shape: f32[2,10,4], index: 7, kind: input, shape index: {}]
  %s8 = inlined_call_operand.vmem [shape: f32[17,10], index: 8, kind: input, shape index: {}]
  %s9 = inlined_call_operand.hbm [shape: f32[2,10], index: 9, kind: output, shape index: {}]
  %s10 = sld [smem:[#allocation0]]
  $region46: #{vit_forward.1} parent=0
    _
  %s12 = ssub.s32 1, %s10
  %s13 = scalar_select 0, %s12, %s10
  $region1: #{vit_forward.1} parent=0
    #allocation2 [shape = 'u8[1024]{0}', space=vmem, size = 0x400, scoped, tag = 'output window, operand 0, single buffered']
    #allocation3 [shape = 's32[1]{0}', space=sflag, size = 0x4, scoped, tag = 'scoped memory for vit_forward.1']
    %14 = vsyncpa [#allocation3], 0
    // Predicated region
    $region2: #{vit_forward.1} parent=1 // pred_check
      _
    $region3: #{vit_forward.1} parent=1 // pred_check_branch
      %16 = sbr.rel (0) target = $region5
    $region4: #{vit_forward.1} parent=1 // pred_region
      _
    $region5: #{vit_forward.1} parent=1 // pred_fallthru
      _
    // Predicated region
    $region6: #{vit_forward.1} parent=1 // pred_check
      _
    $region7: #{vit_forward.1} parent=1 // pred_check_branch
      %18 = sbr.rel (0) target = $region9
    $region8: #{vit_forward.1} parent=1 // pred_region
      _
    $region9: #{vit_forward.1} parent=1 // pred_fallthru
      _
    // Predicated region
    $region10: #{vit_forward.1} parent=1 // pred_check
      _
    $region11: #{vit_forward.1} parent=1 // pred_check_branch
      %20 = sbr.rel (0) target = $region13
    $region12: #{vit_forward.1} parent=1 // pred_region
      _
    $region13: #{vit_forward.1} parent=1 // pred_fallthru
      _
    // Predicated region
    $region14: #{vit_forward.1} parent=1 // pred_check
      _
    $region15: #{vit_forward.1} parent=1 // pred_check_branch
      %22 = sbr.rel (0) target = $region17
    $region16: #{vit_forward.1} parent=1 // pred_region
      _
    $region17: #{vit_forward.1} parent=1 // pred_fallthru
      _
    // Predicated region
    $region18: #{vit_forward.1} parent=1 // pred_check
      _
    $region19: #{vit_forward.1} parent=1 // pred_check_branch
      %24 = sbr.rel (0) target = $region21
    $region20: #{vit_forward.1} parent=1 // pred_region
      _
    $region21: #{vit_forward.1} parent=1 // pred_fallthru
      _
    // Predicated region
    $region22: #{vit_forward.1} parent=1 // pred_check
      _
    $region23: #{vit_forward.1} parent=1 // pred_check_branch
      %26 = sbr.rel (0) target = $region25
    $region24: #{vit_forward.1} parent=1 // pred_region
      _
    $region25: #{vit_forward.1} parent=1 // pred_fallthru
      _
    // Predicated region
    $region26: #{vit_forward.1} parent=1 // pred_check
      _
    $region27: #{vit_forward.1} parent=1 // pred_check_branch
      %28 = sbr.rel (0) target = $region29
    $region28: #{vit_forward.1} parent=1 // pred_region
      _
    $region29: #{vit_forward.1} parent=1 // pred_fallthru
      _
    // Predicated region
    $region30: #{vit_forward.1} parent=1 // pred_check
      _
    $region31: #{vit_forward.1} parent=1 // pred_check_branch
      %30 = sbr.rel (0) target = $region33
    $region32: #{vit_forward.1} parent=1 // pred_region
      _
    $region33: #{vit_forward.1} parent=1 // pred_fallthru
      _
    // Predicated region
    $region34: #{vit_forward.1} parent=1 // pred_check
      _
    $region35: #{vit_forward.1} parent=1 // pred_check_branch
      %32 = sbr.rel (0) target = $region37
    $region36: #{vit_forward.1} parent=1 // pred_region
      _
    $region37: #{vit_forward.1} parent=1 // pred_fallthru
      _
    %v33 = vld [vmem:[%s0] sm:$0xff]
    %v34 = vld [vmem:[%s0 + $0x8] sm:$0xff]
    %v35 = vld [vmem:[%s0 + $0x10] sm:$0xff]
    %v36 = vld [vmem:[%s0 + $0x18] sm:$0x3]
    %v37 = vld [vmem:[%s0 + $0x20] sm:$0x3]
    %v38 = vld [vmem:[%s0 + $0x28] sm:$0x3]
    %v39 = vld [vmem:[%s1] sm:$0xff]
    %v40 = vld [vmem:[%s1 + $0x8] sm:$0xff]
    %v41 = vld [vmem:[%s1 + $0x10] sm:$0xff]
    %v42 = vld [vmem:[%s1 + $0x18] sm:$0xff]
    %v43 = vld [vmem:[%s1 + $0x20] sm:$0xff]
    %v44 = vld [vmem:[%s1 + $0x28] sm:$0xff]
    %v45 = vld [vmem:[%s1 + $0x30] sm:$0xff]
    %v46 = vld [vmem:[%s1 + $0x38] sm:$0xff]
    %v47 = vld [vmem:[%s1 + $0x40] sm:$0xff]
    %v48 = vld [vmem:[%s1 + $0x48] sm:$0xff]
    %v49 = vld [vmem:[%s1 + $0x50] sm:$0xff]
    %v50 = vld [vmem:[%s1 + $0x58] sm:$0xff]
    %v51 = vld [vmem:[%s1 + $0x60] sm:$0xff]
    %v52 = vld [vmem:[%s1 + $0x68] sm:$0xff]
    %v53 = vld [vmem:[%s1 + $0x70] sm:$0xff]
    %v54 = vld [vmem:[%s1 + $0x78] sm:$0xff]
    %v55 = vld [vmem:[%s1 + $0x80] sm:$0xff]
    %v56 = vld [vmem:[%s1 + $0x88] sm:$0xff]
    %v57 = vld [vmem:[%s1 + $0x90] sm:$0xff]
    %v58 = vld [vmem:[%s1 + $0x98] sm:$0xff]
    %v59 = vld [vmem:[%s1 + $0xa0] sm:$0xff]
    %v60 = vld [vmem:[%s1 + $0xa8] sm:$0xff]
    %v61 = vld [vmem:[%s1 + $0xb0] sm:$0xff]
    %v62 = vld [vmem:[%s1 + $0xb8] sm:$0xff]
    %v63 = vld [vmem:[%s1 + $0xc0] sm:$0xff]
    %v64 = vld [vmem:[%s1 + $0xc8] sm:$0xff]
    %v65 = vld [vmem:[%s1 + $0xd0] sm:$0xff]
    %v66 = vld [vmem:[%s1 + $0xd8] sm:$0xff]
    %v67 = vld [vmem:[%s1 + $0xe0] sm:$0xff]
    %v68 = vld [vmem:[%s1 + $0xe8] sm:$0xff]
    %v69 = vld [vmem:[%s1 + $0xf0] sm:$0xff]
    %v70 = vld [vmem:[%s1 + $0xf8] sm:$0xff]
    %v71 = vld [vmem:[%s1 + $0x100] sm:$0x7]
    %vm72 = vcmask 23552
    %v74 = vsel %vm72, %v35, 0
    %v77 = vsel %vm72, %v38, 0
    %vm79 = vcmask 1042432
    %v81 = vsel %vm79, %v71, 0
    %83 = vmatprep.subr.mxu0 0.0
    %84 = vmatpush1.msra.mxu0 %v54
    %85 = vmatprep.subr.mxu0 0.0
    %86 = vmatpush1.msra.mxu0 %v53
    %87 = vmatprep.subr.mxu0 0.0
    %88 = vmatpush1.msra.mxu0 %v52
    %89 = vmatprep.subr.mxu0 0.0
    %90 = vmatpush1.msra.mxu0 %v51
    %91 = vmatprep.subr.mxu0 0.0
    %92 = vmatpush1.msra.mxu0 %v50
    %93 = vmatprep.subr.mxu0 0.0
    %94 = vmatpush1.msra.mxu0 %v49
    %95 = vmatprep.subr.mxu0 0.0
    %96 = vmatpush1.msra.mxu0 %v48
    %97 = vmatprep.subr.mxu0 0.0
    %98 = vmatpush1.msra.mxu0 %v47
    %99 = vmatprep.subr.mxu0 0.0
    %100 = vmatpush1.msra.mxu0 %v46
    %101 = vmatprep.subr.mxu0 0.0
    %102 = vmatpush1.msra.mxu0 %v45
    %103 = vmatprep.subr.mxu0 0.0
    %104 = vmatpush1.msra.mxu0 %v44
    %105 = vmatprep.subr.mxu0 0.0
    %106 = vmatpush1.msra.mxu0 %v43
    %107 = vmatprep.subr.mxu0 0.0
    %108 = vmatpush1.msra.mxu0 %v42
    %109 = vmatprep.subr.mxu0 0.0
    %110 = vmatpush1.msra.mxu0 %v41
    %111 = vmatprep.subr.mxu0 0.0
    %112 = vmatpush1.msra.mxu0 %v40
    %113 = vmatprep.subr.mxu0 0.0
    %114 = vmatpush1.msra.mxu0 %v39
    %115 = vmatprep.subr.mxu0 0.0
    %116 = vmatpush2.msra.mxu0 %v70
    %117 = vmatprep.subr.mxu0 0.0
    %118 = vmatpush2.msra.mxu0 %v69
    %119 = vmatprep.subr.mxu0 0.0
    %120 = vmatpush2.msra.mxu0 %v68
    %121 = vmatprep.subr.mxu0 0.0
    %122 = vmatpush2.msra.mxu0 %v67
    %123 = vmatprep.subr.mxu0 0.0
    %124 = vmatpush2.msra.mxu0 %v66
    %125 = vmatprep.subr.mxu0 0.0
    %126 = vmatpush2.msra.mxu0 %v65
    %127 = vmatprep.subr.mxu0 0.0
    %128 = vmatpush2.msra.mxu0 %v64
    %129 = vmatprep.subr.mxu0 0.0
    %130 = vmatpush2.msra.mxu0 %v63
    %131 = vmatprep.subr.mxu0 0.0
    %132 = vmatpush2.msra.mxu0 %v62
    %133 = vmatprep.subr.mxu0 0.0
    %134 = vmatpush2.msra.mxu0 %v61
    %135 = vmatprep.subr.mxu0 0.0
    %136 = vmatpush2.msra.mxu0 %v60
    %137 = vmatprep.subr.mxu0 0.0
    %138 = vmatpush2.msra.mxu0 %v59
    %139 = vmatprep.subr.mxu0 0.0
    %140 = vmatpush2.msra.mxu0 %v58
    %141 = vmatprep.subr.mxu0 0.0
    %142 = vmatpush2.msra.mxu0 %v57
    %143 = vmatprep.subr.mxu0 0.0
    %144 = vmatpush2.msra.mxu0 %v56
    %145 = vmatprep.subr.mxu0 0.0
    %146 = vmatpush2.msra.mxu0 %v55
    %147 = vmatprep.mubr.f32.mxu0 %v34
    %148 = vmatmul.mubr.f32.gmra.mxu0 %v33
    %v149 = vpop.f32.mrf.mxu0
    %v150 = vadd.f32 0.0, %v149
    %v151 = vpop.f32.mrf.mxu0
    %152 = vmatprep.mubr.f32.mxu0 %v37
    %153 = vmatmul.mubr.f32.gmra.mxu0 %v36
    %v154 = vpop.f32.mrf.mxu0
    %v155 = vadd.f32 0.0, %v154
    %v156 = vpop.f32.mrf.mxu0
    %157 = vdwg.mxu0
    %158 = vmatprep.subr.mxu0 0.0
    %159 = vmatpush1.msra.mxu0 0.0
    %160 = vmatprep.subr.mxu0 0.0
    %161 = vmatpush1.msra.mxu0 0.0
    %162 = vmatprep.subr.mxu0 0.0
    %163 = vmatpush1.msra.mxu0 0.0
    %164 = vmatprep.subr.mxu0 0.0
    %165 = vmatpush1.msra.mxu0 0.0
    %166 = vmatprep.subr.mxu0 0.0
    %167 = vmatpush1.msra.mxu0 0.0
    %168 = vmatprep.subr.mxu0 0.0
    %169 = vmatpush1.msra.mxu0 0.0
    %170 = vmatprep.subr.mxu0 0.0
    %171 = vmatpush1.msra.mxu0 0.0
    %172 = vmatprep.subr.mxu0 0.0
    %173 = vmatpush1.msra.mxu0 0.0
    %174 = vmatprep.subr.mxu0 0.0
    %175 = vmatpush1.msra.mxu0 0.0
    %176 = vmatprep.subr.mxu0 0.0
    %177 = vmatpush1.msra.mxu0 0.0
    %178 = vmatprep.subr.mxu0 0.0
    %179 = vmatpush1.msra.mxu0 0.0
    %180 = vmatprep.subr.mxu0 0.0
    %181 = vmatpush1.msra.mxu0 0.0
    %182 = vmatprep.subr.mxu0 0.0
    %183 = vmatpush1.msra.mxu0 0.0
    %184 = vmatprep.subr.mxu0 0.0
    %185 = vmatpush1.msra.mxu0 0.0
    %186 = vmatprep.subr.mxu0 0.0
    %187 = vmatpush1.msra.mxu0 0.0
    %188 = vmatprep.subr.mxu0 0.0
    %189 = vmatpush1.msra.mxu0 %v81
    %190 = vmatprep.subr.mxu0 0.0
    %191 = vmatpush2.msra.mxu0 0.0
    %192 = vmatprep.subr.mxu0 0.0
    %193 = vmatpush2.msra.mxu0 0.0
    %194 = vmatprep.subr.mxu0 0.0
    %195 = vmatpush2.msra.mxu0 0.0
    %196 = vmatprep.subr.mxu0 0.0
    %197 = vmatpush2.msra.mxu0 0.0
    %198 = vmatprep.subr.mxu0 0.0
    %199 = vmatpush2.msra.mxu0 0.0
    %200 = vmatprep.subr.mxu0 0.0
    %201 = vmatpush2.msra.mxu0 0.0
    %202 = vmatprep.subr.mxu0 0.0
    %203 = vmatpush2.msra.mxu0 0.0
    %204 = vmatprep.subr.mxu0 0.0
    %205 = vmatpush2.msra.mxu0 0.0
    %206 = vmatprep.subr.mxu0 0.0
    %207 = vmatpush2.msra.mxu0 0.0
    %208 = vmatprep.subr.mxu0 0.0
    %209 = vmatpush2.msra.mxu0 0.0
    %210 = vmatprep.subr.mxu0 0.0
    %211 = vmatpush2.msra.mxu0 0.0
    %212 = vmatprep.subr.mxu0 0.0
    %213 = vmatpush2.msra.mxu0 0.0
    %214 = vmatprep.subr.mxu0 0.0
    %215 = vmatpush2.msra.mxu0 0.0
    %216 = vmatprep.subr.mxu0 0.0
    %217 = vmatpush2.msra.mxu0 0.0
    %218 = vmatprep.subr.mxu0 0.0
    %219 = vmatpush2.msra.mxu0 0.0
    %220 = vmatprep.subr.mxu0 0.0
    %221 = vmatpush2.msra.mxu0 0.0
    %222 = vmatprep.mubr.f32.mxu0 0.0
    %223 = vmatmul.mubr.f32.gmra.mxu0 %v74
    %v224 = vpop.f32.mrf.mxu0
    %v225 = vadd.f32 %v150, %v224
    %v226 = vpop.f32.mrf.mxu0
    %227 = vmatprep.mubr.f32.mxu0 0.0
    %228 = vmatmul.mubr.f32.gmra.mxu0 %v77
    %v229 = vpop.f32.mrf.mxu0
    %v230 = vadd.f32 %v155, %v229
    %v231 = vpop.f32.mrf.mxu0
    %232 = vdwg.mxu0
    %v233 = vld [vmem:[%s6] sm:$0x3f]
    %v234 = vld [vmem:[%s7] sm:$0xff]
    %v235 = vld [vmem:[%s7 + $0x8] sm:$0x3]
    %v236 = vld [vmem:[%s2] sm:$0xff]
    %v237 = vld [vmem:[%s2 + $0x8] sm:$0xff]
    %v238 = vld [vmem:[%s3] sm:$0xff]
    %v239 = vld [vmem:[%s3 + $0x8] sm:$0xff]
    %v240 = vld [vmem:[%s3 + $0x10] sm:$0xff]
    %v241 = vld [vmem:[%s3 + $0x18] sm:$0xff]
    %v242 = vld [vmem:[%s4] sm:$0xff]
    %v243 = vld [vmem:[%s4 + $0x8] sm:$0xff]
    %v244 = vld [vmem:[%s5] sm:$0xff]
    %v245 = vld [vmem:[%s5 + $0x8] sm:$0xff]
    %v246 = vld [vmem:[%s5 + $0x10] sm:$0xff]
    %v247 = vld [vmem:[%s5 + $0x18] sm:$0xff]
    %vm248 = vcmask 130048
    %v249 = vsel %vm248, %v225, 0.0
    %250 = vadd.xlane.f32.xlu0 %v249
    %v251 = vpop.xlane.xlu0 %250
    %vm252 = vcmask 123904
    %v253 = vsel %vm252, %v230, 0.0
    %254 = vadd.xlane.f32.xlu0 %v253
    %v255 = vpop.xlane.xlu0 %254
    %v256 = vrcp.pop 16.0
    %v257 = vmul.f32 %v251, %v256
    %v258 = vmul.f32 %v255, %v256
    %v259 = vsub.f32 %v225, %v257
    %v260 = vsub.f32 %v230, %v258
    %v261 = vmul.f32 %v259, %v259
    %v262 = vmul.f32 %v260, %v260
    %v263 = vsel %vm248, %v261, 0.0
    %264 = vadd.xlane.f32.xlu0 %v263
    %v265 = vpop.xlane.xlu0 %264
    %v266 = vsel %vm252, %v262, 0.0
    %267 = vadd.xlane.f32.xlu0 %v266
    %v268 = vpop.xlane.xlu0 %267
    %v269 = vmul.f32 %v265, %v256
    %v270 = vmul.f32 %v268, %v256
    %v271 = vadd.f32 %v269, 1e-06
    %v272 = vadd.f32 %v270, 1e-06
    %v273 = vrsqrt.pop %v271
    %v274 = vrsqrt.pop %v272
    %v275 = vmul.f32 %v259, %v273
    %v276 = vmul.f32 %v260, %v274
    %v277 = vlaneseq
    %v278 = vshrl.u32 %v277, 7
    %v279 = vsub.s32 4, %v278
    %v280 = vrot.slane %v233, %v279
    %v281 = vmul.f32 %v275, %v280
    %v282 = vmul.f32 %v276, %v280
    %v283 = vlaneseq
    %v284 = vshrl.u32 %v283, 7
    %v285 = vsub.s32 5, %v284
    %v286 = vrot.slane %v233, %v285
    %v287 = vadd.f32 %v281, %v286
    %v288 = vadd.f32 %v282, %v286
    %v289 = vlaneseq
    %v290 = vshrl.u32 %v289, 7
    %v291 = vsub.s32 0, %v290
    %v292 = vrot.slane %v233, %v291
    %v294 = vsel %vm248, %v287, 0
    %v297 = vsel %vm248, %v288, 0
    %299 = vmatprep.subr.mxu0 0.0
    %300 = vmatpush1.msra.mxu0 0.0
    %301 = vmatprep.subr.mxu0 0.0
    %302 = vmatpush1.msra.mxu0 0.0
    %303 = vmatprep.subr.mxu0 0.0
    %304 = vmatpush1.msra.mxu0 0.0
    %305 = vmatprep.subr.mxu0 0.0
    %306 = vmatpush1.msra.mxu0 0.0
    %307 = vmatprep.subr.mxu0 0.0
    %308 = vmatpush1.msra.mxu0 0.0
    %309 = vmatprep.subr.mxu0 0.0
    %310 = vmatpush1.msra.mxu0 0.0
    %311 = vmatprep.subr.mxu0 0.0
    %312 = vmatpush1.msra.mxu0 0.0
    %313 = vmatprep.subr.mxu0 0.0
    %314 = vmatpush1.msra.mxu0 0.0
    %315 = vmatprep.subr.mxu0 0.0
    %316 = vmatpush1.msra.mxu0 0.0
    %317 = vmatprep.subr.mxu0 0.0
    %318 = vmatpush1.msra.mxu0 0.0
    %319 = vmatprep.subr.mxu0 0.0
    %320 = vmatpush1.msra.mxu0 0.0
    %321 = vmatprep.subr.mxu0 0.0
    %322 = vmatpush1.msra.mxu0 0.0
    %323 = vmatprep.subr.mxu0 0.0
    %324 = vmatpush1.msra.mxu0 0.0
    %325 = vmatprep.subr.mxu0 0.0
    %326 = vmatpush1.msra.mxu0 0.0
    %327 = vmatprep.subr.mxu0 0.0
    %328 = vmatpush1.msra.mxu0 %v237
    %329 = vmatprep.subr.mxu0 0.0
    %330 = vmatpush1.msra.mxu0 %v236
    %331 = vmatprep.subr.mxu0 0.0
    %332 = vmatpush2.msra.mxu0 0.0
    %333 = vmatprep.subr.mxu0 0.0
    %334 = vmatpush2.msra.mxu0 0.0
    %335 = vmatprep.subr.mxu0 0.0
    %336 = vmatpush2.msra.mxu0 0.0
    %337 = vmatprep.subr.mxu0 0.0
    %338 = vmatpush2.msra.mxu0 0.0
    %339 = vmatprep.subr.mxu0 0.0
    %340 = vmatpush2.msra.mxu0 0.0
    %341 = vmatprep.subr.mxu0 0.0
    %342 = vmatpush2.msra.mxu0 0.0
    %343 = vmatprep.subr.mxu0 0.0
    %344 = vmatpush2.msra.mxu0 0.0
    %345 = vmatprep.subr.mxu0 0.0
    %346 = vmatpush2.msra.mxu0 0.0
    %347 = vmatprep.subr.mxu0 0.0
    %348 = vmatpush2.msra.mxu0 0.0
    %349 = vmatprep.subr.mxu0 0.0
    %350 = vmatpush2.msra.mxu0 0.0
    %351 = vmatprep.subr.mxu0 0.0
    %352 = vmatpush2.msra.mxu0 0.0
    %353 = vmatprep.subr.mxu0 0.0
    %354 = vmatpush2.msra.mxu0 0.0
    %355 = vmatprep.subr.mxu0 0.0
    %356 = vmatpush2.msra.mxu0 0.0
    %357 = vmatprep.subr.mxu0 0.0
    %358 = vmatpush2.msra.mxu0 0.0
    %359 = vmatprep.subr.mxu0 0.0
    %360 = vmatpush2.msra.mxu0 0.0
    %361 = vmatprep.subr.mxu0 0.0
    %362 = vmatpush2.msra.mxu0 0.0
    %363 = vmatprep.mubr.f32.mxu0 0.0
    %364 = vmatmul.mubr.f32.gmra.mxu0 %v294
    %v365 = vpop.f32.mrf.mxu0
    %v366 = vadd.f32 %v292, %v365
    %v367 = vpop.f32.mrf.mxu0
    %368 = vmatprep.mubr.f32.mxu0 0.0
    %369 = vmatmul.mubr.f32.gmra.mxu0 %v297
    %v370 = vpop.f32.mrf.mxu0
    %v371 = vadd.f32 %v292, %v370
    %v372 = vpop.f32.mrf.mxu0
    %373 = vdwg.mxu0
    %375 = vrot.lane.b32.xlu0 %v366, 96
    %v376 = vpop.permute.xlu0 %375
    %v377 = vsel %vm248, %v366, 0
    %v379 = vsel %vm248, %v376, 0
    %381 = vmatprep.subr.mxu0 0.0
    %382 = vmatpush1.xpose.msra.mxu0 0.0
    %383 = vmatprep.subr.mxu0 0.0
    %384 = vmatpush1.xpose.msra.mxu0 0.0
    %385 = vmatprep.subr.mxu0 0.0
    %386 = vmatpush1.xpose.msra.mxu0 0.0
    %387 = vmatprep.subr.mxu0 0.0
    %388 = vmatpush1.xpose.msra.mxu0 0.0
    %389 = vmatprep.subr.mxu0 0.0
    %390 = vmatpush1.xpose.msra.mxu0 0.0
    %391 = vmatprep.subr.mxu0 0.0
    %392 = vmatpush1.xpose.msra.mxu0 0.0
    %393 = vmatprep.subr.mxu0 0.0
    %394 = vmatpush1.xpose.msra.mxu0 0.0
    %395 = vmatprep.subr.mxu0 0.0
    %396 = vmatpush1.xpose.msra.mxu0 0.0
    %397 = vmatprep.subr.mxu0 0.0
    %398 = vmatpush1.xpose.msra.mxu0 0.0
    %399 = vmatprep.subr.mxu0 0.0
    %400 = vmatpush1.xpose.msra.mxu0 0.0
    %401 = vmatprep.subr.mxu0 0.0
    %402 = vmatpush1.xpose.msra.mxu0 0.0
    %403 = vmatprep.subr.mxu0 0.0
    %404 = vmatpush1.xpose.msra.mxu0 0.0
    %405 = vmatprep.subr.mxu0 0.0
    %406 = vmatpush1.xpose.msra.mxu0 0.0
    %407 = vmatprep.subr.mxu0 0.0
    %408 = vmatpush1.xpose.msra.mxu0 0.0
    %409 = vmatprep.subr.mxu0 0.0
    %410 = vmatpush1.xpose.msra.mxu0 0.0
    %411 = vmatprep.subr.mxu0 0.0
    %412 = vmatpush1.xpose.msra.mxu0 %v379
    %413 = vmatprep.subr.mxu0 0.0
    %414 = vmatpush2.xpose.msra.mxu0 0.0
    %415 = vmatprep.subr.mxu0 0.0
    %416 = vmatpush2.xpose.msra.mxu0 0.0
    %417 = vmatprep.subr.mxu0 0.0
    %418 = vmatpush2.xpose.msra.mxu0 0.0
    %419 = vmatprep.subr.mxu0 0.0
    %420 = vmatpush2.xpose.msra.mxu0 0.0
    %421 = vmatprep.subr.mxu0 0.0
    %422 = vmatpush2.xpose.msra.mxu0 0.0
    %423 = vmatprep.subr.mxu0 0.0
    %424 = vmatpush2.xpose.msra.mxu0 0.0
    %425 = vmatprep.subr.mxu0 0.0
    %426 = vmatpush2.xpose.msra.mxu0 0.0
    %427 = vmatprep.subr.mxu0 0.0
    %428 = vmatpush2.xpose.msra.mxu0 0.0
    %429 = vmatprep.subr.mxu0 0.0
    %430 = vmatpush2.xpose.msra.mxu0 0.0
    %431 = vmatprep.subr.mxu0 0.0
    %432 = vmatpush2.xpose.msra.mxu0 0.0
    %433 = vmatprep.subr.mxu0 0.0
    %434 = vmatpush2.xpose.msra.mxu0 0.0
    %435 = vmatprep.subr.mxu0 0.0
    %436 = vmatpush2.xpose.msra.mxu0 0.0
    %437 = vmatprep.subr.mxu0 0.0
    %438 = vmatpush2.xpose.msra.mxu0 0.0
    %439 = vmatprep.subr.mxu0 0.0
    %440 = vmatpush2.xpose.msra.mxu0 0.0
    %441 = vmatprep.subr.mxu0 0.0
    %442 = vmatpush2.xpose.msra.mxu0 0.0
    %443 = vmatprep.subr.mxu0 0.0
    %444 = vmatpush2.xpose.msra.mxu0 0.0
    %445 = vmatprep.mubr.f32.mxu0 0.0
    %446 = vmatmul.mubr.f32.gmra.mxu0 %v377
    %v447 = vpop.f32.mrf.mxu0
    %v448 = vadd.f32 0.0, %v447
    %v449 = vpop.f32.mrf.mxu0
    %450 = vdwg.mxu0
    %v451 = vmul.f32 %v448, 0.25
    %vm452 = vcmask 36864
    %v453 = vsel %vm452, %v451, -inf
    %454 = vmax.xlane.f32.xlu0 %v453
    %v455 = vpop.xlane.xlu0 %454
    %v456 = vsub.f32 %v451, %v455
    %v457 = vmul.f32 %v456, 1.442695
    %v458 = vpow.pop %v457
    %v459 = vsel %vm452, %v458, 0.0
    %460 = vadd.xlane.f32.xlu0 %v459
    %v461 = vpop.xlane.xlu0 %460
    %v462 = vrcp.pop %v461
    %v463 = vmul.f32 %v458, %v462
    %464 = vxpose.xlu0.b32.start [1/16] %v463, 128
    %465 = vxpose.xlu0.b32.cont [2/16] 0.0, 128
    %466 = vxpose.xlu0.b32.cont [3/16] 0.0, 128
    %467 = vxpose.xlu0.b32.cont [4/16] 0.0, 128
    %468 = vxpose.xlu0.b32.cont [5/16] 0.0, 128
    %469 = vxpose.xlu0.b32.cont [6/16] 0.0, 128
    %470 = vxpose.xlu0.b32.cont [7/16] 0.0, 128
    %471 = vxpose.xlu0.b32.cont [8/16] 0.0, 128
    %472 = vxpose.xlu0.b32.cont [9/16] 0.0, 128
    %473 = vxpose.xlu0.b32.cont [10/16] 0.0, 128
    %474 = vxpose.xlu0.b32.cont [11/16] 0.0, 128
    %475 = vxpose.xlu0.b32.cont [12/16] 0.0, 128
    %476 = vxpose.xlu0.b32.cont [13/16] 0.0, 128
    %477 = vxpose.xlu0.b32.cont [14/16] 0.0, 128
    %478 = vxpose.xlu0.b32.cont [15/16] 0.0, 128
    %479 = vxpose.xlu0.b32.end [16/16] 0.0, 128
    %v480 = vpop.trf.xlu0
    %v481 = vpop.trf.xlu0
    %v482 = vpop.trf.xlu0
    %v483 = vpop.trf.xlu0
    %v484 = vpop.trf.xlu0
    %v485 = vpop.trf.xlu0
    %v486 = vpop.trf.xlu0
    %v487 = vpop.trf.xlu0
    %v488 = vpop.trf.xlu0
    %v489 = vpop.trf.xlu0
    %v490 = vpop.trf.xlu0
    %v491 = vpop.trf.xlu0
    %v492 = vpop.trf.xlu0
    %v493 = vpop.trf.xlu0
    %v494 = vpop.trf.xlu0
    %v495 = vpop.trf.xlu0
    %496 = vrot.lane.b32.xlu0 %v366, 64
    %v497 = vpop.permute.xlu0 %496
    %vm498 = vcmask 39936
    %v500 = vsel %vm498, %v480, 0
    %vm502 = vcmask 1044480
    %v503 = vsel %vm502, %v497, 0
    %505 = vmatprep.subr.mxu0 0.0
    %506 = vmatpush1.msra.mxu0 0.0
    %507 = vmatprep.subr.mxu0 0.0
    %508 = vmatpush1.msra.mxu0 0.0
    %509 = vmatprep.subr.mxu0 0.0
    %510 = vmatpush1.msra.mxu0 0.0
    %511 = vmatprep.subr.mxu0 0.0
    %512 = vmatpush1.msra.mxu0 0.0
    %513 = vmatprep.subr.mxu0 0.0
    %514 = vmatpush1.msra.mxu0 0.0
    %515 = vmatprep.subr.mxu0 0.0
    %516 = vmatpush1.msra.mxu0 0.0
    %517 = vmatprep.subr.mxu0 0.0
    %518 = vmatpush1.msra.mxu0 0.0
    %519 = vmatprep.subr.mxu0 0.0
    %520 = vmatpush1.msra.mxu0 0.0
    %521 = vmatprep.subr.mxu0 0.0
    %522 = vmatpush1.msra.mxu0 0.0
    %523 = vmatprep.subr.mxu0 0.0
    %524 = vmatpush1.msra.mxu0 0.0
    %525 = vmatprep.subr.mxu0 0.0
    %526 = vmatpush1.msra.mxu0 0.0
    %527 = vmatprep.subr.mxu0 0.0
    %528 = vmatpush1.msra.mxu0 0.0
    %529 = vmatprep.subr.mxu0 0.0
    %530 = vmatpush1.msra.mxu0 0.0
    %531 = vmatprep.subr.mxu0 0.0
    %532 = vmatpush1.msra.mxu0 0.0
    %533 = vmatprep.subr.mxu0 0.0
    %534 = vmatpush1.msra.mxu0 0.0
    %535 = vmatprep.subr.mxu0 0.0
    %536 = vmatpush1.msra.mxu0 %v503
    %537 = vmatprep.subr.mxu0 0.0
    %538 = vmatpush2.msra.mxu0 0.0
    %539 = vmatprep.subr.mxu0 0.0
    %540 = vmatpush2.msra.mxu0 0.0
    %541 = vmatprep.subr.mxu0 0.0
    %542 = vmatpush2.msra.mxu0 0.0
    %543 = vmatprep.subr.mxu0 0.0
    %544 = vmatpush2.msra.mxu0 0.0
    %545 = vmatprep.subr.mxu0 0.0
    %546 = vmatpush2.msra.mxu0 0.0
    %547 = vmatprep.subr.mxu0 0.0
    %548 = vmatpush2.msra.mxu0 0.0
    %549 = vmatprep.subr.mxu0 0.0
    %550 = vmatpush2.msra.mxu0 0.0
    %551 = vmatprep.subr.mxu0 0.0
    %552 = vmatpush2.msra.mxu0 0.0
    %553 = vmatprep.subr.mxu0 0.0
    %554 = vmatpush2.msra.mxu0 0.0
    %555 = vmatprep.subr.mxu0 0.0
    %556 = vmatpush2.msra.mxu0 0.0
    %557 = vmatprep.subr.mxu0 0.0
    %558 = vmatpush2.msra.mxu0 0.0
    %559 = vmatprep.subr.mxu0 0.0
    %560 = vmatpush2.msra.mxu0 0.0
    %561 = vmatprep.subr.mxu0 0.0
    %562 = vmatpush2.msra.mxu0 0.0
    %563 = vmatprep.subr.mxu0 0.0
    %564 = vmatpush2.msra.mxu0 0.0
    %565 = vmatprep.subr.mxu0 0.0
    %566 = vmatpush2.msra.mxu0 0.0
    %567 = vmatprep.subr.mxu0 0.0
    %568 = vmatpush2.msra.mxu0 0.0
    %569 = vmatprep.mubr.f32.mxu0 0.0
    %570 = vmatmul.mubr.f32.gmra.mxu0 %v500
    %v571 = vpop.f32.mrf.mxu0
    %v572 = vadd.f32 0.0, %v571
    %v573 = vpop.f32.mrf.mxu0
    %574 = vdwg.mxu0
    %575 = vrot.lane.b32.xlu0 %v366, 112
    %v576 = vpop.permute.xlu0 %575
    %577 = vrot.lane.b32.xlu0 %v366, 80
    %v578 = vpop.permute.xlu0 %577
    %v579 = vsel %vm248, %v576, 0
    %v581 = vsel %vm248, %v578, 0
    %583 = vmatprep.subr.mxu0 0.0
    %584 = vmatpush1.xpose.msra.mxu0 0.0
    %585 = vmatprep.subr.mxu0 0.0
    %586 = vmatpush1.xpose.msra.mxu0 0.0
    %587 = vmatprep.subr.mxu0 0.0
    %588 = vmatpush1.xpose.msra.mxu0 0.0
    %589 = vmatprep.subr.mxu0 0.0
    %590 = vmatpush1.xpose.msra.mxu0 0.0
    %591 = vmatprep.subr.mxu0 0.0
    %592 = vmatpush1.xpose.msra.mxu0 0.0
    %593 = vmatprep.subr.mxu0 0.0
    %594 = vmatpush1.xpose.msra.mxu0 0.0
    %595 = vmatprep.subr.mxu0 0.0
    %596 = vmatpush1.xpose.msra.mxu0 0.0
    %597 = vmatprep.subr.mxu0 0.0
    %598 = vmatpush1.xpose.msra.mxu0 0.0
    %599 = vmatprep.subr.mxu0 0.0
    %600 = vmatpush1.xpose.msra.mxu0 0.0
    %601 = vmatprep.subr.mxu0 0.0
    %602 = vmatpush1.xpose.msra.mxu0 0.0
    %603 = vmatprep.subr.mxu0 0.0
    %604 = vmatpush1.xpose.msra.mxu0 0.0
    %605 = vmatprep.subr.mxu0 0.0
    %606 = vmatpush1.xpose.msra.mxu0 0.0
    %607 = vmatprep.subr.mxu0 0.0
    %608 = vmatpush1.xpose.msra.mxu0 0.0
    %609 = vmatprep.subr.mxu0 0.0
    %610 = vmatpush1.xpose.msra.mxu0 0.0
    %611 = vmatprep.subr.mxu0 0.0
    %612 = vmatpush1.xpose.msra.mxu0 0.0
    %613 = vmatprep.subr.mxu0 0.0
    %614 = vmatpush1.xpose.msra.mxu0 %v581
    %615 = vmatprep.subr.mxu0 0.0
    %616 = vmatpush2.xpose.msra.mxu0 0.0
    %617 = vmatprep.subr.mxu0 0.0
    %618 = vmatpush2.xpose.msra.mxu0 0.0
    %619 = vmatprep.subr.mxu0 0.0
    %620 = vmatpush2.xpose.msra.mxu0 0.0
    %621 = vmatprep.subr.mxu0 0.0
    %622 = vmatpush2.xpose.msra.mxu0 0.0
    %623 = vmatprep.subr.mxu0 0.0
    %624 = vmatpush2.xpose.msra.mxu0 0.0
    %625 = vmatprep.subr.mxu0 0.0
    %626 = vmatpush2.xpose.msra.mxu0 0.0
    %627 = vmatprep.subr.mxu0 0.0
    %628 = vmatpush2.xpose.msra.mxu0 0.0
    %629 = vmatprep.subr.mxu0 0.0
    %630 = vmatpush2.xpose.msra.mxu0 0.0
    %631 = vmatprep.subr.mxu0 0.0
    %632 = vmatpush2.xpose.msra.mxu0 0.0
    %633 = vmatprep.subr.mxu0 0.0
    %634 = vmatpush2.xpose.msra.mxu0 0.0
    %635 = vmatprep.subr.mxu0 0.0
    %636 = vmatpush2.xpose.msra.mxu0 0.0
    %637 = vmatprep.subr.mxu0 0.0
    %638 = vmatpush2.xpose.msra.mxu0 0.0
    %639 = vmatprep.subr.mxu0 0.0
    %640 = vmatpush2.xpose.msra.mxu0 0.0
    %641 = vmatprep.subr.mxu0 0.0
    %642 = vmatpush2.xpose.msra.mxu0 0.0
    %643 = vmatprep.subr.mxu0 0.0
    %644 = vmatpush2.xpose.msra.mxu0 0.0
    %645 = vmatprep.subr.mxu0 0.0
    %646 = vmatpush2.xpose.msra.mxu0 0.0
    %647 = vmatprep.mubr.f32.mxu0 0.0
    %648 = vmatmul.mubr.f32.gmra.mxu0 %v579
    %v649 = vpop.f32.mrf.mxu0
    %v650 = vadd.f32 0.0, %v649
    %v651 = vpop.f32.mrf.mxu0
    %652 = vdwg.mxu0
    %v653 = vmul.f32 %v650, 0.25
    %v654 = vsel %vm452, %v653, -inf
    %655 = vmax.xlane.f32.xlu0 %v654
    %v656 = vpop.xlane.xlu0 %655
    %v657 = vsub.f32 %v653, %v656
    %v658 = vmul.f32 %v657, 1.442695
    %v659 = vpow.pop %v658
    %v660 = vsel %vm452, %v659, 0.0
    %661 = vadd.xlane.f32.xlu0 %v660
    %v662 = vpop.xlane.xlu0 %661
    %v663 = vrcp.pop %v662
    %v664 = vmul.f32 %v659, %v663
    %665 = vxpose.xlu0.b32.start [1/16] %v664, 128
    %666 = vxpose.xlu0.b32.cont [2/16] 0.0, 128
    %667 = vxpose.xlu0.b32.cont [3/16] 0.0, 128
    %668 = vxpose.xlu0.b32.cont [4/16] 0.0, 128
    %669 = vxpose.xlu0.b32.cont [5/16] 0.0, 128
    %670 = vxpose.xlu0.b32.cont [6/16] 0.0, 128
    %671 = vxpose.xlu0.b32.cont [7/16] 0.0, 128
    %672 = vxpose.xlu0.b32.cont [8/16] 0.0, 128
    %673 = vxpose.xlu0.b32.cont [9/16] 0.0, 128
    %674 = vxpose.xlu0.b32.cont [10/16] 0.0, 128
    %675 = vxpose.xlu0.b32.cont [11/16] 0.0, 128
    %676 = vxpose.xlu0.b32.cont [12/16] 0.0, 128
    %677 = vxpose.xlu0.b32.cont [13/16] 0.0, 128
    %678 = vxpose.xlu0.b32.cont [14/16] 0.0, 128
    %679 = vxpose.xlu0.b32.cont [15/16] 0.0, 128
    %680 = vxpose.xlu0.b32.end [16/16] 0.0, 128
    %v681 = vpop.trf.xlu0
    %v682 = vpop.trf.xlu0
    %v683 = vpop.trf.xlu0
    %v684 = vpop.trf.xlu0
    %v685 = vpop.trf.xlu0
    %v686 = vpop.trf.xlu0
    %v687 = vpop.trf.xlu0
    %v688 = vpop.trf.xlu0
    %v689 = vpop.trf.xlu0
    %v690 = vpop.trf.xlu0
    %v691 = vpop.trf.xlu0
    %v692 = vpop.trf.xlu0
    %v693 = vpop.trf.xlu0
    %v694 = vpop.trf.xlu0
    %v695 = vpop.trf.xlu0
    %v696 = vpop.trf.xlu0
    %697 = vrot.lane.b32.xlu0 %v366, 48
    %v698 = vpop.permute.xlu0 %697
    %v700 = vsel %vm498, %v681, 0
    %v702 = vsel %vm502, %v698, 0
    %704 = vmatprep.subr.mxu0 0.0
    %705 = vmatpush1.msra.mxu0 0.0
    %706 = vmatprep.subr.mxu0 0.0
    %707 = vmatpush1.msra.mxu0 0.0
    %708 = vmatprep.subr.mxu0 0.0
    %709 = vmatpush1.msra.mxu0 0.0
    %710 = vmatprep.subr.mxu0 0.0
    %711 = vmatpush1.msra.mxu0 0.0
    %712 = vmatprep.subr.mxu0 0.0
    %713 = vmatpush1.msra.mxu0 0.0
    %714 = vmatprep.subr.mxu0 0.0
    %715 = vmatpush1.msra.mxu0 0.0
    %716 = vmatprep.subr.mxu0 0.0
    %717 = vmatpush1.msra.mxu0 0.0
    %718 = vmatprep.subr.mxu0 0.0
    %719 = vmatpush1.msra.mxu0 0.0
    %720 = vmatprep.subr.mxu0 0.0
    %721 = vmatpush1.msra.mxu0 0.0
    %722 = vmatprep.subr.mxu0 0.0
    %723 = vmatpush1.msra.mxu0 0.0
    %724 = vmatprep.subr.mxu0 0.0
    %725 = vmatpush1.msra.mxu0 0.0
    %726 = vmatprep.subr.mxu0 0.0
    %727 = vmatpush1.msra.mxu0 0.0
    %728 = vmatprep.subr.mxu0 0.0
    %729 = vmatpush1.msra.mxu0 0.0
    %730 = vmatprep.subr.mxu0 0.0
    %731 = vmatpush1.msra.mxu0 0.0
    %732 = vmatprep.subr.mxu0 0.0
    %733 = vmatpush1.msra.mxu0 0.0
    %734 = vmatprep.subr.mxu0 0.0
    %735 = vmatpush1.msra.mxu0 %v702
    %736 = vmatprep.subr.mxu0 0.0
    %737 = vmatpush2.msra.mxu0 0.0
    %738 = vmatprep.subr.mxu0 0.0
    %739 = vmatpush2.msra.mxu0 0.0
    %740 = vmatprep.subr.mxu0 0.0
    %741 = vmatpush2.msra.mxu0 0.0
    %742 = vmatprep.subr.mxu0 0.0
    %743 = vmatpush2.msra.mxu0 0.0
    %744 = vmatprep.subr.mxu0 0.0
    %745 = vmatpush2.msra.mxu0 0.0
    %746 = vmatprep.subr.mxu0 0.0
    %747 = vmatpush2.msra.mxu0 0.0
    %748 = vmatprep.subr.mxu0 0.0
    %749 = vmatpush2.msra.mxu0 0.0
    %750 = vmatprep.subr.mxu0 0.0
    %751 = vmatpush2.msra.mxu0 0.0
    %752 = vmatprep.subr.mxu0 0.0
    %753 = vmatpush2.msra.mxu0 0.0
    %754 = vmatprep.subr.mxu0 0.0
    %755 = vmatpush2.msra.mxu0 0.0
    %756 = vmatprep.subr.mxu0 0.0
    %757 = vmatpush2.msra.mxu0 0.0
    %758 = vmatprep.subr.mxu0 0.0
    %759 = vmatpush2.msra.mxu0 0.0
    %760 = vmatprep.subr.mxu0 0.0
    %761 = vmatpush2.msra.mxu0 0.0
    %762 = vmatprep.subr.mxu0 0.0
    %763 = vmatpush2.msra.mxu0 0.0
    %764 = vmatprep.subr.mxu0 0.0
    %765 = vmatpush2.msra.mxu0 0.0
    %766 = vmatprep.subr.mxu0 0.0
    %767 = vmatpush2.msra.mxu0 0.0
    %768 = vmatprep.mubr.f32.mxu0 0.0
    %769 = vmatmul.mubr.f32.gmra.mxu0 %v700
    %v770 = vpop.f32.mrf.mxu0
    %v771 = vadd.f32 0.0, %v770
    %v772 = vpop.f32.mrf.mxu0
    %773 = vdwg.mxu0
    %775 = vrot.lane.b32.xlu0 %v771, 16
    %v776 = vpop.permute.xlu0 %775
    %v778 = vsel %vm248, %v572, %v776
    %v780 = vrot.slane %v366, 5
    %v781 = vrot.slane %v371, 5
    %v782 = vsel %vm79, %v780, %v781
    %783 = vrot.lane.b32.xlu0 %v782, 96
    %v784 = vpop.permute.xlu0 %783
    %v785 = vsel %vm248, %v782, 0
    %v787 = vsel %vm248, %v784, 0
    %789 = vmatprep.subr.mxu0 0.0
    %790 = vmatpush1.xpose.msra.mxu0 0.0
    %791 = vmatprep.subr.mxu0 0.0
    %792 = vmatpush1.xpose.msra.mxu0 0.0
    %793 = vmatprep.subr.mxu0 0.0
    %794 = vmatpush1.xpose.msra.mxu0 0.0
    %795 = vmatprep.subr.mxu0 0.0
    %796 = vmatpush1.xpose.msra.mxu0 0.0
    %797 = vmatprep.subr.mxu0 0.0
    %798 = vmatpush1.xpose.msra.mxu0 0.0
    %799 = vmatprep.subr.mxu0 0.0
    %800 = vmatpush1.xpose.msra.mxu0 0.0
    %801 = vmatprep.subr.mxu0 0.0
    %802 = vmatpush1.xpose.msra.mxu0 0.0
    %803 = vmatprep.subr.mxu0 0.0
    %804 = vmatpush1.xpose.msra.mxu0 0.0
    %805 = vmatprep.subr.mxu0 0.0
    %806 = vmatpush1.xpose.msra.mxu0 0.0
    %807 = vmatprep.subr.mxu0 0.0
    %808 = vmatpush1.xpose.msra.mxu0 0.0
    %809 = vmatprep.subr.mxu0 0.0
    %810 = vmatpush1.xpose.msra.mxu0 0.0
    %811 = vmatprep.subr.mxu0 0.0
    %812 = vmatpush1.xpose.msra.mxu0 0.0
    %813 = vmatprep.subr.mxu0 0.0
    %814 = vmatpush1.xpose.msra.mxu0 0.0
    %815 = vmatprep.subr.mxu0 0.0
    %816 = vmatpush1.xpose.msra.mxu0 0.0
    %817 = vmatprep.subr.mxu0 0.0
    %818 = vmatpush1.xpose.msra.mxu0 0.0
    %819 = vmatprep.subr.mxu0 0.0
    %820 = vmatpush1.xpose.msra.mxu0 %v787
    %821 = vmatprep.subr.mxu0 0.0
    %822 = vmatpush2.xpose.msra.mxu0 0.0
    %823 = vmatprep.subr.mxu0 0.0
    %824 = vmatpush2.xpose.msra.mxu0 0.0
    %825 = vmatprep.subr.mxu0 0.0
    %826 = vmatpush2.xpose.msra.mxu0 0.0
    %827 = vmatprep.subr.mxu0 0.0
    %828 = vmatpush2.xpose.msra.mxu0 0.0
    %829 = vmatprep.subr.mxu0 0.0
    %830 = vmatpush2.xpose.msra.mxu0 0.0
    %831 = vmatprep.subr.mxu0 0.0
    %832 = vmatpush2.xpose.msra.mxu0 0.0
    %833 = vmatprep.subr.mxu0 0.0
    %834 = vmatpush2.xpose.msra.mxu0 0.0
    %835 = vmatprep.subr.mxu0 0.0
    %836 = vmatpush2.xpose.msra.mxu0 0.0
    %837 = vmatprep.subr.mxu0 0.0
    %838 = vmatpush2.xpose.msra.mxu0 0.0
    %839 = vmatprep.subr.mxu0 0.0
    %840 = vmatpush2.xpose.msra.mxu0 0.0
    %841 = vmatprep.subr.mxu0 0.0
    %842 = vmatpush2.xpose.msra.mxu0 0.0
    %843 = vmatprep.subr.mxu0 0.0
    %844 = vmatpush2.xpose.msra.mxu0 0.0
    %845 = vmatprep.subr.mxu0 0.0
    %846 = vmatpush2.xpose.msra.mxu0 0.0
    %847 = vmatprep.subr.mxu0 0.0
    %848 = vmatpush2.xpose.msra.mxu0 0.0
    %849 = vmatprep.subr.mxu0 0.0
    %850 = vmatpush2.xpose.msra.mxu0 0.0
    %851 = vmatprep.subr.mxu0 0.0
    %852 = vmatpush2.xpose.msra.mxu0 0.0
    %853 = vmatprep.mubr.f32.mxu0 0.0
    %854 = vmatmul.mubr.f32.gmra.mxu0 %v785
    %v855 = vpop.f32.mrf.mxu0
    %v856 = vadd.f32 0.0, %v855
    %v857 = vpop.f32.mrf.mxu0
    %858 = vdwg.mxu0
    %v859 = vmul.f32 %v856, 0.25
    %v860 = vsel %vm452, %v859, -inf
    %861 = vmax.xlane.f32.xlu0 %v860
    %v862 = vpop.xlane.xlu0 %861
    %v863 = vsub.f32 %v859, %v862
    %v864 = vmul.f32 %v863, 1.442695
    %v865 = vpow.pop %v864
    %v866 = vsel %vm452, %v865, 0.0
    %867 = vadd.xlane.f32.xlu0 %v866
    %v868 = vpop.xlane.xlu0 %867
    %v869 = vrcp.pop %v868
    %v870 = vmul.f32 %v865, %v869
    %871 = vxpose.xlu0.b32.start [1/16] %v870, 128
    %872 = vxpose.xlu0.b32.cont [2/16] 0.0, 128
    %873 = vxpose.xlu0.b32.cont [3/16] 0.0, 128
    %874 = vxpose.xlu0.b32.cont [4/16] 0.0, 128
    %875 = vxpose.xlu0.b32.cont [5/16] 0.0, 128
    %876 = vxpose.xlu0.b32.cont [6/16] 0.0, 128
    %877 = vxpose.xlu0.b32.cont [7/16] 0.0, 128
    %878 = vxpose.xlu0.b32.cont [8/16] 0.0, 128
    %879 = vxpose.xlu0.b32.cont [9/16] 0.0, 128
    %880 = vxpose.xlu0.b32.cont [10/16] 0.0, 128
    %881 = vxpose.xlu0.b32.cont [11/16] 0.0, 128
    %882 = vxpose.xlu0.b32.cont [12/16] 0.0, 128
    %883 = vxpose.xlu0.b32.cont [13/16] 0.0, 128
    %884 = vxpose.xlu0.b32.cont [14/16] 0.0, 128
    %885 = vxpose.xlu0.b32.cont [15/16] 0.0, 128
    %886 = vxpose.xlu0.b32.end [16/16] 0.0, 128
    %v887 = vpop.trf.xlu0
    %v888 = vpop.trf.xlu0
    %v889 = vpop.trf.xlu0
    %v890 = vpop.trf.xlu0
    %v891 = vpop.trf.xlu0
    %v892 = vpop.trf.xlu0
    %v893 = vpop.trf.xlu0
    %v894 = vpop.trf.xlu0
    %v895 = vpop.trf.xlu0
    %v896 = vpop.trf.xlu0
    %v897 = vpop.trf.xlu0
    %v898 = vpop.trf.xlu0
    %v899 = vpop.trf.xlu0
    %v900 = vpop.trf.xlu0
    %v901 = vpop.trf.xlu0
    %v902 = vpop.trf.xlu0
    %903 = vrot.lane.b32.xlu0 %v782, 64
    %v904 = vpop.permute.xlu0 %903
    %v906 = vsel %vm498, %v887, 0
    %v908 = vsel %vm502, %v904, 0
    %910 = vmatprep.subr.mxu0 0.0
    %911 = vmatpush1.msra.mxu0 0.0
    %912 = vmatprep.subr.mxu0 0.0
    %913 = vmatpush1.msra.mxu0 0.0
    %914 = vmatprep.subr.mxu0 0.0
    %915 = vmatpush1.msra.mxu0 0.0
    %916 = vmatprep.subr.mxu0 0.0
    %917 = vmatpush1.msra.mxu0 0.0
    %918 = vmatprep.subr.mxu0 0.0
    %919 = vmatpush1.msra.mxu0 0.0
    %920 = vmatprep.subr.mxu0 0.0
    %921 = vmatpush1.msra.mxu0 0.0
    %922 = vmatprep.subr.mxu0 0.0
    %923 = vmatpush1.msra.mxu0 0.0
    %924 = vmatprep.subr.mxu0 0.0
    %925 = vmatpush1.msra.mxu0 0.0
    %926 = vmatprep.subr.mxu0 0.0
    %927 = vmatpush1.msra.mxu0 0.0
    %928 = vmatprep.subr.mxu0 0.0
    %929 = vmatpush1.msra.mxu0 0.0
    %930 = vmatprep.subr.mxu0 0.0
    %931 = vmatpush1.msra.mxu0 0.0
    %932 = vmatprep.subr.mxu0 0.0
    %933 = vmatpush1.msra.mxu0 0.0
    %934 = vmatprep.subr.mxu0 0.0
    %935 = vmatpush1.msra.mxu0 0.0
    %936 = vmatprep.subr.mxu0 0.0
    %937 = vmatpush1.msra.mxu0 0.0
    %938 = vmatprep.subr.mxu0 0.0
    %939 = vmatpush1.msra.mxu0 0.0
    %940 = vmatprep.subr.mxu0 0.0
    %941 = vmatpush1.msra.mxu0 %v908
    %942 = vmatprep.subr.mxu0 0.0
    %943 = vmatpush2.msra.mxu0 0.0
    %944 = vmatprep.subr.mxu0 0.0
    %945 = vmatpush2.msra.mxu0 0.0
    %946 = vmatprep.subr.mxu0 0.0
    %947 = vmatpush2.msra.mxu0 0.0
    %948 = vmatprep.subr.mxu0 0.0
    %949 = vmatpush2.msra.mxu0 0.0
    %950 = vmatprep.subr.mxu0 0.0
    %951 = vmatpush2.msra.mxu0 0.0
    %952 = vmatprep.subr.mxu0 0.0
    %953 = vmatpush2.msra.mxu0 0.0
    %954 = vmatprep.subr.mxu0 0.0
    %955 = vmatpush2.msra.mxu0 0.0
    %956 = vmatprep.subr.mxu0 0.0
    %957 = vmatpush2.msra.mxu0 0.0
    %958 = vmatprep.subr.mxu0 0.0
    %959 = vmatpush2.msra.mxu0 0.0
    %960 = vmatprep.subr.mxu0 0.0
    %961 = vmatpush2.msra.mxu0 0.0
    %962 = vmatprep.subr.mxu0 0.0
    %963 = vmatpush2.msra.mxu0 0.0
    %964 = vmatprep.subr.mxu0 0.0
    %965 = vmatpush2.msra.mxu0 0.0
    %966 = vmatprep.subr.mxu0 0.0
    %967 = vmatpush2.msra.mxu0 0.0
    %968 = vmatprep.subr.mxu0 0.0
    %969 = vmatpush2.msra.mxu0 0.0
    %970 = vmatprep.subr.mxu0 0.0
    %971 = vmatpush2.msra.mxu0 0.0
    %972 = vmatprep.subr.mxu0 0.0
    %973 = vmatpush2.msra.mxu0 0.0
    %974 = vmatprep.mubr.f32.mxu0 0.0
    %975 = vmatmul.mubr.f32.gmra.mxu0 %v906
    %v976 = vpop.f32.mrf.mxu0
    %v977 = vadd.f32 0.0, %v976
    %v978 = vpop.f32.mrf.mxu0
    %979 = vdwg.mxu0
    %980 = vrot.lane.b32.xlu0 %v782, 112
    %v981 = vpop.permute.xlu0 %980
    %982 = vrot.lane.b32.xlu0 %v782, 80
    %v983 = vpop.permute.xlu0 %982
    %v984 = vsel %vm248, %v981, 0
    %v986 = vsel %vm248, %v983, 0
    %988 = vmatprep.subr.mxu0 0.0
    %989 = vmatpush1.xpose.msra.mxu0 0.0
    %990 = vmatprep.subr.mxu0 0.0
    %991 = vmatpush1.xpose.msra.mxu0 0.0
    %992 = vmatprep.subr.mxu0 0.0
    %993 = vmatpush1.xpose.msra.mxu0 0.0
    %994 = vmatprep.subr.mxu0 0.0
    %995 = vmatpush1.xpose.msra.mxu0 0.0
    %996 = vmatprep.subr.mxu0 0.0
    %997 = vmatpush1.xpose.msra.mxu0 0.0
    %998 = vmatprep.subr.mxu0 0.0
    %999 = vmatpush1.xpose.msra.mxu0 0.0
    %1000 = vmatprep.subr.mxu0 0.0
    %1001 = vmatpush1.xpose.msra.mxu0 0.0
    %1002 = vmatprep.subr.mxu0 0.0
    %1003 = vmatpush1.xpose.msra.mxu0 0.0
    %1004 = vmatprep.subr.mxu0 0.0
    %1005 = vmatpush1.xpose.msra.mxu0 0.0
    %1006 = vmatprep.subr.mxu0 0.0
    %1007 = vmatpush1.xpose.msra.mxu0 0.0
    %1008 = vmatprep.subr.mxu0 0.0
    %1009 = vmatpush1.xpose.msra.mxu0 0.0
    %1010 = vmatprep.subr.mxu0 0.0
    %1011 = vmatpush1.xpose.msra.mxu0 0.0
    %1012 = vmatprep.subr.mxu0 0.0
    %1013 = vmatpush1.xpose.msra.mxu0 0.0
    %1014 = vmatprep.subr.mxu0 0.0
    %1015 = vmatpush1.xpose.msra.mxu0 0.0
    %1016 = vmatprep.subr.mxu0 0.0
    %1017 = vmatpush1.xpose.msra.mxu0 0.0
    %1018 = vmatprep.subr.mxu0 0.0
    %1019 = vmatpush1.xpose.msra.mxu0 %v986
    %1020 = vmatprep.subr.mxu0 0.0
    %1021 = vmatpush2.xpose.msra.mxu0 0.0
    %1022 = vmatprep.subr.mxu0 0.0
    %1023 = vmatpush2.xpose.msra.mxu0 0.0
    %1024 = vmatprep.subr.mxu0 0.0
    %1025 = vmatpush2.xpose.msra.mxu0 0.0
    %1026 = vmatprep.subr.mxu0 0.0
    %1027 = vmatpush2.xpose.msra.mxu0 0.0
    %1028 = vmatprep.subr.mxu0 0.0
    %1029 = vmatpush2.xpose.msra.mxu0 0.0
    %1030 = vmatprep.subr.mxu0 0.0
    %1031 = vmatpush2.xpose.msra.mxu0 0.0
    %1032 = vmatprep.subr.mxu0 0.0
    %1033 = vmatpush2.xpose.msra.mxu0 0.0
    %1034 = vmatprep.subr.mxu0 0.0
    %1035 = vmatpush2.xpose.msra.mxu0 0.0
    %1036 = vmatprep.subr.mxu0 0.0
    %1037 = vmatpush2.xpose.msra.mxu0 0.0
    %1038 = vmatprep.subr.mxu0 0.0
    %1039 = vmatpush2.xpose.msra.mxu0 0.0
    %1040 = vmatprep.subr.mxu0 0.0
    %1041 = vmatpush2.xpose.msra.mxu0 0.0
    %1042 = vmatprep.subr.mxu0 0.0
    %1043 = vmatpush2.xpose.msra.mxu0 0.0
    %1044 = vmatprep.subr.mxu0 0.0
    %1045 = vmatpush2.xpose.msra.mxu0 0.0
    %1046 = vmatprep.subr.mxu0 0.0
    %1047 = vmatpush2.xpose.msra.mxu0 0.0
    %1048 = vmatprep.subr.mxu0 0.0
    %1049 = vmatpush2.xpose.msra.mxu0 0.0
    %1050 = vmatprep.subr.mxu0 0.0
    %1051 = vmatpush2.xpose.msra.mxu0 0.0
    %1052 = vmatprep.mubr.f32.mxu0 0.0
    %1053 = vmatmul.mubr.f32.gmra.mxu0 %v984
    %v1054 = vpop.f32.mrf.mxu0
    %v1055 = vadd.f32 0.0, %v1054
    %v1056 = vpop.f32.mrf.mxu0
    %1057 = vdwg.mxu0
    %v1058 = vmul.f32 %v1055, 0.25
    %v1059 = vsel %vm452, %v1058, -inf
    %1060 = vmax.xlane.f32.xlu0 %v1059
    %v1061 = vpop.xlane.xlu0 %1060
    %v1062 = vsub.f32 %v1058, %v1061
    %v1063 = vmul.f32 %v1062, 1.442695
    %v1064 = vpow.pop %v1063
    %v1065 = vsel %vm452, %v1064, 0.0
    %1066 = vadd.xlane.f32.xlu0 %v1065
    %v1067 = vpop.xlane.xlu0 %1066
    %v1068 = vrcp.pop %v1067
    %v1069 = vmul.f32 %v1064, %v1068
    %1070 = vxpose.xlu0.b32.start [1/16] %v1069, 128
    %1071 = vxpose.xlu0.b32.cont [2/16] 0.0, 128
    %1072 = vxpose.xlu0.b32.cont [3/16] 0.0, 128
    %1073 = vxpose.xlu0.b32.cont [4/16] 0.0, 128
    %1074 = vxpose.xlu0.b32.cont [5/16] 0.0, 128
    %1075 = vxpose.xlu0.b32.cont [6/16] 0.0, 128
    %1076 = vxpose.xlu0.b32.cont [7/16] 0.0, 128
    %1077 = vxpose.xlu0.b32.cont [8/16] 0.0, 128
    %1078 = vxpose.xlu0.b32.cont [9/16] 0.0, 128
    %1079 = vxpose.xlu0.b32.cont [10/16] 0.0, 128
    %1080 = vxpose.xlu0.b32.cont [11/16] 0.0, 128
    %1081 = vxpose.xlu0.b32.cont [12/16] 0.0, 128
    %1082 = vxpose.xlu0.b32.cont [13/16] 0.0, 128
    %1083 = vxpose.xlu0.b32.cont [14/16] 0.0, 128
    %1084 = vxpose.xlu0.b32.cont [15/16] 0.0, 128
    %1085 = vxpose.xlu0.b32.end [16/16] 0.0, 128
    %v1086 = vpop.trf.xlu0
    %v1087 = vpop.trf.xlu0
    %v1088 = vpop.trf.xlu0
    %v1089 = vpop.trf.xlu0
    %v1090 = vpop.trf.xlu0
    %v1091 = vpop.trf.xlu0
    %v1092 = vpop.trf.xlu0
    %v1093 = vpop.trf.xlu0
    %v1094 = vpop.trf.xlu0
    %v1095 = vpop.trf.xlu0
    %v1096 = vpop.trf.xlu0
    %v1097 = vpop.trf.xlu0
    %v1098 = vpop.trf.xlu0
    %v1099 = vpop.trf.xlu0
    %v1100 = vpop.trf.xlu0
    %v1101 = vpop.trf.xlu0
    %1102 = vrot.lane.b32.xlu0 %v782, 48
    %v1103 = vpop.permute.xlu0 %1102
    %v1105 = vsel %vm498, %v1086, 0
    %v1107 = vsel %vm502, %v1103, 0
    %1109 = vmatprep.subr.mxu0 0.0
    %1110 = vmatpush1.msra.mxu0 0.0
    %1111 = vmatprep.subr.mxu0 0.0
    %1112 = vmatpush1.msra.mxu0 0.0
    %1113 = vmatprep.subr.mxu0 0.0
    %1114 = vmatpush1.msra.mxu0 0.0
    %1115 = vmatprep.subr.mxu0 0.0
    %1116 = vmatpush1.msra.mxu0 0.0
    %1117 = vmatprep.subr.mxu0 0.0
    %1118 = vmatpush1.msra.mxu0 0.0
    %1119 = vmatprep.subr.mxu0 0.0
    %1120 = vmatpush1.msra.mxu0 0.0
    %1121 = vmatprep.subr.mxu0 0.0
    %1122 = vmatpush1.msra.mxu0 0.0
    %1123 = vmatprep.subr.mxu0 0.0
    %1124 = vmatpush1.msra.mxu0 0.0
    %1125 = vmatprep.subr.mxu0 0.0
    %1126 = vmatpush1.msra.mxu0 0.0
    %1127 = vmatprep.subr.mxu0 0.0
    %1128 = vmatpush1.msra.mxu0 0.0
    %1129 = vmatprep.subr.mxu0 0.0
    %1130 = vmatpush1.msra.mxu0 0.0
    %1131 = vmatprep.subr.mxu0 0.0
    %1132 = vmatpush1.msra.mxu0 0.0
    %1133 = vmatprep.subr.mxu0 0.0
    %1134 = vmatpush1.msra.mxu0 0.0
    %1135 = vmatprep.subr.mxu0 0.0
    %1136 = vmatpush1.msra.mxu0 0.0
    %1137 = vmatprep.subr.mxu0 0.0
    %1138 = vmatpush1.msra.mxu0 0.0
    %1139 = vmatprep.subr.mxu0 0.0
    %1140 = vmatpush1.msra.mxu0 %v1107
    %1141 = vmatprep.subr.mxu0 0.0
    %1142 = vmatpush2.msra.mxu0 0.0
    %1143 = vmatprep.subr.mxu0 0.0
    %1144 = vmatpush2.msra.mxu0 0.0
    %1145 = vmatprep.subr.mxu0 0.0
    %1146 = vmatpush2.msra.mxu0 0.0
    %1147 = vmatprep.subr.mxu0 0.0
    %1148 = vmatpush2.msra.mxu0 0.0
    %1149 = vmatprep.subr.mxu0 0.0
    %1150 = vmatpush2.msra.mxu0 0.0
    %1151 = vmatprep.subr.mxu0 0.0
    %1152 = vmatpush2.msra.mxu0 0.0
    %1153 = vmatprep.subr.mxu0 0.0
    %1154 = vmatpush2.msra.mxu0 0.0
    %1155 = vmatprep.subr.mxu0 0.0
    %1156 = vmatpush2.msra.mxu0 0.0
    %1157 = vmatprep.subr.mxu0 0.0
    %1158 = vmatpush2.msra.mxu0 0.0
    %1159 = vmatprep.subr.mxu0 0.0
    %1160 = vmatpush2.msra.mxu0 0.0
    %1161 = vmatprep.subr.mxu0 0.0
    %1162 = vmatpush2.msra.mxu0 0.0
    %1163 = vmatprep.subr.mxu0 0.0
    %1164 = vmatpush2.msra.mxu0 0.0
    %1165 = vmatprep.subr.mxu0 0.0
    %1166 = vmatpush2.msra.mxu0 0.0
    %1167 = vmatprep.subr.mxu0 0.0
    %1168 = vmatpush2.msra.mxu0 0.0
    %1169 = vmatprep.subr.mxu0 0.0
    %1170 = vmatpush2.msra.mxu0 0.0
    %1171 = vmatprep.subr.mxu0 0.0
    %1172 = vmatpush2.msra.mxu0 0.0
    %1173 = vmatprep.mubr.f32.mxu0 0.0
    %1174 = vmatmul.mubr.f32.gmra.mxu0 %v1105
    %v1175 = vpop.f32.mrf.mxu0
    %v1176 = vadd.f32 0.0, %v1175
    %v1177 = vpop.f32.mrf.mxu0
    %1178 = vdwg.mxu0
    %1180 = vrot.lane.b32.xlu0 %v1176, 16
    %v1181 = vpop.permute.xlu0 %1180
    %v1183 = vsel %vm248, %v977, %v1181
    %v1185 = vrot.slane %v1183, 3
    %v1187 = vsel %vm502, %v778, %v1185
    %v1188 = vlaneseq
    %v1189 = vshrl.u32 %v1188, 7
    %v1190 = vsub.s32 1, %v1189
    %v1191 = vrot.slane %v233, %v1190
    %vm1192 = vcmask 261120
    %v1194 = vsel %vm1192, %v1187, 0
    %v1196 = vsel %vm1192, %v1185, 0
    %1198 = vmatprep.subr.mxu0 0.0
    %1199 = vmatpush1.msra.mxu0 0.0
    %1200 = vmatprep.subr.mxu0 0.0
    %1201 = vmatpush1.msra.mxu0 0.0
    %1202 = vmatprep.subr.mxu0 0.0
    %1203 = vmatpush1.msra.mxu0 0.0
    %1204 = vmatprep.subr.mxu0 0.0
    %1205 = vmatpush1.msra.mxu0 0.0
    %1206 = vmatprep.subr.mxu0 0.0
    %1207 = vmatpush1.msra.mxu0 0.0
    %1208 = vmatprep.subr.mxu0 0.0
    %1209 = vmatpush1.msra.mxu0 0.0
    %1210 = vmatprep.subr.mxu0 0.0
    %1211 = vmatpush1.msra.mxu0 0.0
    %1212 = vmatprep.subr.mxu0 0.0
    %1213 = vmatpush1.msra.mxu0 0.0
    %1214 = vmatprep.subr.mxu0 0.0
    %1215 = vmatpush1.msra.mxu0 0.0
    %1216 = vmatprep.subr.mxu0 0.0
    %1217 = vmatpush1.msra.mxu0 0.0
    %1218 = vmatprep.subr.mxu0 0.0
    %1219 = vmatpush1.msra.mxu0 0.0
    %1220 = vmatprep.subr.mxu0 0.0
    %1221 = vmatpush1.msra.mxu0 0.0
    %1222 = vmatprep.subr.mxu0 0.0
    %1223 = vmatpush1.msra.mxu0 %v241
    %1224 = vmatprep.subr.mxu0 0.0
    %1225 = vmatpush1.msra.mxu0 %v240
    %1226 = vmatprep.subr.mxu0 0.0
    %1227 = vmatpush1.msra.mxu0 %v239
    %1228 = vmatprep.subr.mxu0 0.0
    %1229 = vmatpush1.msra.mxu0 %v238
    %1230 = vmatprep.subr.mxu0 0.0
    %1231 = vmatpush2.msra.mxu0 0.0
    %1232 = vmatprep.subr.mxu0 0.0
    %1233 = vmatpush2.msra.mxu0 0.0
    %1234 = vmatprep.subr.mxu0 0.0
    %1235 = vmatpush2.msra.mxu0 0.0
    %1236 = vmatprep.subr.mxu0 0.0
    %1237 = vmatpush2.msra.mxu0 0.0
    %1238 = vmatprep.subr.mxu0 0.0
    %1239 = vmatpush2.msra.mxu0 0.0
    %1240 = vmatprep.subr.mxu0 0.0
    %1241 = vmatpush2.msra.mxu0 0.0
    %1242 = vmatprep.subr.mxu0 0.0
    %1243 = vmatpush2.msra.mxu0 0.0
    %1244 = vmatprep.subr.mxu0 0.0
    %1245 = vmatpush2.msra.mxu0 0.0
    %1246 = vmatprep.subr.mxu0 0.0
    %1247 = vmatpush2.msra.mxu0 0.0
    %1248 = vmatprep.subr.mxu0 0.0
    %1249 = vmatpush2.msra.mxu0 0.0
    %1250 = vmatprep.subr.mxu0 0.0
    %1251 = vmatpush2.msra.mxu0 0.0
    %1252 = vmatprep.subr.mxu0 0.0
    %1253 = vmatpush2.msra.mxu0 0.0
    %1254 = vmatprep.subr.mxu0 0.0
    %1255 = vmatpush2.msra.mxu0 0.0
    %1256 = vmatprep.subr.mxu0 0.0
    %1257 = vmatpush2.msra.mxu0 0.0
    %1258 = vmatprep.subr.mxu0 0.0
    %1259 = vmatpush2.msra.mxu0 0.0
    %1260 = vmatprep.subr.mxu0 0.0
    %1261 = vmatpush2.msra.mxu0 0.0
    %1262 = vmatprep.mubr.f32.mxu0 0.0
    %1263 = vmatmul.mubr.f32.gmra.mxu0 %v1194
    %v1264 = vpop.f32.mrf.mxu0
    %v1265 = vadd.f32 %v1191, %v1264
    %v1266 = vpop.f32.mrf.mxu0
    %1267 = vmatprep.mubr.f32.mxu0 0.0
    %1268 = vmatmul.mubr.f32.gmra.mxu0 %v1196
    %v1269 = vpop.f32.mrf.mxu0
    %v1270 = vadd.f32 %v1191, %v1269
    %v1271 = vpop.f32.mrf.mxu0
    %1272 = vdwg.mxu0
    %v1273 = vadd.f32 %v225, %v1265
    %v1274 = vadd.f32 %v230, %v1270
    %v1275 = vsel %vm248, %v1273, 0.0
    %1276 = vadd.xlane.f32.xlu0 %v1275
    %v1277 = vpop.xlane.xlu0 %1276
    %v1278 = vsel %vm252, %v1274, 0.0
    %1279 = vadd.xlane.f32.xlu0 %v1278
    %v1280 = vpop.xlane.xlu0 %1279
    %v1281 = vmul.f32 %v1277, %v256
    %v1282 = vmul.f32 %v1280, %v256
    %v1283 = vsub.f32 %v1273, %v1281
    %v1284 = vsub.f32 %v1274, %v1282
    %v1285 = vmul.f32 %v1283, %v1283
    %v1286 = vmul.f32 %v1284, %v1284
    %v1287 = vsel %vm248, %v1285, 0.0
    %1288 = vadd.xlane.f32.xlu0 %v1287
    %v1289 = vpop.xlane.xlu0 %1288
    %v1290 = vsel %vm252, %v1286, 0.0
    %1291 = vadd.xlane.f32.xlu0 %v1290
    %v1292 = vpop.xlane.xlu0 %1291
    %v1293 = vmul.f32 %v1289, %v256
    %v1294 = vmul.f32 %v1292, %v256
    %v1295 = vadd.f32 %v1293, 1e-06
    %v1296 = vadd.f32 %v1294, 1e-06
    %v1297 = vrsqrt.pop %v1295
    %v1298 = vrsqrt.pop %v1296
    %v1299 = vmul.f32 %v1283, %v1297
    %v1300 = vmul.f32 %v1284, %v1298
    %v1301 = vmul.f32 %v1299, %v280
    %v1302 = vmul.f32 %v1300, %v280
    %v1303 = vadd.f32 %v1301, %v286
    %v1304 = vadd.f32 %v1302, %v286
    %v1305 = vlaneseq
    %v1306 = vshrl.u32 %v1305, 7
    %v1307 = vsub.s32 2, %v1306
    %v1308 = vrot.slane %v233, %v1307
    %v1310 = vsel %vm248, %v1303, 0
    %v1313 = vsel %vm248, %v1304, 0
    %1315 = vmatprep.subr.mxu0 0.0
    %1316 = vmatpush1.msra.mxu0 0.0
    %1317 = vmatprep.subr.mxu0 0.0
    %1318 = vmatpush1.msra.mxu0 0.0
    %1319 = vmatprep.subr.mxu0 0.0
    %1320 = vmatpush1.msra.mxu0 0.0
    %1321 = vmatprep.subr.mxu0 0.0
    %1322 = vmatpush1.msra.mxu0 0.0
    %1323 = vmatprep.subr.mxu0 0.0
    %1324 = vmatpush1.msra.mxu0 0.0
    %1325 = vmatprep.subr.mxu0 0.0
    %1326 = vmatpush1.msra.mxu0 0.0
    %1327 = vmatprep.subr.mxu0 0.0
    %1328 = vmatpush1.msra.mxu0 0.0
    %1329 = vmatprep.subr.mxu0 0.0
    %1330 = vmatpush1.msra.mxu0 0.0
    %1331 = vmatprep.subr.mxu0 0.0
    %1332 = vmatpush1.msra.mxu0 0.0
    %1333 = vmatprep.subr.mxu0 0.0
    %1334 = vmatpush1.msra.mxu0 0.0
    %1335 = vmatprep.subr.mxu0 0.0
    %1336 = vmatpush1.msra.mxu0 0.0
    %1337 = vmatprep.subr.mxu0 0.0
    %1338 = vmatpush1.msra.mxu0 0.0
    %1339 = vmatprep.subr.mxu0 0.0
    %1340 = vmatpush1.msra.mxu0 0.0
    %1341 = vmatprep.subr.mxu0 0.0
    %1342 = vmatpush1.msra.mxu0 0.0
    %1343 = vmatprep.subr.mxu0 0.0
    %1344 = vmatpush1.msra.mxu0 %v243
    %1345 = vmatprep.subr.mxu0 0.0
    %1346 = vmatpush1.msra.mxu0 %v242
    %1347 = vmatprep.subr.mxu0 0.0
    %1348 = vmatpush2.msra.mxu0 0.0
    %1349 = vmatprep.subr.mxu0 0.0
    %1350 = vmatpush2.msra.mxu0 0.0
    %1351 = vmatprep.subr.mxu0 0.0
    %1352 = vmatpush2.msra.mxu0 0.0
    %1353 = vmatprep.subr.mxu0 0.0
    %1354 = vmatpush2.msra.mxu0 0.0
    %1355 = vmatprep.subr.mxu0 0.0
    %1356 = vmatpush2.msra.mxu0 0.0
    %1357 = vmatprep.subr.mxu0 0.0
    %1358 = vmatpush2.msra.mxu0 0.0
    %1359 = vmatprep.subr.mxu0 0.0
    %1360 = vmatpush2.msra.mxu0 0.0
    %1361 = vmatprep.subr.mxu0 0.0
    %1362 = vmatpush2.msra.mxu0 0.0
    %1363 = vmatprep.subr.mxu0 0.0
    %1364 = vmatpush2.msra.mxu0 0.0
    %1365 = vmatprep.subr.mxu0 0.0
    %1366 = vmatpush2.msra.mxu0 0.0
    %1367 = vmatprep.subr.mxu0 0.0
    %1368 = vmatpush2.msra.mxu0 0.0
    %1369 = vmatprep.subr.mxu0 0.0
    %1370 = vmatpush2.msra.mxu0 0.0
    %1371 = vmatprep.subr.mxu0 0.0
    %1372 = vmatpush2.msra.mxu0 0.0
    %1373 = vmatprep.subr.mxu0 0.0
    %1374 = vmatpush2.msra.mxu0 0.0
    %1375 = vmatprep.subr.mxu0 0.0
    %1376 = vmatpush2.msra.mxu0 0.0
    %1377 = vmatprep.subr.mxu0 0.0
    %1378 = vmatpush2.msra.mxu0 0.0
    %1379 = vmatprep.mubr.f32.mxu0 0.0
    %1380 = vmatmul.mubr.f32.gmra.mxu0 %v1310
    %v1381 = vpop.f32.mrf.mxu0
    %v1382 = vadd.f32 %v1308, %v1381
    %v1383 = vpop.f32.mrf.mxu0
    %1384 = vmatprep.mubr.f32.mxu0 0.0
    %1385 = vmatmul.mubr.f32.gmra.mxu0 %v1313
    %v1386 = vpop.f32.mrf.mxu0
    %v1387 = vadd.f32 %v1308, %v1386
    %v1388 = vpop.f32.mrf.mxu0
    %1389 = vdwg.mxu0
    %1391 = vset.pattern.permute.xlu0 0
    %1392 = vperm.xlu0 %1391, %v234
    %v1393 = vpop.permute.xlu0 %1392
    %1396 = vset.pattern.permute.xlu0 0
    %1397 = vperm.xlu0 %1396, %v235
    %v1398 = vpop.permute.xlu0 %1397
    %v1400 = vmul.f32 %v1382, %v1393
    %v1401 = vmul.f32 %v1387, %v1398
    %1402 = vset.pattern.permute.xlu0 1
    %1403 = vperm.xlu0 %1402, %v234
    %v1404 = vpop.permute.xlu0 %1403
    %1406 = vset.pattern.permute.xlu0 1
    %1407 = vperm.xlu0 %1406, %v235
    %v1408 = vpop.permute.xlu0 %1407
    %v1410 = vadd.f32 %v1400, %v1404
    %v1411 = vadd.f32 %v1401, %v1408
    %v1412 = vmul.f32 %v1410, 0.5
    %v1413 = vmul.f32 %v1411, 0.5
    %v1414 = vmul.f32 %v1410, 0.70710677
    %v1415 = vmul.f32 %v1411, 0.70710677
    %v1416 = vand.u32 2147483647, %v1414
    %v1417 = vand.u32 2147483647, %v1415
    %v1418 = vmul.f32 %v1416, 0.3275911
    %v1419 = vmul.f32 %v1417, 0.3275911
    %v1420 = vadd.f32 %v1418, 1.0
    %v1421 = vadd.f32 %v1419, 1.0
    %v1422 = vrcp.pop %v1420
    %v1423 = vrcp.pop %v1421
    %v1424 = vmul.f32 %v1422, 1.0614054
    %v1425 = vmul.f32 %v1423, 1.0614054
    %v1426 = vadd.f32 %v1424, -1.4531521
    %v1427 = vadd.f32 %v1425, -1.4531521
    %v1428 = vmul.f32 %v1426, %v1422
    %v1429 = vmul.f32 %v1427, %v1423
    %v1430 = vadd.f32 %v1428, 1.4214138
    %v1431 = vadd.f32 %v1429, 1.4214138
    %v1432 = vmul.f32 %v1430, %v1422
    %v1433 = vmul.f32 %v1431, %v1423
    %v1434 = vadd.f32 %v1432, -0.28449672
    %v1435 = vadd.f32 %v1433, -0.28449672
    %v1436 = vmul.f32 %v1434, %v1422
    %v1437 = vmul.f32 %v1435, %v1423
    %v1438 = vadd.f32 %v1436, 0.2548296
    %v1439 = vadd.f32 %v1437, 0.2548296
    %v1440 = vmul.f32 %v1438, %v1422
    %v1441 = vmul.f32 %v1439, %v1423
    %v1442 = vsub.f32 0.0, %v1416
    %v1443 = vsub.f32 0.0, %v1417
    %v1444 = vmul.f32 %v1442, %v1416
    %v1445 = vmul.f32 %v1443, %v1417
    %v1446 = vmul.f32 %v1444, 1.442695
    %v1447 = vpow.pop %v1446
    %v1448 = vmul.f32 %v1445, 1.442695
    %v1449 = vpow.pop %v1448
    %v1450 = vmul.f32 %v1440, %v1447
    %v1451 = vmul.f32 %v1441, %v1449
    %v1452 = vsub.f32 1.0, %v1450
    %v1453 = vsub.f32 1.0, %v1451
    %vm1454 = vcmp.ge.f32.partialorder %v1414, 0.0
    %vm1455 = vcmp.ge.f32.partialorder %v1415, 0.0
    %v1456 = vsub.f32 0.0, %v1452
    %v1457 = vsub.f32 0.0, %v1453
    %v1458 = vsel %vm1454, %v1452, %v1456
    %v1459 = vsel %vm1455, %v1453, %v1457
    %v1460 = vadd.f32 %v1458, 1.0
    %v1461 = vadd.f32 %v1459, 1.0
    %v1462 = vmul.f32 %v1412, %v1460
    %v1463 = vmul.f32 %v1413, %v1461
    %v1464 = vlaneseq
    %v1465 = vshrl.u32 %v1464, 7
    %v1466 = vsub.s32 3, %v1465
    %v1467 = vrot.slane %v233, %v1466
    %v1469 = vsel %vm1192, %v1462, 0
    %v1472 = vsel %vm1192, %v1463, 0
    %1474 = vmatprep.subr.mxu0 0.0
    %1475 = vmatpush1.msra.mxu0 0.0
    %1476 = vmatprep.subr.mxu0 0.0
    %1477 = vmatpush1.msra.mxu0 0.0
    %1478 = vmatprep.subr.mxu0 0.0
    %1479 = vmatpush1.msra.mxu0 0.0
    %1480 = vmatprep.subr.mxu0 0.0
    %1481 = vmatpush1.msra.mxu0 0.0
    %1482 = vmatprep.subr.mxu0 0.0
    %1483 = vmatpush1.msra.mxu0 0.0
    %1484 = vmatprep.subr.mxu0 0.0
    %1485 = vmatpush1.msra.mxu0 0.0
    %1486 = vmatprep.subr.mxu0 0.0
    %1487 = vmatpush1.msra.mxu0 0.0
    %1488 = vmatprep.subr.mxu0 0.0
    %1489 = vmatpush1.msra.mxu0 0.0
    %1490 = vmatprep.subr.mxu0 0.0
    %1491 = vmatpush1.msra.mxu0 0.0
    %1492 = vmatprep.subr.mxu0 0.0
    %1493 = vmatpush1.msra.mxu0 0.0
    %1494 = vmatprep.subr.mxu0 0.0
    %1495 = vmatpush1.msra.mxu0 0.0
    %1496 = vmatprep.subr.mxu0 0.0
    %1497 = vmatpush1.msra.mxu0 0.0
    %1498 = vmatprep.subr.mxu0 0.0
    %1499 = vmatpush1.msra.mxu0 %v247
    %1500 = vmatprep.subr.mxu0 0.0
    %1501 = vmatpush1.msra.mxu0 %v246
    %1502 = vmatprep.subr.mxu0 0.0
    %1503 = vmatpush1.msra.mxu0 %v245
    %1504 = vmatprep.subr.mxu0 0.0
    %1505 = vmatpush1.msra.mxu0 %v244
    %1506 = vmatprep.subr.mxu0 0.0
    %1507 = vmatpush2.msra.mxu0 0.0
    %1508 = vmatprep.subr.mxu0 0.0
    %1509 = vmatpush2.msra.mxu0 0.0
    %1510 = vmatprep.subr.mxu0 0.0
    %1511 = vmatpush2.msra.mxu0 0.0
    %1512 = vmatprep.subr.mxu0 0.0
    %1513 = vmatpush2.msra.mxu0 0.0
    %1514 = vmatprep.subr.mxu0 0.0
    %1515 = vmatpush2.msra.mxu0 0.0
    %1516 = vmatprep.subr.mxu0 0.0
    %1517 = vmatpush2.msra.mxu0 0.0
    %1518 = vmatprep.subr.mxu0 0.0
    %1519 = vmatpush2.msra.mxu0 0.0
    %1520 = vmatprep.subr.mxu0 0.0
    %1521 = vmatpush2.msra.mxu0 0.0
    %1522 = vmatprep.subr.mxu0 0.0
    %1523 = vmatpush2.msra.mxu0 0.0
    %1524 = vmatprep.subr.mxu0 0.0
    %1525 = vmatpush2.msra.mxu0 0.0
    %1526 = vmatprep.subr.mxu0 0.0
    %1527 = vmatpush2.msra.mxu0 0.0
    %1528 = vmatprep.subr.mxu0 0.0
    %1529 = vmatpush2.msra.mxu0 0.0
    %1530 = vmatprep.subr.mxu0 0.0
    %1531 = vmatpush2.msra.mxu0 0.0
    %1532 = vmatprep.subr.mxu0 0.0
    %1533 = vmatpush2.msra.mxu0 0.0
    %1534 = vmatprep.subr.mxu0 0.0
    %1535 = vmatpush2.msra.mxu0 0.0
    %1536 = vmatprep.subr.mxu0 0.0
    %1537 = vmatpush2.msra.mxu0 0.0
    %1538 = vmatprep.mubr.f32.mxu0 0.0
    %1539 = vmatmul.mubr.f32.gmra.mxu0 %v1469
    %v1540 = vpop.f32.mrf.mxu0
    %v1541 = vadd.f32 %v1467, %v1540
    %v1542 = vpop.f32.mrf.mxu0
    %1543 = vmatprep.mubr.f32.mxu0 0.0
    %1544 = vmatmul.mubr.f32.gmra.mxu0 %v1472
    %v1545 = vpop.f32.mrf.mxu0
    %v1546 = vadd.f32 %v1467, %v1545
    %v1547 = vpop.f32.mrf.mxu0
    %1548 = vdwg.mxu0
    %1549 = vset.pattern.permute.xlu0 2
    %1550 = vperm.xlu0 %1549, %v234
    %v1551 = vpop.permute.xlu0 %1550
    %1553 = vset.pattern.permute.xlu0 2
    %1554 = vperm.xlu0 %1553, %v235
    %v1555 = vpop.permute.xlu0 %1554
    %v1557 = vmul.f32 %v1541, %v1551
    %v1558 = vmul.f32 %v1546, %v1555
    %1559 = vset.pattern.permute.xlu0 3
    %1560 = vperm.xlu0 %1559, %v234
    %v1561 = vpop.permute.xlu0 %1560
    %1563 = vset.pattern.permute.xlu0 3
    %1564 = vperm.xlu0 %1563, %v235
    %v1565 = vpop.permute.xlu0 %1564
    %v1567 = vadd.f32 %v1557, %v1561
    %v1568 = vadd.f32 %v1558, %v1565
    %v1569 = vadd.f32 %v1273, %v1567
    %v1570 = vadd.f32 %v1274, %v1568
    %s1571 = scalar_lea.vmem %s6, 8
    %v1572 = vld [vmem:[%s1571] sm:$0x3f]
    %s1573 = scalar_lea.vmem %s7, 16
    %v1574 = vld [vmem:[%s1573] sm:$0xff]
    %v1575 = vld [vmem:[%s1573 + $0x8] sm:$0x3]
    %s1576 = scalar_lea.vmem %s2, 16
    %v1577 = vld [vmem:[%s1576] sm:$0xff]
    %v1578 = vld [vmem:[%s1576 + $0x8] sm:$0xff]
    %s1579 = scalar_lea.vmem %s3, 32
    %v1580 = vld [vmem:[%s1579] sm:$0xff]
    %v1581 = vld [vmem:[%s1579 + $0x8] sm:$0xff]
    %v1582 = vld [vmem:[%s1579 + $0x10] sm:$0xff]
    %v1583 = vld [vmem:[%s1579 + $0x18] sm:$0xff]
    %s1584 = scalar_lea.vmem %s4, 16
    %v1585 = vld [vmem:[%s1584] sm:$0xff]
    %v1586 = vld [vmem:[%s1584 + $0x8] sm:$0xff]
    %s1587 = scalar_lea.vmem %s5, 32
    %v1588 = vld [vmem:[%s1587] sm:$0xff]
    %v1589 = vld [vmem:[%s1587 + $0x8] sm:$0xff]
    %v1590 = vld [vmem:[%s1587 + $0x10] sm:$0xff]
    %v1591 = vld [vmem:[%s1587 + $0x18] sm:$0xff]
    %v1592 = vsel %vm248, %v1569, 0.0
    %1593 = vadd.xlane.f32.xlu0 %v1592
    %v1594 = vpop.xlane.xlu0 %1593
    %v1595 = vsel %vm252, %v1570, 0.0
    %1596 = vadd.xlane.f32.xlu0 %v1595
    %v1597 = vpop.xlane.xlu0 %1596
    %v1598 = vmul.f32 %v1594, %v256
    %v1599 = vmul.f32 %v1597, %v256
    %v1600 = vsub.f32 %v1569, %v1598
    %v1601 = vsub.f32 %v1570, %v1599
    %v1602 = vmul.f32 %v1600, %v1600
    %v1603 = vmul.f32 %v1601, %v1601
    %v1604 = vsel %vm248, %v1602, 0.0
    %1605 = vadd.xlane.f32.xlu0 %v1604
    %v1606 = vpop.xlane.xlu0 %1605
    %v1607 = vsel %vm252, %v1603, 0.0
    %1608 = vadd.xlane.f32.xlu0 %v1607
    %v1609 = vpop.xlane.xlu0 %1608
    %v1610 = vmul.f32 %v1606, %v256
    %v1611 = vmul.f32 %v1609, %v256
    %v1612 = vadd.f32 %v1610, 1e-06
    %v1613 = vadd.f32 %v1611, 1e-06
    %v1614 = vrsqrt.pop %v1612
    %v1615 = vrsqrt.pop %v1613
    %v1616 = vmul.f32 %v1600, %v1614
    %v1617 = vmul.f32 %v1601, %v1615
    %v1618 = vlaneseq
    %v1619 = vshrl.u32 %v1618, 7
    %v1620 = vsub.s32 4, %v1619
    %v1621 = vrot.slane %v1572, %v1620
    %v1622 = vmul.f32 %v1616, %v1621
    %v1623 = vmul.f32 %v1617, %v1621
    %v1624 = vlaneseq
    %v1625 = vshrl.u32 %v1624, 7
    %v1626 = vsub.s32 5, %v1625
    %v1627 = vrot.slane %v1572, %v1626
    %v1628 = vadd.f32 %v1622, %v1627
    %v1629 = vadd.f32 %v1623, %v1627
    %v1630 = vlaneseq
    %v1631 = vshrl.u32 %v1630, 7
    %v1632 = vsub.s32 0, %v1631
    %v1633 = vrot.slane %v1572, %v1632
    %v1635 = vsel %vm248, %v1628, 0
    %v1638 = vsel %vm248, %v1629, 0
    %1640 = vmatprep.subr.mxu0 0.0
    %1641 = vmatpush1.msra.mxu0 0.0
    %1642 = vmatprep.subr.mxu0 0.0
    %1643 = vmatpush1.msra.mxu0 0.0
    %1644 = vmatprep.subr.mxu0 0.0
    %1645 = vmatpush1.msra.mxu0 0.0
    %1646 = vmatprep.subr.mxu0 0.0
    %1647 = vmatpush1.msra.mxu0 0.0
    %1648 = vmatprep.subr.mxu0 0.0
    %1649 = vmatpush1.msra.mxu0 0.0
    %1650 = vmatprep.subr.mxu0 0.0
    %1651 = vmatpush1.msra.mxu0 0.0
    %1652 = vmatprep.subr.mxu0 0.0
    %1653 = vmatpush1.msra.mxu0 0.0
    %1654 = vmatprep.subr.mxu0 0.0
    %1655 = vmatpush1.msra.mxu0 0.0
    %1656 = vmatprep.subr.mxu0 0.0
    %1657 = vmatpush1.msra.mxu0 0.0
    %1658 = vmatprep.subr.mxu0 0.0
    %1659 = vmatpush1.msra.mxu0 0.0
    %1660 = vmatprep.subr.mxu0 0.0
    %1661 = vmatpush1.msra.mxu0 0.0
    %1662 = vmatprep.subr.mxu0 0.0
    %1663 = vmatpush1.msra.mxu0 0.0
    %1664 = vmatprep.subr.mxu0 0.0
    %1665 = vmatpush1.msra.mxu0 0.0
    %1666 = vmatprep.subr.mxu0 0.0
    %1667 = vmatpush1.msra.mxu0 0.0
    %1668 = vmatprep.subr.mxu0 0.0
    %1669 = vmatpush1.msra.mxu0 %v1578
    %1670 = vmatprep.subr.mxu0 0.0
    %1671 = vmatpush1.msra.mxu0 %v1577
    %1672 = vmatprep.subr.mxu0 0.0
    %1673 = vmatpush2.msra.mxu0 0.0
    %1674 = vmatprep.subr.mxu0 0.0
    %1675 = vmatpush2.msra.mxu0 0.0
    %1676 = vmatprep.subr.mxu0 0.0
    %1677 = vmatpush2.msra.mxu0 0.0
    %1678 = vmatprep.subr.mxu0 0.0
    %1679 = vmatpush2.msra.mxu0 0.0
    %1680 = vmatprep.subr.mxu0 0.0
    %1681 = vmatpush2.msra.mxu0 0.0
    %1682 = vmatprep.subr.mxu0 0.0
    %1683 = vmatpush2.msra.mxu0 0.0
    %1684 = vmatprep.subr.mxu0 0.0
    %1685 = vmatpush2.msra.mxu0 0.0
    %1686 = vmatprep.subr.mxu0 0.0
    %1687 = vmatpush2.msra.mxu0 0.0
    %1688 = vmatprep.subr.mxu0 0.0
    %1689 = vmatpush2.msra.mxu0 0.0
    %1690 = vmatprep.subr.mxu0 0.0
    %1691 = vmatpush2.msra.mxu0 0.0
    %1692 = vmatprep.subr.mxu0 0.0
    %1693 = vmatpush2.msra.mxu0 0.0
    %1694 = vmatprep.subr.mxu0 0.0
    %1695 = vmatpush2.msra.mxu0 0.0
    %1696 = vmatprep.subr.mxu0 0.0
    %1697 = vmatpush2.msra.mxu0 0.0
    %1698 = vmatprep.subr.mxu0 0.0
    %1699 = vmatpush2.msra.mxu0 0.0
    %1700 = vmatprep.subr.mxu0 0.0
    %1701 = vmatpush2.msra.mxu0 0.0
    %1702 = vmatprep.subr.mxu0 0.0
    %1703 = vmatpush2.msra.mxu0 0.0
    %1704 = vmatprep.mubr.f32.mxu0 0.0
    %1705 = vmatmul.mubr.f32.gmra.mxu0 %v1635
    %v1706 = vpop.f32.mrf.mxu0
    %v1707 = vadd.f32 %v1633, %v1706
    %v1708 = vpop.f32.mrf.mxu0
    %1709 = vmatprep.mubr.f32.mxu0 0.0
    %1710 = vmatmul.mubr.f32.gmra.mxu0 %v1638
    %v1711 = vpop.f32.mrf.mxu0
    %v1712 = vadd.f32 %v1633, %v1711
    %v1713 = vpop.f32.mrf.mxu0
    %1714 = vdwg.mxu0
    %1716 = vrot.lane.b32.xlu0 %v1707, 96
    %v1717 = vpop.permute.xlu0 %1716
    %v1718 = vsel %vm248, %v1707, 0
    %v1720 = vsel %vm248, %v1717, 0
    %1722 = vmatprep.subr.mxu0 0.0
    %1723 = vmatpush1.xpose.msra.mxu0 0.0
    %1724 = vmatprep.subr.mxu0 0.0
    %1725 = vmatpush1.xpose.msra.mxu0 0.0
    %1726 = vmatprep.subr.mxu0 0.0
    %1727 = vmatpush1.xpose.msra.mxu0 0.0
    %1728 = vmatprep.subr.mxu0 0.0
    %1729 = vmatpush1.xpose.msra.mxu0 0.0
    %1730 = vmatprep.subr.mxu0 0.0
    %1731 = vmatpush1.xpose.msra.mxu0 0.0
    %1732 = vmatprep.subr.mxu0 0.0
    %1733 = vmatpush1.xpose.msra.mxu0 0.0
    %1734 = vmatprep.subr.mxu0 0.0
    %1735 = vmatpush1.xpose.msra.mxu0 0.0
    %1736 = vmatprep.subr.mxu0 0.0
    %1737 = vmatpush1.xpose.msra.mxu0 0.0
    %1738 = vmatprep.subr.mxu0 0.0
    %1739 = vmatpush1.xpose.msra.mxu0 0.0
    %1740 = vmatprep.subr.mxu0 0.0
    %1741 = vmatpush1.xpose.msra.mxu0 0.0
    %1742 = vmatprep.subr.mxu0 0.0
    %1743 = vmatpush1.xpose.msra.mxu0 0.0
    %1744 = vmatprep.subr.mxu0 0.0
    %1745 = vmatpush1.xpose.msra.mxu0 0.0
    %1746 = vmatprep.subr.mxu0 0.0
    %1747 = vmatpush1.xpose.msra.mxu0 0.0
    %1748 = vmatprep.subr.mxu0 0.0
    %1749 = vmatpush1.xpose.msra.mxu0 0.0
    %1750 = vmatprep.subr.mxu0 0.0
    %1751 = vmatpush1.xpose.msra.mxu0 0.0
    %1752 = vmatprep.subr.mxu0 0.0
    %1753 = vmatpush1.xpose.msra.mxu0 %v1720
    %1754 = vmatprep.subr.mxu0 0.0
    %1755 = vmatpush2.xpose.msra.mxu0 0.0
    %1756 = vmatprep.subr.mxu0 0.0
    %1757 = vmatpush2.xpose.msra.mxu0 0.0
    %1758 = vmatprep.subr.mxu0 0.0
    %1759 = vmatpush2.xpose.msra.mxu0 0.0
    %1760 = vmatprep.subr.mxu0 0.0
    %1761 = vmatpush2.xpose.msra.mxu0 0.0
    %1762 = vmatprep.subr.mxu0 0.0
    %1763 = vmatpush2.xpose.msra.mxu0 0.0
    %1764 = vmatprep.subr.mxu0 0.0
    %1765 = vmatpush2.xpose.msra.mxu0 0.0
    %1766 = vmatprep.subr.mxu0 0.0
    %1767 = vmatpush2.xpose.msra.mxu0 0.0
    %1768 = vmatprep.subr.mxu0 0.0
    %1769 = vmatpush2.xpose.msra.mxu0 0.0
    %1770 = vmatprep.subr.mxu0 0.0
    %1771 = vmatpush2.xpose.msra.mxu0 0.0
    %1772 = vmatprep.subr.mxu0 0.0
    %1773 = vmatpush2.xpose.msra.mxu0 0.0
    %1774 = vmatprep.subr.mxu0 0.0
    %1775 = vmatpush2.xpose.msra.mxu0 0.0
    %1776 = vmatprep.subr.mxu0 0.0
    %1777 = vmatpush2.xpose.msra.mxu0 0.0
    %1778 = vmatprep.subr.mxu0 0.0
    %1779 = vmatpush2.xpose.msra.mxu0 0.0
    %1780 = vmatprep.subr.mxu0 0.0
    %1781 = vmatpush2.xpose.msra.mxu0 0.0
    %1782 = vmatprep.subr.mxu0 0.0
    %1783 = vmatpush2.xpose.msra.mxu0 0.0
    %1784 = vmatprep.subr.mxu0 0.0
    %1785 = vmatpush2.xpose.msra.mxu0 0.0
    %1786 = vmatprep.mubr.f32.mxu0 0.0
    %1787 = vmatmul.mubr.f32.gmra.mxu0 %v1718
    %v1788 = vpop.f32.mrf.mxu0
    %v1789 = vadd.f32 0.0, %v1788
    %v1790 = vpop.f32.mrf.mxu0
    %1791 = vdwg.mxu0
    %v1792 = vmul.f32 %v1789, 0.25
    %v1793 = vsel %vm452, %v1792, -inf
    %1794 = vmax.xlane.f32.xlu0 %v1793
    %v1795 = vpop.xlane.xlu0 %1794
    %v1796 = vsub.f32 %v1792, %v1795
    %v1797 = vmul.f32 %v1796, 1.442695
    %v1798 = vpow.pop %v1797
    %v1799 = vsel %vm452, %v1798, 0.0
    %1800 = vadd.xlane.f32.xlu0 %v1799
    %v1801 = vpop.xlane.xlu0 %1800
    %v1802 = vrcp.pop %v1801
    %v1803 = vmul.f32 %v1798, %v1802
    %1804 = vxpose.xlu0.b32.start [1/16] %v1803, 128
    %1805 = vxpose.xlu0.b32.cont [2/16] 0.0, 128
    %1806 = vxpose.xlu0.b32.cont [3/16] 0.0, 128
    %1807 = vxpose.xlu0.b32.cont [4/16] 0.0, 128
    %1808 = vxpose.xlu0.b32.cont [5/16] 0.0, 128
    %1809 = vxpose.xlu0.b32.cont [6/16] 0.0, 128
    %1810 = vxpose.xlu0.b32.cont [7/16] 0.0, 128
    %1811 = vxpose.xlu0.b32.cont [8/16] 0.0, 128
    %1812 = vxpose.xlu0.b32.cont [9/16] 0.0, 128
    %1813 = vxpose.xlu0.b32.cont [10/16] 0.0, 128
    %1814 = vxpose.xlu0.b32.cont [11/16] 0.0, 128
    %1815 = vxpose.xlu0.b32.cont [12/16] 0.0, 128
    %1816 = vxpose.xlu0.b32.cont [13/16] 0.0, 128
    %1817 = vxpose.xlu0.b32.cont [14/16] 0.0, 128
    %1818 = vxpose.xlu0.b32.cont [15/16] 0.0, 128
    %1819 = vxpose.xlu0.b32.end [16/16] 0.0, 128
    %v1820 = vpop.trf.xlu0
    %v1821 = vpop.trf.xlu0
    %v1822 = vpop.trf.xlu0
    %v1823 = vpop.trf.xlu0
    %v1824 = vpop.trf.xlu0
    %v1825 = vpop.trf.xlu0
    %v1826 = vpop.trf.xlu0
    %v1827 = vpop.trf.xlu0
    %v1828 = vpop.trf.xlu0
    %v1829 = vpop.trf.xlu0
    %v1830 = vpop.trf.xlu0
    %v1831 = vpop.trf.xlu0
    %v1832 = vpop.trf.xlu0
    %v1833 = vpop.trf.xlu0
    %v1834 = vpop.trf.xlu0
    %v1835 = vpop.trf.xlu0
    %1836 = vrot.lane.b32.xlu0 %v1707, 64
    %v1837 = vpop.permute.xlu0 %1836
    %v1839 = vsel %vm498, %v1820, 0
    %v1841 = vsel %vm502, %v1837, 0
    %1843 = vmatprep.subr.mxu0 0.0
    %1844 = vmatpush1.msra.mxu0 0.0
    %1845 = vmatprep.subr.mxu0 0.0
    %1846 = vmatpush1.msra.mxu0 0.0
    %1847 = vmatprep.subr.mxu0 0.0
    %1848 = vmatpush1.msra.mxu0 0.0
    %1849 = vmatprep.subr.mxu0 0.0
    %1850 = vmatpush1.msra.mxu0 0.0
    %1851 = vmatprep.subr.mxu0 0.0
    %1852 = vmatpush1.msra.mxu0 0.0
    %1853 = vmatprep.subr.mxu0 0.0
    %1854 = vmatpush1.msra.mxu0 0.0
    %1855 = vmatprep.subr.mxu0 0.0
    %1856 = vmatpush1.msra.mxu0 0.0
    %1857 = vmatprep.subr.mxu0 0.0
    %1858 = vmatpush1.msra.mxu0 0.0
    %1859 = vmatprep.subr.mxu0 0.0
    %1860 = vmatpush1.msra.mxu0 0.0
    %1861 = vmatprep.subr.mxu0 0.0
    %1862 = vmatpush1.msra.mxu0 0.0
    %1863 = vmatprep.subr.mxu0 0.0
    %1864 = vmatpush1.msra.mxu0 0.0
    %1865 = vmatprep.subr.mxu0 0.0
    %1866 = vmatpush1.msra.mxu0 0.0
    %1867 = vmatprep.subr.mxu0 0.0
    %1868 = vmatpush1.msra.mxu0 0.0
    %1869 = vmatprep.subr.mxu0 0.0
    %1870 = vmatpush1.msra.mxu0 0.0
    %1871 = vmatprep.subr.mxu0 0.0
    %1872 = vmatpush1.msra.mxu0 0.0
    %1873 = vmatprep.subr.mxu0 0.0
    %1874 = vmatpush1.msra.mxu0 %v1841
    %1875 = vmatprep.subr.mxu0 0.0
    %1876 = vmatpush2.msra.mxu0 0.0
    %1877 = vmatprep.subr.mxu0 0.0
    %1878 = vmatpush2.msra.mxu0 0.0
    %1879 = vmatprep.subr.mxu0 0.0
    %1880 = vmatpush2.msra.mxu0 0.0
    %1881 = vmatprep.subr.mxu0 0.0
    %1882 = vmatpush2.msra.mxu0 0.0
    %1883 = vmatprep.subr.mxu0 0.0
    %1884 = vmatpush2.msra.mxu0 0.0
    %1885 = vmatprep.subr.mxu0 0.0
    %1886 = vmatpush2.msra.mxu0 0.0
    %1887 = vmatprep.subr.mxu0 0.0
    %1888 = vmatpush2.msra.mxu0 0.0
    %1889 = vmatprep.subr.mxu0 0.0
    %1890 = vmatpush2.msra.mxu0 0.0
    %1891 = vmatprep.subr.mxu0 0.0
    %1892 = vmatpush2.msra.mxu0 0.0
    %1893 = vmatprep.subr.mxu0 0.0
    %1894 = vmatpush2.msra.mxu0 0.0
    %1895 = vmatprep.subr.mxu0 0.0
    %1896 = vmatpush2.msra.mxu0 0.0
    %1897 = vmatprep.subr.mxu0 0.0
    %1898 = vmatpush2.msra.mxu0 0.0
    %1899 = vmatprep.subr.mxu0 0.0
    %1900 = vmatpush2.msra.mxu0 0.0
    %1901 = vmatprep.subr.mxu0 0.0
    %1902 = vmatpush2.msra.mxu0 0.0
    %1903 = vmatprep.subr.mxu0 0.0
    %1904 = vmatpush2.msra.mxu0 0.0
    %1905 = vmatprep.subr.mxu0 0.0
    %1906 = vmatpush2.msra.mxu0 0.0
    %1907 = vmatprep.mubr.f32.mxu0 0.0
    %1908 = vmatmul.mubr.f32.gmra.mxu0 %v1839
    %v1909 = vpop.f32.mrf.mxu0
    %v1910 = vadd.f32 0.0, %v1909
    %v1911 = vpop.f32.mrf.mxu0
    %1912 = vdwg.mxu0
    %1913 = vrot.lane.b32.xlu0 %v1707, 112
    %v1914 = vpop.permute.xlu0 %1913
    %1915 = vrot.lane.b32.xlu0 %v1707, 80
    %v1916 = vpop.permute.xlu0 %1915
    %v1917 = vsel %vm248, %v1914, 0
    %v1919 = vsel %vm248, %v1916, 0
    %1921 = vmatprep.subr.mxu0 0.0
    %1922 = vmatpush1.xpose.msra.mxu0 0.0
    %1923 = vmatprep.subr.mxu0 0.0
    %1924 = vmatpush1.xpose.msra.mxu0 0.0
    %1925 = vmatprep.subr.mxu0 0.0
    %1926 = vmatpush1.xpose.msra.mxu0 0.0
    %1927 = vmatprep.subr.mxu0 0.0
    %1928 = vmatpush1.xpose.msra.mxu0 0.0
    %1929 = vmatprep.subr.mxu0 0.0
    %1930 = vmatpush1.xpose.msra.mxu0 0.0
    %1931 = vmatprep.subr.mxu0 0.0
    %1932 = vmatpush1.xpose.msra.mxu0 0.0
    %1933 = vmatprep.subr.mxu0 0.0
    %1934 = vmatpush1.xpose.msra.mxu0 0.0
    %1935 = vmatprep.subr.mxu0 0.0
    %1936 = vmatpush1.xpose.msra.mxu0 0.0
    %1937 = vmatprep.subr.mxu0 0.0
    %1938 = vmatpush1.xpose.msra.mxu0 0.0
    %1939 = vmatprep.subr.mxu0 0.0
    %1940 = vmatpush1.xpose.msra.mxu0 0.0
    %1941 = vmatprep.subr.mxu0 0.0
    %1942 = vmatpush1.xpose.msra.mxu0 0.0
    %1943 = vmatprep.subr.mxu0 0.0
    %1944 = vmatpush1.xpose.msra.mxu0 0.0
    %1945 = vmatprep.subr.mxu0 0.0
    %1946 = vmatpush1.xpose.msra.mxu0 0.0
    %1947 = vmatprep.subr.mxu0 0.0
    %1948 = vmatpush1.xpose.msra.mxu0 0.0
    %1949 = vmatprep.subr.mxu0 0.0
    %1950 = vmatpush1.xpose.msra.mxu0 0.0
    %1951 = vmatprep.subr.mxu0 0.0
    %1952 = vmatpush1.xpose.msra.mxu0 %v1919
    %1953 = vmatprep.subr.mxu0 0.0
    %1954 = vmatpush2.xpose.msra.mxu0 0.0
    %1955 = vmatprep.subr.mxu0 0.0
    %1956 = vmatpush2.xpose.msra.mxu0 0.0
    %1957 = vmatprep.subr.mxu0 0.0
    %1958 = vmatpush2.xpose.msra.mxu0 0.0
    %1959 = vmatprep.subr.mxu0 0.0
    %1960 = vmatpush2.xpose.msra.mxu0 0.0
    %1961 = vmatprep.subr.mxu0 0.0
    %1962 = vmatpush2.xpose.msra.mxu0 0.0
    %1963 = vmatprep.subr.mxu0 0.0
    %1964 = vmatpush2.xpose.msra.mxu0 0.0
    %1965 = vmatprep.subr.mxu0 0.0
    %1966 = vmatpush2.xpose.msra.mxu0 0.0
    %1967 = vmatprep.subr.mxu0 0.0
    %1968 = vmatpush2.xpose.msra.mxu0 0.0
    %1969 = vmatprep.subr.mxu0 0.0
    %1970 = vmatpush2.xpose.msra.mxu0 0.0
    %1971 = vmatprep.subr.mxu0 0.0
    %1972 = vmatpush2.xpose.msra.mxu0 0.0
    %1973 = vmatprep.subr.mxu0 0.0
    %1974 = vmatpush2.xpose.msra.mxu0 0.0
    %1975 = vmatprep.subr.mxu0 0.0
    %1976 = vmatpush2.xpose.msra.mxu0 0.0
    %1977 = vmatprep.subr.mxu0 0.0
    %1978 = vmatpush2.xpose.msra.mxu0 0.0
    %1979 = vmatprep.subr.mxu0 0.0
    %1980 = vmatpush2.xpose.msra.mxu0 0.0
    %1981 = vmatprep.subr.mxu0 0.0
    %1982 = vmatpush2.xpose.msra.mxu0 0.0
    %1983 = vmatprep.subr.mxu0 0.0
    %1984 = vmatpush2.xpose.msra.mxu0 0.0
    %1985 = vmatprep.mubr.f32.mxu0 0.0
    %1986 = vmatmul.mubr.f32.gmra.mxu0 %v1917
    %v1987 = vpop.f32.mrf.mxu0
    %v1988 = vadd.f32 0.0, %v1987
    %v1989 = vpop.f32.mrf.mxu0
    %1990 = vdwg.mxu0
    %v1991 = vmul.f32 %v1988, 0.25
    %v1992 = vsel %vm452, %v1991, -inf
    %1993 = vmax.xlane.f32.xlu0 %v1992
    %v1994 = vpop.xlane.xlu0 %1993
    %v1995 = vsub.f32 %v1991, %v1994
    %v1996 = vmul.f32 %v1995, 1.442695
    %v1997 = vpow.pop %v1996
    %v1998 = vsel %vm452, %v1997, 0.0
    %1999 = vadd.xlane.f32.xlu0 %v1998
    %v2000 = vpop.xlane.xlu0 %1999
    %v2001 = vrcp.pop %v2000
    %v2002 = vmul.f32 %v1997, %v2001
    %2003 = vxpose.xlu0.b32.start [1/16] %v2002, 128
    %2004 = vxpose.xlu0.b32.cont [2/16] 0.0, 128
    %2005 = vxpose.xlu0.b32.cont [3/16] 0.0, 128
    %2006 = vxpose.xlu0.b32.cont [4/16] 0.0, 128
    %2007 = vxpose.xlu0.b32.cont [5/16] 0.0, 128
    %2008 = vxpose.xlu0.b32.cont [6/16] 0.0, 128
    %2009 = vxpose.xlu0.b32.cont [7/16] 0.0, 128
    %2010 = vxpose.xlu0.b32.cont [8/16] 0.0, 128
    %2011 = vxpose.xlu0.b32.cont [9/16] 0.0, 128
    %2012 = vxpose.xlu0.b32.cont [10/16] 0.0, 128
    %2013 = vxpose.xlu0.b32.cont [11/16] 0.0, 128
    %2014 = vxpose.xlu0.b32.cont [12/16] 0.0, 128
    %2015 = vxpose.xlu0.b32.cont [13/16] 0.0, 128
    %2016 = vxpose.xlu0.b32.cont [14/16] 0.0, 128
    %2017 = vxpose.xlu0.b32.cont [15/16] 0.0, 128
    %2018 = vxpose.xlu0.b32.end [16/16] 0.0, 128
    %v2019 = vpop.trf.xlu0
    %v2020 = vpop.trf.xlu0
    %v2021 = vpop.trf.xlu0
    %v2022 = vpop.trf.xlu0
    %v2023 = vpop.trf.xlu0
    %v2024 = vpop.trf.xlu0
    %v2025 = vpop.trf.xlu0
    %v2026 = vpop.trf.xlu0
    %v2027 = vpop.trf.xlu0
    %v2028 = vpop.trf.xlu0
    %v2029 = vpop.trf.xlu0
    %v2030 = vpop.trf.xlu0
    %v2031 = vpop.trf.xlu0
    %v2032 = vpop.trf.xlu0
    %v2033 = vpop.trf.xlu0
    %v2034 = vpop.trf.xlu0
    %2035 = vrot.lane.b32.xlu0 %v1707, 48
    %v2036 = vpop.permute.xlu0 %2035
    %v2038 = vsel %vm498, %v2019, 0
    %v2040 = vsel %vm502, %v2036, 0
    %2042 = vmatprep.subr.mxu0 0.0
    %2043 = vmatpush1.msra.mxu0 0.0
    %2044 = vmatprep.subr.mxu0 0.0
    %2045 = vmatpush1.msra.mxu0 0.0
    %2046 = vmatprep.subr.mxu0 0.0
    %2047 = vmatpush1.msra.mxu0 0.0
    %2048 = vmatprep.subr.mxu0 0.0
    %2049 = vmatpush1.msra.mxu0 0.0
    %2050 = vmatprep.subr.mxu0 0.0
    %2051 = vmatpush1.msra.mxu0 0.0
    %2052 = vmatprep.subr.mxu0 0.0
    %2053 = vmatpush1.msra.mxu0 0.0
    %2054 = vmatprep.subr.mxu0 0.0
    %2055 = vmatpush1.msra.mxu0 0.0
    %2056 = vmatprep.subr.mxu0 0.0
    %2057 = vmatpush1.msra.mxu0 0.0
    %2058 = vmatprep.subr.mxu0 0.0
    %2059 = vmatpush1.msra.mxu0 0.0
    %2060 = vmatprep.subr.mxu0 0.0
    %2061 = vmatpush1.msra.mxu0 0.0
    %2062 = vmatprep.subr.mxu0 0.0
    %2063 = vmatpush1.msra.mxu0 0.0
    %2064 = vmatprep.subr.mxu0 0.0
    %2065 = vmatpush1.msra.mxu0 0.0
    %2066 = vmatprep.subr.mxu0 0.0
    %2067 = vmatpush1.msra.mxu0 0.0
    %2068 = vmatprep.subr.mxu0 0.0
    %2069 = vmatpush1.msra.mxu0 0.0
    %2070 = vmatprep.subr.mxu0 0.0
    %2071 = vmatpush1.msra.mxu0 0.0
    %2072 = vmatprep.subr.mxu0 0.0
    %2073 = vmatpush1.msra.mxu0 %v2040
    %2074 = vmatprep.subr.mxu0 0.0
    %2075 = vmatpush2.msra.mxu0 0.0
    %2076 = vmatprep.subr.mxu0 0.0
    %2077 = vmatpush2.msra.mxu0 0.0
    %2078 = vmatprep.subr.mxu0 0.0
    %2079 = vmatpush2.msra.mxu0 0.0
    %2080 = vmatprep.subr.mxu0 0.0
    %2081 = vmatpush2.msra.mxu0 0.0
    %2082 = vmatprep.subr.mxu0 0.0
    %2083 = vmatpush2.msra.mxu0 0.0
    %2084 = vmatprep.subr.mxu0 0.0
    %2085 = vmatpush2.msra.mxu0 0.0
    %2086 = vmatprep.subr.mxu0 0.0
    %2087 = vmatpush2.msra.mxu0 0.0
    %2088 = vmatprep.subr.mxu0 0.0
    %2089 = vmatpush2.msra.mxu0 0.0
    %2090 = vmatprep.subr.mxu0 0.0
    %2091 = vmatpush2.msra.mxu0 0.0
    %2092 = vmatprep.subr.mxu0 0.0
    %2093 = vmatpush2.msra.mxu0 0.0
    %2094 = vmatprep.subr.mxu0 0.0
    %2095 = vmatpush2.msra.mxu0 0.0
    %2096 = vmatprep.subr.mxu0 0.0
    %2097 = vmatpush2.msra.mxu0 0.0
    %2098 = vmatprep.subr.mxu0 0.0
    %2099 = vmatpush2.msra.mxu0 0.0
    %2100 = vmatprep.subr.mxu0 0.0
    %2101 = vmatpush2.msra.mxu0 0.0
    %2102 = vmatprep.subr.mxu0 0.0
    %2103 = vmatpush2.msra.mxu0 0.0
    %2104 = vmatprep.subr.mxu0 0.0
    %2105 = vmatpush2.msra.mxu0 0.0
    %2106 = vmatprep.mubr.f32.mxu0 0.0
    %2107 = vmatmul.mubr.f32.gmra.mxu0 %v2038
    %v2108 = vpop.f32.mrf.mxu0
    %v2109 = vadd.f32 0.0, %v2108
    %v2110 = vpop.f32.mrf.mxu0
    %2111 = vdwg.mxu0
    %2113 = vrot.lane.b32.xlu0 %v2109, 16
    %v2114 = vpop.permute.xlu0 %2113
    %v2116 = vsel %vm248, %v1910, %v2114
    %v2118 = vrot.slane %v1707, 5
    %v2119 = vrot.slane %v1712, 5
    %v2120 = vsel %vm79, %v2118, %v2119
    %2121 = vrot.lane.b32.xlu0 %v2120, 96
    %v2122 = vpop.permute.xlu0 %2121
    %v2123 = vsel %vm248, %v2120, 0
    %v2125 = vsel %vm248, %v2122, 0
    %2127 = vmatprep.subr.mxu0 0.0
    %2128 = vmatpush1.xpose.msra.mxu0 0.0
    %2129 = vmatprep.subr.mxu0 0.0
    %2130 = vmatpush1.xpose.msra.mxu0 0.0
    %2131 = vmatprep.subr.mxu0 0.0
    %2132 = vmatpush1.xpose.msra.mxu0 0.0
    %2133 = vmatprep.subr.mxu0 0.0
    %2134 = vmatpush1.xpose.msra.mxu0 0.0
    %2135 = vmatprep.subr.mxu0 0.0
    %2136 = vmatpush1.xpose.msra.mxu0 0.0
    %2137 = vmatprep.subr.mxu0 0.0
    %2138 = vmatpush1.xpose.msra.mxu0 0.0
    %2139 = vmatprep.subr.mxu0 0.0
    %2140 = vmatpush1.xpose.msra.mxu0 0.0
    %2141 = vmatprep.subr.mxu0 0.0
    %2142 = vmatpush1.xpose.msra.mxu0 0.0
    %2143 = vmatprep.subr.mxu0 0.0
    %2144 = vmatpush1.xpose.msra.mxu0 0.0
    %2145 = vmatprep.subr.mxu0 0.0
    %2146 = vmatpush1.xpose.msra.mxu0 0.0
    %2147 = vmatprep.subr.mxu0 0.0
    %2148 = vmatpush1.xpose.msra.mxu0 0.0
    %2149 = vmatprep.subr.mxu0 0.0
    %2150 = vmatpush1.xpose.msra.mxu0 0.0
    %2151 = vmatprep.subr.mxu0 0.0
    %2152 = vmatpush1.xpose.msra.mxu0 0.0
    %2153 = vmatprep.subr.mxu0 0.0
    %2154 = vmatpush1.xpose.msra.mxu0 0.0
    %2155 = vmatprep.subr.mxu0 0.0
    %2156 = vmatpush1.xpose.msra.mxu0 0.0
    %2157 = vmatprep.subr.mxu0 0.0
    %2158 = vmatpush1.xpose.msra.mxu0 %v2125
    %2159 = vmatprep.subr.mxu0 0.0
    %2160 = vmatpush2.xpose.msra.mxu0 0.0
    %2161 = vmatprep.subr.mxu0 0.0
    %2162 = vmatpush2.xpose.msra.mxu0 0.0
    %2163 = vmatprep.subr.mxu0 0.0
    %2164 = vmatpush2.xpose.msra.mxu0 0.0
    %2165 = vmatprep.subr.mxu0 0.0
    %2166 = vmatpush2.xpose.msra.mxu0 0.0
    %2167 = vmatprep.subr.mxu0 0.0
    %2168 = vmatpush2.xpose.msra.mxu0 0.0
    %2169 = vmatprep.subr.mxu0 0.0
    %2170 = vmatpush2.xpose.msra.mxu0 0.0
    %2171 = vmatprep.subr.mxu0 0.0
    %2172 = vmatpush2.xpose.msra.mxu0 0.0
    %2173 = vmatprep.subr.mxu0 0.0
    %2174 = vmatpush2.xpose.msra.mxu0 0.0
    %2175 = vmatprep.subr.mxu0 0.0
    %2176 = vmatpush2.xpose.msra.mxu0 0.0
    %2177 = vmatprep.subr.mxu0 0.0
    %2178 = vmatpush2.xpose.msra.mxu0 0.0
    %2179 = vmatprep.subr.mxu0 0.0
    %2180 = vmatpush2.xpose.msra.mxu0 0.0
    %2181 = vmatprep.subr.mxu0 0.0
    %2182 = vmatpush2.xpose.msra.mxu0 0.0
    %2183 = vmatprep.subr.mxu0 0.0
    %2184 = vmatpush2.xpose.msra.mxu0 0.0
    %2185 = vmatprep.subr.mxu0 0.0
    %2186 = vmatpush2.xpose.msra.mxu0 0.0
    %2187 = vmatprep.subr.mxu0 0.0
    %2188 = vmatpush2.xpose.msra.mxu0 0.0
    %2189 = vmatprep.subr.mxu0 0.0
    %2190 = vmatpush2.xpose.msra.mxu0 0.0
    %2191 = vmatprep.mubr.f32.mxu0 0.0
    %2192 = vmatmul.mubr.f32.gmra.mxu0 %v2123
    %v2193 = vpop.f32.mrf.mxu0
    %v2194 = vadd.f32 0.0, %v2193
    %v2195 = vpop.f32.mrf.mxu0
    %2196 = vdwg.mxu0
    %v2197 = vmul.f32 %v2194, 0.25
    %v2198 = vsel %vm452, %v2197, -inf
    %2199 = vmax.xlane.f32.xlu0 %v2198
    %v2200 = vpop.xlane.xlu0 %2199
    %v2201 = vsub.f32 %v2197, %v2200
    %v2202 = vmul.f32 %v2201, 1.442695
    %v2203 = vpow.pop %v2202
    %v2204 = vsel %vm452, %v2203, 0.0
    %2205 = vadd.xlane.f32.xlu0 %v2204
    %v2206 = vpop.xlane.xlu0 %2205
    %v2207 = vrcp.pop %v2206
    %v2208 = vmul.f32 %v2203, %v2207
    %2209 = vxpose.xlu0.b32.start [1/16] %v2208, 128
    %2210 = vxpose.xlu0.b32.cont [2/16] 0.0, 128
    %2211 = vxpose.xlu0.b32.cont [3/16] 0.0, 128
    %2212 = vxpose.xlu0.b32.cont [4/16] 0.0, 128
    %2213 = vxpose.xlu0.b32.cont [5/16] 0.0, 128
    %2214 = vxpose.xlu0.b32.cont [6/16] 0.0, 128
    %2215 = vxpose.xlu0.b32.cont [7/16] 0.0, 128
    %2216 = vxpose.xlu0.b32.cont [8/16] 0.0, 128
    %2217 = vxpose.xlu0.b32.cont [9/16] 0.0, 128
    %2218 = vxpose.xlu0.b32.cont [10/16] 0.0, 128
    %2219 = vxpose.xlu0.b32.cont [11/16] 0.0, 128
    %2220 = vxpose.xlu0.b32.cont [12/16] 0.0, 128
    %2221 = vxpose.xlu0.b32.cont [13/16] 0.0, 128
    %2222 = vxpose.xlu0.b32.cont [14/16] 0.0, 128
    %2223 = vxpose.xlu0.b32.cont [15/16] 0.0, 128
    %2224 = vxpose.xlu0.b32.end [16/16] 0.0, 128
    %v2225 = vpop.trf.xlu0
    %v2226 = vpop.trf.xlu0
    %v2227 = vpop.trf.xlu0
    %v2228 = vpop.trf.xlu0
    %v2229 = vpop.trf.xlu0
    %v2230 = vpop.trf.xlu0
    %v2231 = vpop.trf.xlu0
    %v2232 = vpop.trf.xlu0
    %v2233 = vpop.trf.xlu0
    %v2234 = vpop.trf.xlu0
    %v2235 = vpop.trf.xlu0
    %v2236 = vpop.trf.xlu0
    %v2237 = vpop.trf.xlu0
    %v2238 = vpop.trf.xlu0
    %v2239 = vpop.trf.xlu0
    %v2240 = vpop.trf.xlu0
    %2241 = vrot.lane.b32.xlu0 %v2120, 64
    %v2242 = vpop.permute.xlu0 %2241
    %v2244 = vsel %vm498, %v2225, 0
    %v2246 = vsel %vm502, %v2242, 0
    %2248 = vmatprep.subr.mxu0 0.0
    %2249 = vmatpush1.msra.mxu0 0.0
    %2250 = vmatprep.subr.mxu0 0.0
    %2251 = vmatpush1.msra.mxu0 0.0
    %2252 = vmatprep.subr.mxu0 0.0
    %2253 = vmatpush1.msra.mxu0 0.0
    %2254 = vmatprep.subr.mxu0 0.0
    %2255 = vmatpush1.msra.mxu0 0.0
    %2256 = vmatprep.subr.mxu0 0.0
    %2257 = vmatpush1.msra.mxu0 0.0
    %2258 = vmatprep.subr.mxu0 0.0
    %2259 = vmatpush1.msra.mxu0 0.0
    %2260 = vmatprep.subr.mxu0 0.0
    %2261 = vmatpush1.msra.mxu0 0.0
    %2262 = vmatprep.subr.mxu0 0.0
    %2263 = vmatpush1.msra.mxu0 0.0
    %2264 = vmatprep.subr.mxu0 0.0
    %2265 = vmatpush1.msra.mxu0 0.0
    %2266 = vmatprep.subr.mxu0 0.0
    %2267 = vmatpush1.msra.mxu0 0.0
    %2268 = vmatprep.subr.mxu0 0.0
    %2269 = vmatpush1.msra.mxu0 0.0
    %2270 = vmatprep.subr.mxu0 0.0
    %2271 = vmatpush1.msra.mxu0 0.0
    %2272 = vmatprep.subr.mxu0 0.0
    %2273 = vmatpush1.msra.mxu0 0.0
    %2274 = vmatprep.subr.mxu0 0.0
    %2275 = vmatpush1.msra.mxu0 0.0
    %2276 = vmatprep.subr.mxu0 0.0
    %2277 = vmatpush1.msra.mxu0 0.0
    %2278 = vmatprep.subr.mxu0 0.0
    %2279 = vmatpush1.msra.mxu0 %v2246
    %2280 = vmatprep.subr.mxu0 0.0
    %2281 = vmatpush2.msra.mxu0 0.0
    %2282 = vmatprep.subr.mxu0 0.0
    %2283 = vmatpush2.msra.mxu0 0.0
    %2284 = vmatprep.subr.mxu0 0.0
    %2285 = vmatpush2.msra.mxu0 0.0
    %2286 = vmatprep.subr.mxu0 0.0
    %2287 = vmatpush2.msra.mxu0 0.0
    %2288 = vmatprep.subr.mxu0 0.0
    %2289 = vmatpush2.msra.mxu0 0.0
    %2290 = vmatprep.subr.mxu0 0.0
    %2291 = vmatpush2.msra.mxu0 0.0
    %2292 = vmatprep.subr.mxu0 0.0
    %2293 = vmatpush2.msra.mxu0 0.0
    %2294 = vmatprep.subr.mxu0 0.0
    %2295 = vmatpush2.msra.mxu0 0.0
    %2296 = vmatprep.subr.mxu0 0.0
    %2297 = vmatpush2.msra.mxu0 0.0
    %2298 = vmatprep.subr.mxu0 0.0
    %2299 = vmatpush2.msra.mxu0 0.0
    %2300 = vmatprep.subr.mxu0 0.0
    %2301 = vmatpush2.msra.mxu0 0.0
    %2302 = vmatprep.subr.mxu0 0.0
    %2303 = vmatpush2.msra.mxu0 0.0
    %2304 = vmatprep.subr.mxu0 0.0
    %2305 = vmatpush2.msra.mxu0 0.0
    %2306 = vmatprep.subr.mxu0 0.0
    %2307 = vmatpush2.msra.mxu0 0.0
    %2308 = vmatprep.subr.mxu0 0.0
    %2309 = vmatpush2.msra.mxu0 0.0
    %2310 = vmatprep.subr.mxu0 0.0
    %2311 = vmatpush2.msra.mxu0 0.0
    %2312 = vmatprep.mubr.f32.mxu0 0.0
    %2313 = vmatmul.mubr.f32.gmra.mxu0 %v2244
    %v2314 = vpop.f32.mrf.mxu0
    %v2315 = vadd.f32 0.0, %v2314
    %v2316 = vpop.f32.mrf.mxu0
    %2317 = vdwg.mxu0
    %2318 = vrot.lane.b32.xlu0 %v2120, 112
    %v2319 = vpop.permute.xlu0 %2318
    %2320 = vrot.lane.b32.xlu0 %v2120, 80
    %v2321 = vpop.permute.xlu0 %2320
    %v2322 = vsel %vm248, %v2319, 0
    %v2324 = vsel %vm248, %v2321, 0
    %2326 = vmatprep.subr.mxu0 0.0
    %2327 = vmatpush1.xpose.msra.mxu0 0.0
    %2328 = vmatprep.subr.mxu0 0.0
    %2329 = vmatpush1.xpose.msra.mxu0 0.0
    %2330 = vmatprep.subr.mxu0 0.0
    %2331 = vmatpush1.xpose.msra.mxu0 0.0
    %2332 = vmatprep.subr.mxu0 0.0
    %2333 = vmatpush1.xpose.msra.mxu0 0.0
    %2334 = vmatprep.subr.mxu0 0.0
    %2335 = vmatpush1.xpose.msra.mxu0 0.0
    %2336 = vmatprep.subr.mxu0 0.0
    %2337 = vmatpush1.xpose.msra.mxu0 0.0
    %2338 = vmatprep.subr.mxu0 0.0
    %2339 = vmatpush1.xpose.msra.mxu0 0.0
    %2340 = vmatprep.subr.mxu0 0.0
    %2341 = vmatpush1.xpose.msra.mxu0 0.0
    %2342 = vmatprep.subr.mxu0 0.0
    %2343 = vmatpush1.xpose.msra.mxu0 0.0
    %2344 = vmatprep.subr.mxu0 0.0
    %2345 = vmatpush1.xpose.msra.mxu0 0.0
    %2346 = vmatprep.subr.mxu0 0.0
    %2347 = vmatpush1.xpose.msra.mxu0 0.0
    %2348 = vmatprep.subr.mxu0 0.0
    %2349 = vmatpush1.xpose.msra.mxu0 0.0
    %2350 = vmatprep.subr.mxu0 0.0
    %2351 = vmatpush1.xpose.msra.mxu0 0.0
    %2352 = vmatprep.subr.mxu0 0.0
    %2353 = vmatpush1.xpose.msra.mxu0 0.0
    %2354 = vmatprep.subr.mxu0 0.0
    %2355 = vmatpush1.xpose.msra.mxu0 0.0
    %2356 = vmatprep.subr.mxu0 0.0
    %2357 = vmatpush1.xpose.msra.mxu0 %v2324
    %2358 = vmatprep.subr.mxu0 0.0
    %2359 = vmatpush2.xpose.msra.mxu0 0.0
    %2360 = vmatprep.subr.mxu0 0.0
    %2361 = vmatpush2.xpose.msra.mxu0 0.0
    %2362 = vmatprep.subr.mxu0 0.0
    %2363 = vmatpush2.xpose.msra.mxu0 0.0
    %2364 = vmatprep.subr.mxu0 0.0
    %2365 = vmatpush2.xpose.msra.mxu0 0.0
    %2366 = vmatprep.subr.mxu0 0.0
    %2367 = vmatpush2.xpose.msra.mxu0 0.0
    %2368 = vmatprep.subr.mxu0 0.0
    %2369 = vmatpush2.xpose.msra.mxu0 0.0
    %2370 = vmatprep.subr.mxu0 0.0
    %2371 = vmatpush2.xpose.msra.mxu0 0.0
    %2372 = vmatprep.subr.mxu0 0.0
    %2373 = vmatpush2.xpose.msra.mxu0 0.0
    %2374 = vmatprep.subr.mxu0 0.0
    %2375 = vmatpush2.xpose.msra.mxu0 0.0
    %2376 = vmatprep.subr.mxu0 0.0
    %2377 = vmatpush2.xpose.msra.mxu0 0.0
    %2378 = vmatprep.subr.mxu0 0.0
    %2379 = vmatpush2.xpose.msra.mxu0 0.0
    %2380 = vmatprep.subr.mxu0 0.0
    %2381 = vmatpush2.xpose.msra.mxu0 0.0
    %2382 = vmatprep.subr.mxu0 0.0
    %2383 = vmatpush2.xpose.msra.mxu0 0.0
    %2384 = vmatprep.subr.mxu0 0.0
    %2385 = vmatpush2.xpose.msra.mxu0 0.0
    %2386 = vmatprep.subr.mxu0 0.0
    %2387 = vmatpush2.xpose.msra.mxu0 0.0
    %2388 = vmatprep.subr.mxu0 0.0
    %2389 = vmatpush2.xpose.msra.mxu0 0.0
    %2390 = vmatprep.mubr.f32.mxu0 0.0
    %2391 = vmatmul.mubr.f32.gmra.mxu0 %v2322
    %v2392 = vpop.f32.mrf.mxu0
    %v2393 = vadd.f32 0.0, %v2392
    %v2394 = vpop.f32.mrf.mxu0
    %2395 = vdwg.mxu0
    %v2396 = vmul.f32 %v2393, 0.25
    %v2397 = vsel %vm452, %v2396, -inf
    %2398 = vmax.xlane.f32.xlu0 %v2397
    %v2399 = vpop.xlane.xlu0 %2398
    %v2400 = vsub.f32 %v2396, %v2399
    %v2401 = vmul.f32 %v2400, 1.442695
    %v2402 = vpow.pop %v2401
    %v2403 = vsel %vm452, %v2402, 0.0
    %2404 = vadd.xlane.f32.xlu0 %v2403
    %v2405 = vpop.xlane.xlu0 %2404
    %v2406 = vrcp.pop %v2405
    %v2407 = vmul.f32 %v2402, %v2406
    %2408 = vxpose.xlu0.b32.start [1/16] %v2407, 128
    %2409 = vxpose.xlu0.b32.cont [2/16] 0.0, 128
    %2410 = vxpose.xlu0.b32.cont [3/16] 0.0, 128
    %2411 = vxpose.xlu0.b32.cont [4/16] 0.0, 128
    %2412 = vxpose.xlu0.b32.cont [5/16] 0.0, 128
    %2413 = vxpose.xlu0.b32.cont [6/16] 0.0, 128
    %2414 = vxpose.xlu0.b32.cont [7/16] 0.0, 128
    %2415 = vxpose.xlu0.b32.cont [8/16] 0.0, 128
    %2416 = vxpose.xlu0.b32.cont [9/16] 0.0, 128
    %2417 = vxpose.xlu0.b32.cont [10/16] 0.0, 128
    %2418 = vxpose.xlu0.b32.cont [11/16] 0.0, 128
    %2419 = vxpose.xlu0.b32.cont [12/16] 0.0, 128
    %2420 = vxpose.xlu0.b32.cont [13/16] 0.0, 128
    %2421 = vxpose.xlu0.b32.cont [14/16] 0.0, 128
    %2422 = vxpose.xlu0.b32.cont [15/16] 0.0, 128
    %2423 = vxpose.xlu0.b32.end [16/16] 0.0, 128
    %v2424 = vpop.trf.xlu0
    %v2425 = vpop.trf.xlu0
    %v2426 = vpop.trf.xlu0
    %v2427 = vpop.trf.xlu0
    %v2428 = vpop.trf.xlu0
    %v2429 = vpop.trf.xlu0
    %v2430 = vpop.trf.xlu0
    %v2431 = vpop.trf.xlu0
    %v2432 = vpop.trf.xlu0
    %v2433 = vpop.trf.xlu0
    %v2434 = vpop.trf.xlu0
    %v2435 = vpop.trf.xlu0
    %v2436 = vpop.trf.xlu0
    %v2437 = vpop.trf.xlu0
    %v2438 = vpop.trf.xlu0
    %v2439 = vpop.trf.xlu0
    %2440 = vrot.lane.b32.xlu0 %v2120, 48
    %v2441 = vpop.permute.xlu0 %2440
    %v2443 = vsel %vm498, %v2424, 0
    %v2445 = vsel %vm502, %v2441, 0
    %2447 = vmatprep.subr.mxu0 0.0
    %2448 = vmatpush1.msra.mxu0 0.0
    %2449 = vmatprep.subr.mxu0 0.0
    %2450 = vmatpush1.msra.mxu0 0.0
    %2451 = vmatprep.subr.mxu0 0.0
    %2452 = vmatpush1.msra.mxu0 0.0
    %2453 = vmatprep.subr.mxu0 0.0
    %2454 = vmatpush1.msra.mxu0 0.0
    %2455 = vmatprep.subr.mxu0 0.0
    %2456 = vmatpush1.msra.mxu0 0.0
    %2457 = vmatprep.subr.mxu0 0.0
    %2458 = vmatpush1.msra.mxu0 0.0
    %2459 = vmatprep.subr.mxu0 0.0
    %2460 = vmatpush1.msra.mxu0 0.0
    %2461 = vmatprep.subr.mxu0 0.0
    %2462 = vmatpush1.msra.mxu0 0.0
    %2463 = vmatprep.subr.mxu0 0.0
    %2464 = vmatpush1.msra.mxu0 0.0
    %2465 = vmatprep.subr.mxu0 0.0
    %2466 = vmatpush1.msra.mxu0 0.0
    %2467 = vmatprep.subr.mxu0 0.0
    %2468 = vmatpush1.msra.mxu0 0.0
    %2469 = vmatprep.subr.mxu0 0.0
    %2470 = vmatpush1.msra.mxu0 0.0
    %2471 = vmatprep.subr.mxu0 0.0
    %2472 = vmatpush1.msra.mxu0 0.0
    %2473 = vmatprep.subr.mxu0 0.0
    %2474 = vmatpush1.msra.mxu0 0.0
    %2475 = vmatprep.subr.mxu0 0.0
    %2476 = vmatpush1.msra.mxu0 0.0
    %2477 = vmatprep.subr.mxu0 0.0
    %2478 = vmatpush1.msra.mxu0 %v2445
    %2479 = vmatprep.subr.mxu0 0.0
    %2480 = vmatpush2.msra.mxu0 0.0
    %2481 = vmatprep.subr.mxu0 0.0
    %2482 = vmatpush2.msra.mxu0 0.0
    %2483 = vmatprep.subr.mxu0 0.0
    %2484 = vmatpush2.msra.mxu0 0.0
    %2485 = vmatprep.subr.mxu0 0.0
    %2486 = vmatpush2.msra.mxu0 0.0
    %2487 = vmatprep.subr.mxu0 0.0
    %2488 = vmatpush2.msra.mxu0 0.0
    %2489 = vmatprep.subr.mxu0 0.0
    %2490 = vmatpush2.msra.mxu0 0.0
    %2491 = vmatprep.subr.mxu0 0.0
    %2492 = vmatpush2.msra.mxu0 0.0
    %2493 = vmatprep.subr.mxu0 0.0
    %2494 = vmatpush2.msra.mxu0 0.0
    %2495 = vmatprep.subr.mxu0 0.0
    %2496 = vmatpush2.msra.mxu0 0.0
    %2497 = vmatprep.subr.mxu0 0.0
    %2498 = vmatpush2.msra.mxu0 0.0
    %2499 = vmatprep.subr.mxu0 0.0
    %2500 = vmatpush2.msra.mxu0 0.0
    %2501 = vmatprep.subr.mxu0 0.0
    %2502 = vmatpush2.msra.mxu0 0.0
    %2503 = vmatprep.subr.mxu0 0.0
    %2504 = vmatpush2.msra.mxu0 0.0
    %2505 = vmatprep.subr.mxu0 0.0
    %2506 = vmatpush2.msra.mxu0 0.0
    %2507 = vmatprep.subr.mxu0 0.0
    %2508 = vmatpush2.msra.mxu0 0.0
    %2509 = vmatprep.subr.mxu0 0.0
    %2510 = vmatpush2.msra.mxu0 0.0
    %2511 = vmatprep.mubr.f32.mxu0 0.0
    %2512 = vmatmul.mubr.f32.gmra.mxu0 %v2443
    %v2513 = vpop.f32.mrf.mxu0
    %v2514 = vadd.f32 0.0, %v2513
    %v2515 = vpop.f32.mrf.mxu0
    %2516 = vdwg.mxu0
    %2518 = vrot.lane.b32.xlu0 %v2514, 16
    %v2519 = vpop.permute.xlu0 %2518
    %v2521 = vsel %vm248, %v2315, %v2519
    %v2523 = vrot.slane %v2521, 3
    %v2525 = vsel %vm502, %v2116, %v2523
    %v2526 = vlaneseq
    %v2527 = vshrl.u32 %v2526, 7
    %v2528 = vsub.s32 1, %v2527
    %v2529 = vrot.slane %v1572, %v2528
    %v2531 = vsel %vm1192, %v2525, 0
    %v2533 = vsel %vm1192, %v2523, 0
    %2535 = vmatprep.subr.mxu0 0.0
    %2536 = vmatpush1.msra.mxu0 0.0
    %2537 = vmatprep.subr.mxu0 0.0
    %2538 = vmatpush1.msra.mxu0 0.0
    %2539 = vmatprep.subr.mxu0 0.0
    %2540 = vmatpush1.msra.mxu0 0.0
    %2541 = vmatprep.subr.mxu0 0.0
    %2542 = vmatpush1.msra.mxu0 0.0
    %2543 = vmatprep.subr.mxu0 0.0
    %2544 = vmatpush1.msra.mxu0 0.0
    %2545 = vmatprep.subr.mxu0 0.0
    %2546 = vmatpush1.msra.mxu0 0.0
    %2547 = vmatprep.subr.mxu0 0.0
    %2548 = vmatpush1.msra.mxu0 0.0
    %2549 = vmatprep.subr.mxu0 0.0
    %2550 = vmatpush1.msra.mxu0 0.0
    %2551 = vmatprep.subr.mxu0 0.0
    %2552 = vmatpush1.msra.mxu0 0.0
    %2553 = vmatprep.subr.mxu0 0.0
    %2554 = vmatpush1.msra.mxu0 0.0
    %2555 = vmatprep.subr.mxu0 0.0
    %2556 = vmatpush1.msra.mxu0 0.0
    %2557 = vmatprep.subr.mxu0 0.0
    %2558 = vmatpush1.msra.mxu0 0.0
    %2559 = vmatprep.subr.mxu0 0.0
    %2560 = vmatpush1.msra.mxu0 %v1583
    %2561 = vmatprep.subr.mxu0 0.0
    %2562 = vmatpush1.msra.mxu0 %v1582
    %2563 = vmatprep.subr.mxu0 0.0
    %2564 = vmatpush1.msra.mxu0 %v1581
    %2565 = vmatprep.subr.mxu0 0.0
    %2566 = vmatpush1.msra.mxu0 %v1580
    %2567 = vmatprep.subr.mxu0 0.0
    %2568 = vmatpush2.msra.mxu0 0.0
    %2569 = vmatprep.subr.mxu0 0.0
    %2570 = vmatpush2.msra.mxu0 0.0
    %2571 = vmatprep.subr.mxu0 0.0
    %2572 = vmatpush2.msra.mxu0 0.0
    %2573 = vmatprep.subr.mxu0 0.0
    %2574 = vmatpush2.msra.mxu0 0.0
    %2575 = vmatprep.subr.mxu0 0.0
    %2576 = vmatpush2.msra.mxu0 0.0
    %2577 = vmatprep.subr.mxu0 0.0
    %2578 = vmatpush2.msra.mxu0 0.0
    %2579 = vmatprep.subr.mxu0 0.0
    %2580 = vmatpush2.msra.mxu0 0.0
    %2581 = vmatprep.subr.mxu0 0.0
    %2582 = vmatpush2.msra.mxu0 0.0
    %2583 = vmatprep.subr.mxu0 0.0
    %2584 = vmatpush2.msra.mxu0 0.0
    %2585 = vmatprep.subr.mxu0 0.0
    %2586 = vmatpush2.msra.mxu0 0.0
    %2587 = vmatprep.subr.mxu0 0.0
    %2588 = vmatpush2.msra.mxu0 0.0
    %2589 = vmatprep.subr.mxu0 0.0
    %2590 = vmatpush2.msra.mxu0 0.0
    %2591 = vmatprep.subr.mxu0 0.0
    %2592 = vmatpush2.msra.mxu0 0.0
    %2593 = vmatprep.subr.mxu0 0.0
    %2594 = vmatpush2.msra.mxu0 0.0
    %2595 = vmatprep.subr.mxu0 0.0
    %2596 = vmatpush2.msra.mxu0 0.0
    %2597 = vmatprep.subr.mxu0 0.0
    %2598 = vmatpush2.msra.mxu0 0.0
    %2599 = vmatprep.mubr.f32.mxu0 0.0
    %2600 = vmatmul.mubr.f32.gmra.mxu0 %v2531
    %v2601 = vpop.f32.mrf.mxu0
    %v2602 = vadd.f32 %v2529, %v2601
    %v2603 = vpop.f32.mrf.mxu0
    %2604 = vmatprep.mubr.f32.mxu0 0.0
    %2605 = vmatmul.mubr.f32.gmra.mxu0 %v2533
    %v2606 = vpop.f32.mrf.mxu0
    %v2607 = vadd.f32 %v2529, %v2606
    %v2608 = vpop.f32.mrf.mxu0
    %2609 = vdwg.mxu0
    %v2610 = vadd.f32 %v1569, %v2602
    %v2611 = vadd.f32 %v1570, %v2607
    %v2612 = vsel %vm248, %v2610, 0.0
    %2613 = vadd.xlane.f32.xlu0 %v2612
    %v2614 = vpop.xlane.xlu0 %2613
    %v2615 = vsel %vm252, %v2611, 0.0
    %2616 = vadd.xlane.f32.xlu0 %v2615
    %v2617 = vpop.xlane.xlu0 %2616
    %v2618 = vmul.f32 %v2614, %v256
    %v2619 = vmul.f32 %v2617, %v256
    %v2620 = vsub.f32 %v2610, %v2618
    %v2621 = vsub.f32 %v2611, %v2619
    %v2622 = vmul.f32 %v2620, %v2620
    %v2623 = vmul.f32 %v2621, %v2621
    %v2624 = vsel %vm248, %v2622, 0.0
    %2625 = vadd.xlane.f32.xlu0 %v2624
    %v2626 = vpop.xlane.xlu0 %2625
    %v2627 = vsel %vm252, %v2623, 0.0
    %2628 = vadd.xlane.f32.xlu0 %v2627
    %v2629 = vpop.xlane.xlu0 %2628
    %v2630 = vmul.f32 %v2626, %v256
    %v2631 = vmul.f32 %v2629, %v256
    %v2632 = vadd.f32 %v2630, 1e-06
    %v2633 = vadd.f32 %v2631, 1e-06
    %v2634 = vrsqrt.pop %v2632
    %v2635 = vrsqrt.pop %v2633
    %v2636 = vmul.f32 %v2620, %v2634
    %v2637 = vmul.f32 %v2621, %v2635
    %v2638 = vmul.f32 %v2636, %v1621
    %v2639 = vmul.f32 %v2637, %v1621
    %v2640 = vadd.f32 %v2638, %v1627
    %v2641 = vadd.f32 %v2639, %v1627
    %v2642 = vlaneseq
    %v2643 = vshrl.u32 %v2642, 7
    %v2644 = vsub.s32 2, %v2643
    %v2645 = vrot.slane %v1572, %v2644
    %v2647 = vsel %vm248, %v2640, 0
    %v2650 = vsel %vm248, %v2641, 0
    %2652 = vmatprep.subr.mxu0 0.0
    %2653 = vmatpush1.msra.mxu0 0.0
    %2654 = vmatprep.subr.mxu0 0.0
    %2655 = vmatpush1.msra.mxu0 0.0
    %2656 = vmatprep.subr.mxu0 0.0
    %2657 = vmatpush1.msra.mxu0 0.0
    %2658 = vmatprep.subr.mxu0 0.0
    %2659 = vmatpush1.msra.mxu0 0.0
    %2660 = vmatprep.subr.mxu0 0.0
    %2661 = vmatpush1.msra.mxu0 0.0
    %2662 = vmatprep.subr.mxu0 0.0
    %2663 = vmatpush1.msra.mxu0 0.0
    %2664 = vmatprep.subr.mxu0 0.0
    %2665 = vmatpush1.msra.mxu0 0.0
    %2666 = vmatprep.subr.mxu0 0.0
    %2667 = vmatpush1.msra.mxu0 0.0
    %2668 = vmatprep.subr.mxu0 0.0
    %2669 = vmatpush1.msra.mxu0 0.0
    %2670 = vmatprep.subr.mxu0 0.0
    %2671 = vmatpush1.msra.mxu0 0.0
    %2672 = vmatprep.subr.mxu0 0.0
    %2673 = vmatpush1.msra.mxu0 0.0
    %2674 = vmatprep.subr.mxu0 0.0
    %2675 = vmatpush1.msra.mxu0 0.0
    %2676 = vmatprep.subr.mxu0 0.0
    %2677 = vmatpush1.msra.mxu0 0.0
    %2678 = vmatprep.subr.mxu0 0.0
    %2679 = vmatpush1.msra.mxu0 0.0
    %2680 = vmatprep.subr.mxu0 0.0
    %2681 = vmatpush1.msra.mxu0 %v1586
    %2682 = vmatprep.subr.mxu0 0.0
    %2683 = vmatpush1.msra.mxu0 %v1585
    %2684 = vmatprep.subr.mxu0 0.0
    %2685 = vmatpush2.msra.mxu0 0.0
    %2686 = vmatprep.subr.mxu0 0.0
    %2687 = vmatpush2.msra.mxu0 0.0
    %2688 = vmatprep.subr.mxu0 0.0
    %2689 = vmatpush2.msra.mxu0 0.0
    %2690 = vmatprep.subr.mxu0 0.0
    %2691 = vmatpush2.msra.mxu0 0.0
    %2692 = vmatprep.subr.mxu0 0.0
    %2693 = vmatpush2.msra.mxu0 0.0
    %2694 = vmatprep.subr.mxu0 0.0
    %2695 = vmatpush2.msra.mxu0 0.0
    %2696 = vmatprep.subr.mxu0 0.0
    %2697 = vmatpush2.msra.mxu0 0.0
    %2698 = vmatprep.subr.mxu0 0.0
    %2699 = vmatpush2.msra.mxu0 0.0
    %2700 = vmatprep.subr.mxu0 0.0
    %2701 = vmatpush2.msra.mxu0 0.0
    %2702 = vmatprep.subr.mxu0 0.0
    %2703 = vmatpush2.msra.mxu0 0.0
    %2704 = vmatprep.subr.mxu0 0.0
    %2705 = vmatpush2.msra.mxu0 0.0
    %2706 = vmatprep.subr.mxu0 0.0
    %2707 = vmatpush2.msra.mxu0 0.0
    %2708 = vmatprep.subr.mxu0 0.0
    %2709 = vmatpush2.msra.mxu0 0.0
    %2710 = vmatprep.subr.mxu0 0.0
    %2711 = vmatpush2.msra.mxu0 0.0
    %2712 = vmatprep.subr.mxu0 0.0
    %2713 = vmatpush2.msra.mxu0 0.0
    %2714 = vmatprep.subr.mxu0 0.0
    %2715 = vmatpush2.msra.mxu0 0.0
    %2716 = vmatprep.mubr.f32.mxu0 0.0
    %2717 = vmatmul.mubr.f32.gmra.mxu0 %v2647
    %v2718 = vpop.f32.mrf.mxu0
    %v2719 = vadd.f32 %v2645, %v2718
    %v2720 = vpop.f32.mrf.mxu0
    %2721 = vmatprep.mubr.f32.mxu0 0.0
    %2722 = vmatmul.mubr.f32.gmra.mxu0 %v2650
    %v2723 = vpop.f32.mrf.mxu0
    %v2724 = vadd.f32 %v2645, %v2723
    %v2725 = vpop.f32.mrf.mxu0
    %2726 = vdwg.mxu0
    %2728 = vset.pattern.permute.xlu0 0
    %2729 = vperm.xlu0 %2728, %v1574
    %v2730 = vpop.permute.xlu0 %2729
    %2733 = vset.pattern.permute.xlu0 0
    %2734 = vperm.xlu0 %2733, %v1575
    %v2735 = vpop.permute.xlu0 %2734
    %v2737 = vmul.f32 %v2719, %v2730
    %v2738 = vmul.f32 %v2724, %v2735
    %2739 = vset.pattern.permute.xlu0 1
    %2740 = vperm.xlu0 %2739, %v1574
    %v2741 = vpop.permute.xlu0 %2740
    %2743 = vset.pattern.permute.xlu0 1
    %2744 = vperm.xlu0 %2743, %v1575
    %v2745 = vpop.permute.xlu0 %2744
    %v2747 = vadd.f32 %v2737, %v2741
    %v2748 = vadd.f32 %v2738, %v2745
    %v2749 = vmul.f32 %v2747, 0.5
    %v2750 = vmul.f32 %v2748, 0.5
    %v2751 = vmul.f32 %v2747, 0.70710677
    %v2752 = vmul.f32 %v2748, 0.70710677
    %v2753 = vand.u32 2147483647, %v2751
    %v2754 = vand.u32 2147483647, %v2752
    %v2755 = vmul.f32 %v2753, 0.3275911
    %v2756 = vmul.f32 %v2754, 0.3275911
    %v2757 = vadd.f32 %v2755, 1.0
    %v2758 = vadd.f32 %v2756, 1.0
    %v2759 = vrcp.pop %v2757
    %v2760 = vrcp.pop %v2758
    %v2761 = vmul.f32 %v2759, 1.0614054
    %v2762 = vmul.f32 %v2760, 1.0614054
    %v2763 = vadd.f32 %v2761, -1.4531521
    %v2764 = vadd.f32 %v2762, -1.4531521
    %v2765 = vmul.f32 %v2763, %v2759
    %v2766 = vmul.f32 %v2764, %v2760
    %v2767 = vadd.f32 %v2765, 1.4214138
    %v2768 = vadd.f32 %v2766, 1.4214138
    %v2769 = vmul.f32 %v2767, %v2759
    %v2770 = vmul.f32 %v2768, %v2760
    %v2771 = vadd.f32 %v2769, -0.28449672
    %v2772 = vadd.f32 %v2770, -0.28449672
    %v2773 = vmul.f32 %v2771, %v2759
    %v2774 = vmul.f32 %v2772, %v2760
    %v2775 = vadd.f32 %v2773, 0.2548296
    %v2776 = vadd.f32 %v2774, 0.2548296
    %v2777 = vmul.f32 %v2775, %v2759
    %v2778 = vmul.f32 %v2776, %v2760
    %v2779 = vsub.f32 0.0, %v2753
    %v2780 = vsub.f32 0.0, %v2754
    %v2781 = vmul.f32 %v2779, %v2753
    %v2782 = vmul.f32 %v2780, %v2754
    %v2783 = vmul.f32 %v2781, 1.442695
    %v2784 = vpow.pop %v2783
    %v2785 = vmul.f32 %v2782, 1.442695
    %v2786 = vpow.pop %v2785
    %v2787 = vmul.f32 %v2777, %v2784
    %v2788 = vmul.f32 %v2778, %v2786
    %v2789 = vsub.f32 1.0, %v2787
    %v2790 = vsub.f32 1.0, %v2788
    %vm2791 = vcmp.ge.f32.partialorder %v2751, 0.0
    %vm2792 = vcmp.ge.f32.partialorder %v2752, 0.0
    %v2793 = vsub.f32 0.0, %v2789
    %v2794 = vsub.f32 0.0, %v2790
    %v2795 = vsel %vm2791, %v2789, %v2793
    %v2796 = vsel %vm2792, %v2790, %v2794
    %v2797 = vadd.f32 %v2795, 1.0
    %v2798 = vadd.f32 %v2796, 1.0
    %v2799 = vmul.f32 %v2749, %v2797
    %v2800 = vmul.f32 %v2750, %v2798
    %v2801 = vlaneseq
    %v2802 = vshrl.u32 %v2801, 7
    %v2803 = vsub.s32 3, %v2802
    %v2804 = vrot.slane %v1572, %v2803
    %v2806 = vsel %vm1192, %v2799, 0
    %v2809 = vsel %vm1192, %v2800, 0
    %2811 = vmatprep.subr.mxu0 0.0
    %2812 = vmatpush1.msra.mxu0 0.0
    %2813 = vmatprep.subr.mxu0 0.0
    %2814 = vmatpush1.msra.mxu0 0.0
    %2815 = vmatprep.subr.mxu0 0.0
    %2816 = vmatpush1.msra.mxu0 0.0
    %2817 = vmatprep.subr.mxu0 0.0
    %2818 = vmatpush1.msra.mxu0 0.0
    %2819 = vmatprep.subr.mxu0 0.0
    %2820 = vmatpush1.msra.mxu0 0.0
    %2821 = vmatprep.subr.mxu0 0.0
    %2822 = vmatpush1.msra.mxu0 0.0
    %2823 = vmatprep.subr.mxu0 0.0
    %2824 = vmatpush1.msra.mxu0 0.0
    %2825 = vmatprep.subr.mxu0 0.0
    %2826 = vmatpush1.msra.mxu0 0.0
    %2827 = vmatprep.subr.mxu0 0.0
    %2828 = vmatpush1.msra.mxu0 0.0
    %2829 = vmatprep.subr.mxu0 0.0
    %2830 = vmatpush1.msra.mxu0 0.0
    %2831 = vmatprep.subr.mxu0 0.0
    %2832 = vmatpush1.msra.mxu0 0.0
    %2833 = vmatprep.subr.mxu0 0.0
    %2834 = vmatpush1.msra.mxu0 0.0
    %2835 = vmatprep.subr.mxu0 0.0
    %2836 = vmatpush1.msra.mxu0 %v1591
    %2837 = vmatprep.subr.mxu0 0.0
    %2838 = vmatpush1.msra.mxu0 %v1590
    %2839 = vmatprep.subr.mxu0 0.0
    %2840 = vmatpush1.msra.mxu0 %v1589
    %2841 = vmatprep.subr.mxu0 0.0
    %2842 = vmatpush1.msra.mxu0 %v1588
    %2843 = vmatprep.subr.mxu0 0.0
    %2844 = vmatpush2.msra.mxu0 0.0
    %2845 = vmatprep.subr.mxu0 0.0
    %2846 = vmatpush2.msra.mxu0 0.0
    %2847 = vmatprep.subr.mxu0 0.0
    %2848 = vmatpush2.msra.mxu0 0.0
    %2849 = vmatprep.subr.mxu0 0.0
    %2850 = vmatpush2.msra.mxu0 0.0
    %2851 = vmatprep.subr.mxu0 0.0
    %2852 = vmatpush2.msra.mxu0 0.0
    %2853 = vmatprep.subr.mxu0 0.0
    %2854 = vmatpush2.msra.mxu0 0.0
    %2855 = vmatprep.subr.mxu0 0.0
    %2856 = vmatpush2.msra.mxu0 0.0
    %2857 = vmatprep.subr.mxu0 0.0
    %2858 = vmatpush2.msra.mxu0 0.0
    %2859 = vmatprep.subr.mxu0 0.0
    %2860 = vmatpush2.msra.mxu0 0.0
    %2861 = vmatprep.subr.mxu0 0.0
    %2862 = vmatpush2.msra.mxu0 0.0
    %2863 = vmatprep.subr.mxu0 0.0
    %2864 = vmatpush2.msra.mxu0 0.0
    %2865 = vmatprep.subr.mxu0 0.0
    %2866 = vmatpush2.msra.mxu0 0.0
    %2867 = vmatprep.subr.mxu0 0.0
    %2868 = vmatpush2.msra.mxu0 0.0
    %2869 = vmatprep.subr.mxu0 0.0
    %2870 = vmatpush2.msra.mxu0 0.0
    %2871 = vmatprep.subr.mxu0 0.0
    %2872 = vmatpush2.msra.mxu0 0.0
    %2873 = vmatprep.subr.mxu0 0.0
    %2874 = vmatpush2.msra.mxu0 0.0
    %2875 = vmatprep.mubr.f32.mxu0 0.0
    %2876 = vmatmul.mubr.f32.gmra.mxu0 %v2806
    %v2877 = vpop.f32.mrf.mxu0
    %v2878 = vadd.f32 %v2804, %v2877
    %v2879 = vpop.f32.mrf.mxu0
    %2880 = vmatprep.mubr.f32.mxu0 0.0
    %2881 = vmatmul.mubr.f32.gmra.mxu0 %v2809
    %v2882 = vpop.f32.mrf.mxu0
    %v2883 = vpop.f32.mrf.mxu0
    %2884 = vdwg.mxu0
    %2885 = vset.pattern.permute.xlu0 2
    %2886 = vperm.xlu0 %2885, %v1574
    %v2887 = vpop.permute.xlu0 %2886
    %v2889 = vmul.f32 %v2878, %v2887
    %2890 = vset.pattern.permute.xlu0 3
    %2891 = vperm.xlu0 %2890, %v1574
    %v2892 = vpop.permute.xlu0 %2891
    %v2894 = vadd.f32 %v2889, %v2892
    %v2895 = vadd.f32 %v2610, %v2894
    %v2896 = vld [vmem:[%s8] sm:$0xff]
    %v2897 = vld [vmem:[%s8 + $0x8] sm:$0xff]
    %v2898 = vld [vmem:[%s8 + $0x10] sm:$0x1]
    %v2900 = vrot.slane %v2895, 4
    %vm2902 = vcmask 1040384
    %v2903 = vsel %vm2902, %v2895, %v2900
    %v2904 = vlaneseq
    %v2905 = vshrl.u32 %v2904, 7
    %v2906 = vsub.s32 0, %v2905
    %v2907 = vrot.slane %v2898, %v2906
    %v2909 = vsel %vm248, %v2903, 0
    %2911 = vmatprep.subr.mxu0 0.0
    %2912 = vmatpush1.msra.mxu0 0.0
    %2913 = vmatprep.subr.mxu0 0.0
    %2914 = vmatpush1.msra.mxu0 0.0
    %2915 = vmatprep.subr.mxu0 0.0
    %2916 = vmatpush1.msra.mxu0 0.0
    %2917 = vmatprep.subr.mxu0 0.0
    %2918 = vmatpush1.msra.mxu0 0.0
    %2919 = vmatprep.subr.mxu0 0.0
    %2920 = vmatpush1.msra.mxu0 0.0
    %2921 = vmatprep.subr.mxu0 0.0
    %2922 = vmatpush1.msra.mxu0 0.0
    %2923 = vmatprep.subr.mxu0 0.0
    %2924 = vmatpush1.msra.mxu0 0.0
    %2925 = vmatprep.subr.mxu0 0.0
    %2926 = vmatpush1.msra.mxu0 0.0
    %2927 = vmatprep.subr.mxu0 0.0
    %2928 = vmatpush1.msra.mxu0 0.0
    %2929 = vmatprep.subr.mxu0 0.0
    %2930 = vmatpush1.msra.mxu0 0.0
    %2931 = vmatprep.subr.mxu0 0.0
    %2932 = vmatpush1.msra.mxu0 0.0
    %2933 = vmatprep.subr.mxu0 0.0
    %2934 = vmatpush1.msra.mxu0 0.0
    %2935 = vmatprep.subr.mxu0 0.0
    %2936 = vmatpush1.msra.mxu0 0.0
    %2937 = vmatprep.subr.mxu0 0.0
    %2938 = vmatpush1.msra.mxu0 0.0
    %2939 = vmatprep.subr.mxu0 0.0
    %2940 = vmatpush1.msra.mxu0 %v2897
    %2941 = vmatprep.subr.mxu0 0.0
    %2942 = vmatpush1.msra.mxu0 %v2896
    %2943 = vmatprep.subr.mxu0 0.0
    %2944 = vmatpush2.msra.mxu0 0.0
    %2945 = vmatprep.subr.mxu0 0.0
    %2946 = vmatpush2.msra.mxu0 0.0
    %2947 = vmatprep.subr.mxu0 0.0
    %2948 = vmatpush2.msra.mxu0 0.0
    %2949 = vmatprep.subr.mxu0 0.0
    %2950 = vmatpush2.msra.mxu0 0.0
    %2951 = vmatprep.subr.mxu0 0.0
    %2952 = vmatpush2.msra.mxu0 0.0
    %2953 = vmatprep.subr.mxu0 0.0
    %2954 = vmatpush2.msra.mxu0 0.0
    %2955 = vmatprep.subr.mxu0 0.0
    %2956 = vmatpush2.msra.mxu0 0.0
    %2957 = vmatprep.subr.mxu0 0.0
    %2958 = vmatpush2.msra.mxu0 0.0
    %2959 = vmatprep.subr.mxu0 0.0
    %2960 = vmatpush2.msra.mxu0 0.0
    %2961 = vmatprep.subr.mxu0 0.0
    %2962 = vmatpush2.msra.mxu0 0.0
    %2963 = vmatprep.subr.mxu0 0.0
    %2964 = vmatpush2.msra.mxu0 0.0
    %2965 = vmatprep.subr.mxu0 0.0
    %2966 = vmatpush2.msra.mxu0 0.0
    %2967 = vmatprep.subr.mxu0 0.0
    %2968 = vmatpush2.msra.mxu0 0.0
    %2969 = vmatprep.subr.mxu0 0.0
    %2970 = vmatpush2.msra.mxu0 0.0
    %2971 = vmatprep.subr.mxu0 0.0
    %2972 = vmatpush2.msra.mxu0 0.0
    %2973 = vmatprep.subr.mxu0 0.0
    %2974 = vmatpush2.msra.mxu0 0.0
    %2975 = vmatprep.mubr.f32.mxu0 0.0
    %2976 = vmatmul.mubr.f32.gmra.mxu0 %v2909
    %v2977 = vpop.f32.mrf.mxu0
    %v2978 = vadd.f32 %v2907, %v2977
    %v2979 = vpop.f32.mrf.mxu0
    %2980 = vdwg.mxu0
    %vm2981 = vcmask 74752
    %2982 = vst.msk [vmem:[#allocation2] sm:$0x3] %vm2981, %v2978
    // Predicated region
    $region38: #{vit_forward.1} parent=1 // pred_check
      _
    $region39: #{vit_forward.1} parent=1 // pred_check_branch
      %2984 = sbr.rel (0) target = $region41
    $region40: #{vit_forward.1} parent=1 // pred_region
      %s2986 = ssub.s32 32, 32
      %2987 = vsyncadd [#allocation3], %s2986
      %s2989 = sshll.u32 [#allocation2], 4
      %s2990 = int_to_ptr.vmem [resolvable:$true] %s2989
      %2992 = dma.vmem_to_hbm [thread:$0]  %s2990, 32, %s9, [#allocation3]
    $region41: #{vit_forward.1} parent=1 // pred_fallthru
      _
    // Predicated region
    $region42: #{vit_forward.1} parent=1 // pred_check
      _
    $region43: #{vit_forward.1} parent=1 // pred_check_branch
      %2994 = sbr.rel (0) target = $region45
    $region44: #{vit_forward.1} parent=1 // pred_region
      %2995 = dma.done [#allocation3], 32
    $region45: #{vit_forward.1} parent=1 // pred_fallthru
      _
    %2996 = vsyncpa [#allocation3], 1

</llo_original>
